<compile_context>
chip_gen: v5e
topology: v5e:2x2
jax: 0.10.0
libtpu: 0.0.40
codegen_flags: <defaults>
</compile_context>

<pallas_src>
import functools

import jax
import jax.numpy as jnp
from jax.experimental import pallas as pl
from jax.experimental.pallas import tpu as pltpu


# ----------------------------------------------------------------------------
# Fused whole-network Pallas kernel
# ----------------------------------------------------------------------------
def _make_net_kernel(n_resblocks, H, W, P, Lpad, margin):
    Hp, Wp = H + 2 * P, W + 2 * P

    def kernel(*refs):
        in_refs = refs[:-2]
        o_ref = refs[-2]
        xe_ref = refs[-1]            # (C, margin + Lpad + margin) VMEM scratch
        x_ref, mask_ref = in_refs[0], in_refs[1]
        wit = iter(in_refs[2:])      # alternating (weight, bias) refs

        # Zero the extended scratch once; both margins stay zero afterwards
        # (interior gets overwritten by every conv's staging store).
        xe_ref[...] = jnp.zeros_like(xe_ref)

        mask = mask_ref[...]         # (1, Lpad): 1 on real pixels, 0 on pad ring
        x = x_ref[0]                 # (C, Lpad) padded-flat input image

        def conv(xin, kh, kw, relu, residual=None):
            w_ref = next(wit)        # (Cout, kh*kw*Cin)
            b_ref = next(wit)        # (Cout, 1)
            ph, pw = (kh - 1) // 2, (kw - 1) // 2
            # Stage activation into the margined buffer (lane-aligned store).
            xe_ref[:, margin:margin + Lpad] = xin
            # Build im2col columns as shifted lane reads; fold taps into K.
            cols = []
            for dy in range(kh):
                for dx in range(kw):
                    off = margin + (dy - ph) * Wp + (dx - pw)
                    cols.append(xe_ref[:, off:off + Lpad])
            xcol = jnp.concatenate(cols, axis=0)              # (kh*kw*Cin, Lpad)
            acc = jnp.dot(w_ref[...], xcol,
                          preferred_element_type=jnp.float32)  # (Cout, Lpad)
            acc = acc + b_ref[...]                            # bias broadcast
            if relu:
                acc = jnp.maximum(acc, 0.0)
            if residual is not None:
                acc = acc + residual
            # Re-zero the pad ring so the next conv sees correct zero padding.
            return acc * mask

        h = conv(x, 5, 5, True)                    # head: conv5x5 + ReLU
        y = h
        for _ in range(n_resblocks):               # ResBlocks
            r = conv(y, 3, 3, True)
            y = conv(r, 3, 3, False, residual=y)
        y = conv(y, 3, 3, False, residual=h)       # body-final conv + shortcut
        out = conv(y, 3, 3, False)                 # tail: conv3x3 -> 3 channels
        o_ref[0] = out.astype(o_ref.dtype)

    return kernel


# ----------------------------------------------------------------------------
# Public forward (NCHW in / NCHW out, matches PyTorch convention)
# ----------------------------------------------------------------------------
def net_forward(x_nchw, params, n_resblocks):
    N, C0, H, W = x_nchw.shape
    P = 2                                # uniform spatial pad (covers 5x5 & 3x3)
    CPAD = 8                             # pad channels to a full sublane tile
    Hp, Wp = H + 2 * P, W + 2 * P
    L = Hp * Wp
    Lpad = ((L + 127) // 128) * 128      # lane-dense flat spatial length
    margin = ((P * Wp + P + 127) // 128) * 128

    # One-time glue: input -> padded-flat (N, CPAD, Lpad) layout.
    xp = jnp.pad(x_nchw.astype(jnp.float32),
                 ((0, 0), (0, CPAD - C0), (P, P), (P, P)))
    xflat = jnp.pad(xp.reshape(N, CPAD, L), ((0, 0), (0, 0), (0, Lpad - L)))

    # 0/1 mask of real (non-ring) pixels in the padded-flat layout.
    yy = jnp.arange(Hp)[:, None]
    xx = jnp.arange(Wp)[None, :]
    valid = (yy >= P) & (yy < P + H) & (xx >= P) & (xx < P + W)
    mask = jnp.pad(valid.reshape(1, L).astype(jnp.float32),
                   ((0, 0), (0, Lpad - L)))

    # Weights -> (Cout, kh*kw*Cin) with tap-major / cin-minor ordering that
    # matches the in-kernel column stacking; biases -> (Cout, 1).
    def conv_wb(name, kh, kw, cin_pad=None):
        w = params[name + "_w"]                         # (kh, kw, cin, cout)
        if cin_pad is not None and w.shape[2] < cin_pad:
            w = jnp.pad(w, ((0, 0), (0, 0), (0, cin_pad - w.shape[2]), (0, 0)))
        cout = w.shape[3]
        w2 = jnp.transpose(w, (3, 0, 1, 2)).reshape(cout, kh * kw * w.shape[2])
        b2 = params[name + "_b"].reshape(cout, 1)
        return w2.astype(jnp.float32), b2.astype(jnp.float32)

    convs = [("head", 5, 5, CPAD)]
    for i in range(n_resblocks):
        convs += [(f"rb{i}_c1", 3, 3, None), (f"rb{i}_c2", 3, 3, None)]
    convs += [("body_last", 3, 3, None), ("tail", 3, 3, None)]

    args = [xflat, mask]
    in_specs = [
        pl.BlockSpec((1, CPAD, Lpad), lambda n: (n, 0, 0)),
        pl.BlockSpec((1, Lpad), lambda n: (0, 0)),
    ]
    for name, kh, kw, cp in convs:
        w2, b2 = conv_wb(name, kh, kw, cp)
        args.extend([w2, b2])
        in_specs.append(pl.BlockSpec(w2.shape, lambda n: (0, 0)))
        in_specs.append(pl.BlockSpec(b2.shape, lambda n: (0, 0)))

    COUT = 3
    out = pl.pallas_call(
        _make_net_kernel(n_resblocks, H, W, P, Lpad, margin),
        out_shape=jax.ShapeDtypeStruct((N, COUT, Lpad), jnp.float32),
        grid_spec=pltpu.PrefetchScalarGridSpec(
            num_scalar_prefetch=0,
            grid=(N,),
            in_specs=in_specs,
            out_specs=pl.BlockSpec((1, COUT, Lpad), lambda n: (n, 0, 0)),
            scratch_shapes=[
                pltpu.VMEM((CPAD, margin + Lpad + margin), jnp.float32)
            ],
        ),
        compiler_params=pltpu.CompilerParams(
            dimension_semantics=("parallel",)
        ),
    )(*args)

    # Crop the padded-flat output back to (N, 3, H, W).
    out = out[:, :, :L].reshape(N, COUT, Hp, Wp)[:, :, P:P + H, P:P + W]
    return out


# ----------------------------------------------------------------------------
# Parameter init (deterministic, Xavier-normal weights, zero biases)
# ----------------------------------------------------------------------------
def _xavier_normal(key, kh, kw, cin, cout):
    fan_in = cin * kh * kw
    fan_out = cout * kh * kw
    std = (2.0 / (fan_in + fan_out)) ** 0.5
    return jax.random.normal(key, (kh, kw, cin, cout), jnp.float32) * std


def init_params(key, n_feats, n_resblocks):
    params = {}
    keys = iter(jax.random.split(key, 2 + 2 * n_resblocks + 2))

    def conv(name, kh, kw, cin, cout):
        params[name + "_w"] = _xavier_normal(next(keys), kh, kw, cin, cout)
        params[name + "_b"] = jnp.zeros((cout,), jnp.float32)

    conv("head", 5, 5, 4, n_feats)                   # ConvBlock(4, nf, 5, relu)
    for i in range(n_resblocks):                     # ResBlock(nf, 3)
        conv(f"rb{i}_c1", 3, 3, n_feats, n_feats)
        conv(f"rb{i}_c2", 3, 3, n_feats, n_feats)
    conv("body_last", 3, 3, n_feats, n_feats)        # ConvBlock(nf, nf, 3)
    conv("tail", 3, 3, n_feats, 3)                   # ConvBlock(nf, 3, 3)
    return params


# ----------------------------------------------------------------------------
# Pure-JAX reference (XLA convs) for correctness validation
# ----------------------------------------------------------------------------
def _conv_ref(x, w, b, relu=False):
    out = jax.lax.conv_general_dilated(
        x, w, window_strides=(1, 1), padding="SAME",
        dimension_numbers=("NCHW", "HWIO", "NCHW"))
    out = out + b.reshape(1, -1, 1, 1)
    if relu:
        out = jnp.maximum(out, 0.0)
    return out


def net_forward_ref(x, params, n_resblocks):
    h = _conv_ref(x, params["head_w"], params["head_b"], relu=True)
    y = h
    for i in range(n_resblocks):
        r = _conv_ref(y, params[f"rb{i}_c1_w"], params[f"rb{i}_c1_b"], relu=True)
        y = _conv_ref(r, params[f"rb{i}_c2_w"], params[f"rb{i}_c2_b"]) + y
    y = _conv_ref(y, params["body_last_w"], params["body_last_b"]) + h
    return _conv_ref(y, params["tail_w"], params["tail_b"])


# ----------------------------------------------------------------------------
if __name__ == "__main__":
    N_FEATS = 8
    N_RESBLOCKS = 2

    key = jax.random.PRNGKey(0)
    k_x, k_p = jax.random.split(key)

    x = jax.random.normal(k_x, (2, 4, 16, 16), jnp.float32)   # NCHW, 4-ch input
    params = init_params(k_p, N_FEATS, N_RESBLOCKS)

    fwd = jax.jit(functools.partial(net_forward, n_resblocks=N_RESBLOCKS))
    out = jax.block_until_ready(fwd(x, params))

    assert out.shape == (2, 3, 16, 16), out.shape
    assert out.dtype == jnp.float32

    ref = jax.block_until_ready(net_forward_ref(x, params, N_RESBLOCKS))
    err = float(jnp.max(jnp.abs(out - ref)))
    assert err < 5e-2, f"mismatch vs XLA reference: max abs err = {err}"

    print("KERNEL_OK")
</pallas_src>

<mosaic_0001>
module attributes {stable_mosaic.version = 11 : i64} {
  func.func @kernel(%arg0: i32, %arg1: memref<1x8x512xf32, #tpu.memory_space<vmem>>, %arg2: memref<1x512xf32, #tpu.memory_space<vmem>>, %arg3: memref<8x200xf32, #tpu.memory_space<vmem>>, %arg4: memref<8x1xf32, #tpu.memory_space<vmem>>, %arg5: memref<8x72xf32, #tpu.memory_space<vmem>>, %arg6: memref<8x1xf32, #tpu.memory_space<vmem>>, %arg7: memref<8x72xf32, #tpu.memory_space<vmem>>, %arg8: memref<8x1xf32, #tpu.memory_space<vmem>>, %arg9: memref<8x72xf32, #tpu.memory_space<vmem>>, %arg10: memref<8x1xf32, #tpu.memory_space<vmem>>, %arg11: memref<8x72xf32, #tpu.memory_space<vmem>>, %arg12: memref<8x1xf32, #tpu.memory_space<vmem>>, %arg13: memref<8x72xf32, #tpu.memory_space<vmem>>, %arg14: memref<8x1xf32, #tpu.memory_space<vmem>>, %arg15: memref<3x72xf32, #tpu.memory_space<vmem>>, %arg16: memref<3x1xf32, #tpu.memory_space<vmem>>, %arg17: memref<1x3x512xf32, #tpu.memory_space<vmem>>, %arg18: memref<8x768xf32, #tpu.memory_space<vmem>>) attributes {dimension_semantics = [#tpu.dimension_semantics<parallel>], iteration_bounds = array<i64: 2>, scalar_prefetch = 0 : i64, scratch_operands = 1 : i64, tpu.core_type = #tpu.core_type<tc>, window_params = [{transform_indices = @transform_0, window_bounds = array<i64: 1, 8, 512>}, {pipeline_mode = #tpu.pipeline_mode<synchronous>, transform_indices = @transform_1, window_bounds = array<i64: 1, 512>}, {pipeline_mode = #tpu.pipeline_mode<synchronous>, transform_indices = @transform_2, window_bounds = array<i64: 8, 200>}, {pipeline_mode = #tpu.pipeline_mode<synchronous>, transform_indices = @transform_3, window_bounds = array<i64: 8, 1>}, {pipeline_mode = #tpu.pipeline_mode<synchronous>, transform_indices = @transform_4, window_bounds = array<i64: 8, 72>}, {pipeline_mode = #tpu.pipeline_mode<synchronous>, transform_indices = @transform_5, window_bounds = array<i64: 8, 1>}, {pipeline_mode = #tpu.pipeline_mode<synchronous>, transform_indices = @transform_6, window_bounds = array<i64: 8, 72>}, {pipeline_mode = #tpu.pipeline_mode<synchronous>, transform_indices = @transform_7, window_bounds = array<i64: 8, 1>}, {pipeline_mode = #tpu.pipeline_mode<synchronous>, transform_indices = @transform_8, window_bounds = array<i64: 8, 72>}, {pipeline_mode = #tpu.pipeline_mode<synchronous>, transform_indices = @transform_9, window_bounds = array<i64: 8, 1>}, {pipeline_mode = #tpu.pipeline_mode<synchronous>, transform_indices = @transform_10, window_bounds = array<i64: 8, 72>}, {pipeline_mode = #tpu.pipeline_mode<synchronous>, transform_indices = @transform_11, window_bounds = array<i64: 8, 1>}, {pipeline_mode = #tpu.pipeline_mode<synchronous>, transform_indices = @transform_12, window_bounds = array<i64: 8, 72>}, {pipeline_mode = #tpu.pipeline_mode<synchronous>, transform_indices = @transform_13, window_bounds = array<i64: 8, 1>}, {pipeline_mode = #tpu.pipeline_mode<synchronous>, transform_indices = @transform_14, window_bounds = array<i64: 3, 72>}, {pipeline_mode = #tpu.pipeline_mode<synchronous>, transform_indices = @transform_15, window_bounds = array<i64: 3, 1>}, {transform_indices = @transform_16, window_bounds = array<i64: 1, 3, 512>}]} {
    %cst = arith.constant 0.000000e+00 : f32
    %0 = vector.broadcast %cst : f32 to vector<8x768xf32>
    %c0 = arith.constant 0 : index
    %c0_0 = arith.constant 0 : index
    %1 = vector.load %arg18[%c0, %c0_0] : memref<8x768xf32, #tpu.memory_space<vmem>>, vector<8x768xf32>
    tpu.vector_store %arg18[%c0, %c0_0], %0 {strides = array<i32>} : memref<8x768xf32, #tpu.memory_space<vmem>>, vector<8x768xf32>,
    %c0_1 = arith.constant 0 : index
    %c0_2 = arith.constant 0 : index
    %2 = vector.load %arg2[%c0_1, %c0_2] : memref<1x512xf32, #tpu.memory_space<vmem>>, vector<1x512xf32>
    %c0_3 = arith.constant 0 : index
    %c0_4 = arith.constant 0 : index
    %c0_5 = arith.constant 0 : index
    %3 = vector.load %arg1[%c0_3, %c0_4, %c0_5] : memref<1x8x512xf32, #tpu.memory_space<vmem>>, vector<1x8x512xf32>
    %4 = vector.shape_cast %3 : vector<1x8x512xf32> to vector<8x512xf32>
    %c0_6 = arith.constant 0 : index
    %c128 = arith.constant 128 : index
    %5 = vector.load %arg18[%c0_6, %c128] : memref<8x768xf32, #tpu.memory_space<vmem>>, vector<8x512xf32>
    tpu.vector_store %arg18[%c0_6, %c128], %4 {strides = array<i32>} : memref<8x768xf32, #tpu.memory_space<vmem>>, vector<8x512xf32>,
    %c0_7 = arith.constant 0 : index
    %c86 = arith.constant 86 : index
    %6 = vector.load %arg18[%c0_7, %c86] : memref<8x768xf32, #tpu.memory_space<vmem>>, vector<8x512xf32>
    %c0_8 = arith.constant 0 : index
    %c87 = arith.constant 87 : index
    %7 = vector.load %arg18[%c0_8, %c87] : memref<8x768xf32, #tpu.memory_space<vmem>>, vector<8x512xf32>
    %c0_9 = arith.constant 0 : index
    %c88 = arith.constant 88 : index
    %8 = vector.load %arg18[%c0_9, %c88] : memref<8x768xf32, #tpu.memory_space<vmem>>, vector<8x512xf32>
    %c0_10 = arith.constant 0 : index
    %c89 = arith.constant 89 : index
    %9 = vector.load %arg18[%c0_10, %c89] : memref<8x768xf32, #tpu.memory_space<vmem>>, vector<8x512xf32>
    %c0_11 = arith.constant 0 : index
    %c90 = arith.constant 90 : index
    %10 = vector.load %arg18[%c0_11, %c90] : memref<8x768xf32, #tpu.memory_space<vmem>>, vector<8x512xf32>
    %c0_12 = arith.constant 0 : index
    %c106 = arith.constant 106 : index
    %11 = vector.load %arg18[%c0_12, %c106] : memref<8x768xf32, #tpu.memory_space<vmem>>, vector<8x512xf32>
    %c0_13 = arith.constant 0 : index
    %c107 = arith.constant 107 : index
    %12 = vector.load %arg18[%c0_13, %c107] : memref<8x768xf32, #tpu.memory_space<vmem>>, vector<8x512xf32>
    %c0_14 = arith.constant 0 : index
    %c108 = arith.constant 108 : index
    %13 = vector.load %arg18[%c0_14, %c108] : memref<8x768xf32, #tpu.memory_space<vmem>>, vector<8x512xf32>
    %c0_15 = arith.constant 0 : index
    %c109 = arith.constant 109 : index
    %14 = vector.load %arg18[%c0_15, %c109] : memref<8x768xf32, #tpu.memory_space<vmem>>, vector<8x512xf32>
    %c0_16 = arith.constant 0 : index
    %c110 = arith.constant 110 : index
    %15 = vector.load %arg18[%c0_16, %c110] : memref<8x768xf32, #tpu.memory_space<vmem>>, vector<8x512xf32>
    %c0_17 = arith.constant 0 : index
    %c126 = arith.constant 126 : index
    %16 = vector.load %arg18[%c0_17, %c126] : memref<8x768xf32, #tpu.memory_space<vmem>>, vector<8x512xf32>
    %c0_18 = arith.constant 0 : index
    %c127 = arith.constant 127 : index
    %17 = vector.load %arg18[%c0_18, %c127] : memref<8x768xf32, #tpu.memory_space<vmem>>, vector<8x512xf32>
    %c0_19 = arith.constant 0 : index
    %c128_20 = arith.constant 128 : index
    %18 = vector.load %arg18[%c0_19, %c128_20] : memref<8x768xf32, #tpu.memory_space<vmem>>, vector<8x512xf32>
    %c0_21 = arith.constant 0 : index
    %c129 = arith.constant 129 : index
    %19 = vector.load %arg18[%c0_21, %c129] : memref<8x768xf32, #tpu.memory_space<vmem>>, vector<8x512xf32>
    %c0_22 = arith.constant 0 : index
    %c130 = arith.constant 130 : index
    %20 = vector.load %arg18[%c0_22, %c130] : memref<8x768xf32, #tpu.memory_space<vmem>>, vector<8x512xf32>
    %c0_23 = arith.constant 0 : index
    %c146 = arith.constant 146 : index
    %21 = vector.load %arg18[%c0_23, %c146] : memref<8x768xf32, #tpu.memory_space<vmem>>, vector<8x512xf32>
    %c0_24 = arith.constant 0 : index
    %c147 = arith.constant 147 : index
    %22 = vector.load %arg18[%c0_24, %c147] : memref<8x768xf32, #tpu.memory_space<vmem>>, vector<8x512xf32>
    %c0_25 = arith.constant 0 : index
    %c148 = arith.constant 148 : index
    %23 = vector.load %arg18[%c0_25, %c148] : memref<8x768xf32, #tpu.memory_space<vmem>>, vector<8x512xf32>
    %c0_26 = arith.constant 0 : index
    %c149 = arith.constant 149 : index
    %24 = vector.load %arg18[%c0_26, %c149] : memref<8x768xf32, #tpu.memory_space<vmem>>, vector<8x512xf32>
    %c0_27 = arith.constant 0 : index
    %c150 = arith.constant 150 : index
    %25 = vector.load %arg18[%c0_27, %c150] : memref<8x768xf32, #tpu.memory_space<vmem>>, vector<8x512xf32>
    %c0_28 = arith.constant 0 : index
    %c166 = arith.constant 166 : index
    %26 = vector.load %arg18[%c0_28, %c166] : memref<8x768xf32, #tpu.memory_space<vmem>>, vector<8x512xf32>
    %c0_29 = arith.constant 0 : index
    %c167 = arith.constant 167 : index
    %27 = vector.load %arg18[%c0_29, %c167] : memref<8x768xf32, #tpu.memory_space<vmem>>, vector<8x512xf32>
    %c0_30 = arith.constant 0 : index
    %c168 = arith.constant 168 : index
    %28 = vector.load %arg18[%c0_30, %c168] : memref<8x768xf32, #tpu.memory_space<vmem>>, vector<8x512xf32>
    %c0_31 = arith.constant 0 : index
    %c169 = arith.constant 169 : index
    %29 = vector.load %arg18[%c0_31, %c169] : memref<8x768xf32, #tpu.memory_space<vmem>>, vector<8x512xf32>
    %c0_32 = arith.constant 0 : index
    %c170 = arith.constant 170 : index
    %30 = vector.load %arg18[%c0_32, %c170] : memref<8x768xf32, #tpu.memory_space<vmem>>, vector<8x512xf32>
    %31 = tpu.concatenate %6, %7, %8, %9, %10, %11, %12, %13, %14, %15, %16, %17, %18, %19, %20, %21 in 0 : vector<8x512xf32>, vector<8x512xf32>, vector<8x512xf32>, vector<8x512xf32>, vector<8x512xf32>, vector<8x512xf32>, vector<8x512xf32>, vector<8x512xf32>, vector<8x512xf32>, vector<8x512xf32>, vector<8x512xf32>, vector<8x512xf32>, vector<8x512xf32>, vector<8x512xf32>, vector<8x512xf32>, vector<8x512xf32> -> vector<128x512xf32>
    %32 = tpu.concatenate %22, %23, %24, %25, %26, %27, %28, %29, %30 in 0 : vector<8x512xf32>, vector<8x512xf32>, vector<8x512xf32>, vector<8x512xf32>, vector<8x512xf32>, vector<8x512xf32>, vector<8x512xf32>, vector<8x512xf32>, vector<8x512xf32> -> vector<72x512xf32>
    %33 = tpu.concatenate %31, %32 in 0 : vector<128x512xf32>, vector<72x512xf32> -> vector<200x512xf32>
    %c0_33 = arith.constant 0 : index
    %c0_34 = arith.constant 0 : index
    %34 = vector.load %arg3[%c0_33, %c0_34] : memref<8x200xf32, #tpu.memory_space<vmem>>, vector<8x200xf32>
    %cst_35 = arith.constant dense<0.000000e+00> : vector<8x512xf32>
    %35 = tpu.matmul %34, %33, %cst_35 {dimension_numbers = #tpu.dot_dimension_numbers<[1], [0], [0], [1], [0, 0, 1, 1], [], []>} : vector<8x200xf32>, vector<200x512xf32>, vector<8x512xf32> -> vector<8x512xf32>
    %c0_36 = arith.constant 0 : index
    %c0_37 = arith.constant 0 : index
    %36 = vector.load %arg4[%c0_36, %c0_37] : memref<8x1xf32, #tpu.memory_space<vmem>>, vector<8x1xf32>
    %37 = vector.broadcast %36 : vector<8x1xf32> to vector<8x512xf32>
    %38 = arith.addf %35, %37 : vector<8x512xf32>
    %cst_38 = arith.constant 0.000000e+00 : f32
    %39 = vector.broadcast %cst_38 : f32 to vector<8x512xf32>
    %40 = arith.maximumf %38, %39 : vector<8x512xf32>
    %41 = vector.broadcast %2 : vector<1x512xf32> to vector<8x512xf32>
    %42 = arith.mulf %40, %41 : vector<8x512xf32>
    %c0_39 = arith.constant 0 : index
    %c128_40 = arith.constant 128 : index
    %43 = vector.load %arg18[%c0_39, %c128_40] : memref<8x768xf32, #tpu.memory_space<vmem>>, vector<8x512xf32>
    tpu.vector_store %arg18[%c0_39, %c128_40], %42 {strides = array<i32>} : memref<8x768xf32, #tpu.memory_space<vmem>>, vector<8x512xf32>,
    %c0_41 = arith.constant 0 : index
    %c107_42 = arith.constant 107 : index
    %44 = vector.load %arg18[%c0_41, %c107_42] : memref<8x768xf32, #tpu.memory_space<vmem>>, vector<8x512xf32>
    %c0_43 = arith.constant 0 : index
    %c108_44 = arith.constant 108 : index
    %45 = vector.load %arg18[%c0_43, %c108_44] : memref<8x768xf32, #tpu.memory_space<vmem>>, vector<8x512xf32>
    %c0_45 = arith.constant 0 : index
    %c109_46 = arith.constant 109 : index
    %46 = vector.load %arg18[%c0_45, %c109_46] : memref<8x768xf32, #tpu.memory_space<vmem>>, vector<8x512xf32>
    %c0_47 = arith.constant 0 : index
    %c127_48 = arith.constant 127 : index
    %47 = vector.load %arg18[%c0_47, %c127_48] : memref<8x768xf32, #tpu.memory_space<vmem>>, vector<8x512xf32>
    %c0_49 = arith.constant 0 : index
    %c128_50 = arith.constant 128 : index
    %48 = vector.load %arg18[%c0_49, %c128_50] : memref<8x768xf32, #tpu.memory_space<vmem>>, vector<8x512xf32>
    %c0_51 = arith.constant 0 : index
    %c129_52 = arith.constant 129 : index
    %49 = vector.load %arg18[%c0_51, %c129_52] : memref<8x768xf32, #tpu.memory_space<vmem>>, vector<8x512xf32>
    %c0_53 = arith.constant 0 : index
    %c147_54 = arith.constant 147 : index
    %50 = vector.load %arg18[%c0_53, %c147_54] : memref<8x768xf32, #tpu.memory_space<vmem>>, vector<8x512xf32>
    %c0_55 = arith.constant 0 : index
    %c148_56 = arith.constant 148 : index
    %51 = vector.load %arg18[%c0_55, %c148_56] : memref<8x768xf32, #tpu.memory_space<vmem>>, vector<8x512xf32>
    %c0_57 = arith.constant 0 : index
    %c149_58 = arith.constant 149 : index
    %52 = vector.load %arg18[%c0_57, %c149_58] : memref<8x768xf32, #tpu.memory_space<vmem>>, vector<8x512xf32>
    %53 = tpu.concatenate %44, %45, %46, %47, %48, %49, %50, %51, %52 in 0 : vector<8x512xf32>, vector<8x512xf32>, vector<8x512xf32>, vector<8x512xf32>, vector<8x512xf32>, vector<8x512xf32>, vector<8x512xf32>, vector<8x512xf32>, vector<8x512xf32> -> vector<72x512xf32>
    %c0_59 = arith.constant 0 : index
    %c0_60 = arith.constant 0 : index
    %54 = vector.load %arg5[%c0_59, %c0_60] : memref<8x72xf32, #tpu.memory_space<vmem>>, vector<8x72xf32>
    %cst_61 = arith.constant dense<0.000000e+00> : vector<8x512xf32>
    %55 = tpu.matmul %54, %53, %cst_61 {dimension_numbers = #tpu.dot_dimension_numbers<[1], [0], [0], [1], [0, 0, 1, 1], [], []>} : vector<8x72xf32>, vector<72x512xf32>, vector<8x512xf32> -> vector<8x512xf32>
    %c0_62 = arith.constant 0 : index
    %c0_63 = arith.constant 0 : index
    %56 = vector.load %arg6[%c0_62, %c0_63] : memref<8x1xf32, #tpu.memory_space<vmem>>, vector<8x1xf32>
    %57 = vector.broadcast %56 : vector<8x1xf32> to vector<8x512xf32>
    %58 = arith.addf %55, %57 : vector<8x512xf32>
    %cst_64 = arith.constant 0.000000e+00 : f32
    %59 = vector.broadcast %cst_64 : f32 to vector<8x512xf32>
    %60 = arith.maximumf %58, %59 : vector<8x512xf32>
    %61 = vector.broadcast %2 : vector<1x512xf32> to vector<8x512xf32>
    %62 = arith.mulf %60, %61 : vector<8x512xf32>
    %c0_65 = arith.constant 0 : index
    %c128_66 = arith.constant 128 : index
    %63 = vector.load %arg18[%c0_65, %c128_66] : memref<8x768xf32, #tpu.memory_space<vmem>>, vector<8x512xf32>
    tpu.vector_store %arg18[%c0_65, %c128_66], %62 {strides = array<i32>} : memref<8x768xf32, #tpu.memory_space<vmem>>, vector<8x512xf32>,
    %c0_67 = arith.constant 0 : index
    %c107_68 = arith.constant 107 : index
    %64 = vector.load %arg18[%c0_67, %c107_68] : memref<8x768xf32, #tpu.memory_space<vmem>>, vector<8x512xf32>
    %c0_69 = arith.constant 0 : index
    %c108_70 = arith.constant 108 : index
    %65 = vector.load %arg18[%c0_69, %c108_70] : memref<8x768xf32, #tpu.memory_space<vmem>>, vector<8x512xf32>
    %c0_71 = arith.constant 0 : index
    %c109_72 = arith.constant 109 : index
    %66 = vector.load %arg18[%c0_71, %c109_72] : memref<8x768xf32, #tpu.memory_space<vmem>>, vector<8x512xf32>
    %c0_73 = arith.constant 0 : index
    %c127_74 = arith.constant 127 : index
    %67 = vector.load %arg18[%c0_73, %c127_74] : memref<8x768xf32, #tpu.memory_space<vmem>>, vector<8x512xf32>
    %c0_75 = arith.constant 0 : index
    %c128_76 = arith.constant 128 : index
    %68 = vector.load %arg18[%c0_75, %c128_76] : memref<8x768xf32, #tpu.memory_space<vmem>>, vector<8x512xf32>
    %c0_77 = arith.constant 0 : index
    %c129_78 = arith.constant 129 : index
    %69 = vector.load %arg18[%c0_77, %c129_78] : memref<8x768xf32, #tpu.memory_space<vmem>>, vector<8x512xf32>
    %c0_79 = arith.constant 0 : index
    %c147_80 = arith.constant 147 : index
    %70 = vector.load %arg18[%c0_79, %c147_80] : memref<8x768xf32, #tpu.memory_space<vmem>>, vector<8x512xf32>
    %c0_81 = arith.constant 0 : index
    %c148_82 = arith.constant 148 : index
    %71 = vector.load %arg18[%c0_81, %c148_82] : memref<8x768xf32, #tpu.memory_space<vmem>>, vector<8x512xf32>
    %c0_83 = arith.constant 0 : index
    %c149_84 = arith.constant 149 : index
    %72 = vector.load %arg18[%c0_83, %c149_84] : memref<8x768xf32, #tpu.memory_space<vmem>>, vector<8x512xf32>
    %73 = tpu.concatenate %64, %65, %66, %67, %68, %69, %70, %71, %72 in 0 : vector<8x512xf32>, vector<8x512xf32>, vector<8x512xf32>, vector<8x512xf32>, vector<8x512xf32>, vector<8x512xf32>, vector<8x512xf32>, vector<8x512xf32>, vector<8x512xf32> -> vector<72x512xf32>
    %c0_85 = arith.constant 0 : index
    %c0_86 = arith.constant 0 : index
    %74 = vector.load %arg7[%c0_85, %c0_86] : memref<8x72xf32, #tpu.memory_space<vmem>>, vector<8x72xf32>
    %cst_87 = arith.constant dense<0.000000e+00> : vector<8x512xf32>
    %75 = tpu.matmul %74, %73, %cst_87 {dimension_numbers = #tpu.dot_dimension_numbers<[1], [0], [0], [1], [0, 0, 1, 1], [], []>} : vector<8x72xf32>, vector<72x512xf32>, vector<8x512xf32> -> vector<8x512xf32>
    %c0_88 = arith.constant 0 : index
    %c0_89 = arith.constant 0 : index
    %76 = vector.load %arg8[%c0_88, %c0_89] : memref<8x1xf32, #tpu.memory_space<vmem>>, vector<8x1xf32>
    %77 = vector.broadcast %76 : vector<8x1xf32> to vector<8x512xf32>
    %78 = arith.addf %75, %77 : vector<8x512xf32>
    %79 = arith.addf %78, %42 : vector<8x512xf32>
    %80 = vector.broadcast %2 : vector<1x512xf32> to vector<8x512xf32>
    %81 = arith.mulf %79, %80 : vector<8x512xf32>
    %c0_90 = arith.constant 0 : index
    %c128_91 = arith.constant 128 : index
    %82 = vector.load %arg18[%c0_90, %c128_91] : memref<8x768xf32, #tpu.memory_space<vmem>>, vector<8x512xf32>
    tpu.vector_store %arg18[%c0_90, %c128_91], %81 {strides = array<i32>} : memref<8x768xf32, #tpu.memory_space<vmem>>, vector<8x512xf32>,
    %c0_92 = arith.constant 0 : index
    %c107_93 = arith.constant 107 : index
    %83 = vector.load %arg18[%c0_92, %c107_93] : memref<8x768xf32, #tpu.memory_space<vmem>>, vector<8x512xf32>
    %c0_94 = arith.constant 0 : index
    %c108_95 = arith.constant 108 : index
    %84 = vector.load %arg18[%c0_94, %c108_95] : memref<8x768xf32, #tpu.memory_space<vmem>>, vector<8x512xf32>
    %c0_96 = arith.constant 0 : index
    %c109_97 = arith.constant 109 : index
    %85 = vector.load %arg18[%c0_96, %c109_97] : memref<8x768xf32, #tpu.memory_space<vmem>>, vector<8x512xf32>
    %c0_98 = arith.constant 0 : index
    %c127_99 = arith.constant 127 : index
    %86 = vector.load %arg18[%c0_98, %c127_99] : memref<8x768xf32, #tpu.memory_space<vmem>>, vector<8x512xf32>
    %c0_100 = arith.constant 0 : index
    %c128_101 = arith.constant 128 : index
    %87 = vector.load %arg18[%c0_100, %c128_101] : memref<8x768xf32, #tpu.memory_space<vmem>>, vector<8x512xf32>
    %c0_102 = arith.constant 0 : index
    %c129_103 = arith.constant 129 : index
    %88 = vector.load %arg18[%c0_102, %c129_103] : memref<8x768xf32, #tpu.memory_space<vmem>>, vector<8x512xf32>
    %c0_104 = arith.constant 0 : index
    %c147_105 = arith.constant 147 : index
    %89 = vector.load %arg18[%c0_104, %c147_105] : memref<8x768xf32, #tpu.memory_space<vmem>>, vector<8x512xf32>
    %c0_106 = arith.constant 0 : index
    %c148_107 = arith.constant 148 : index
    %90 = vector.load %arg18[%c0_106, %c148_107] : memref<8x768xf32, #tpu.memory_space<vmem>>, vector<8x512xf32>
    %c0_108 = arith.constant 0 : index
    %c149_109 = arith.constant 149 : index
    %91 = vector.load %arg18[%c0_108, %c149_109] : memref<8x768xf32, #tpu.memory_space<vmem>>, vector<8x512xf32>
    %92 = tpu.concatenate %83, %84, %85, %86, %87, %88, %89, %90, %91 in 0 : vector<8x512xf32>, vector<8x512xf32>, vector<8x512xf32>, vector<8x512xf32>, vector<8x512xf32>, vector<8x512xf32>, vector<8x512xf32>, vector<8x512xf32>, vector<8x512xf32> -> vector<72x512xf32>
    %c0_110 = arith.constant 0 : index
    %c0_111 = arith.constant 0 : index
    %93 = vector.load %arg9[%c0_110, %c0_111] : memref<8x72xf32, #tpu.memory_space<vmem>>, vector<8x72xf32>
    %cst_112 = arith.constant dense<0.000000e+00> : vector<8x512xf32>
    %94 = tpu.matmul %93, %92, %cst_112 {dimension_numbers = #tpu.dot_dimension_numbers<[1], [0], [0], [1], [0, 0, 1, 1], [], []>} : vector<8x72xf32>, vector<72x512xf32>, vector<8x512xf32> -> vector<8x512xf32>
    %c0_113 = arith.constant 0 : index
    %c0_114 = arith.constant 0 : index
    %95 = vector.load %arg10[%c0_113, %c0_114] : memref<8x1xf32, #tpu.memory_space<vmem>>, vector<8x1xf32>
    %96 = vector.broadcast %95 : vector<8x1xf32> to vector<8x512xf32>
    %97 = arith.addf %94, %96 : vector<8x512xf32>
    %cst_115 = arith.constant 0.000000e+00 : f32
    %98 = vector.broadcast %cst_115 : f32 to vector<8x512xf32>
    %99 = arith.maximumf %97, %98 : vector<8x512xf32>
    %100 = vector.broadcast %2 : vector<1x512xf32> to vector<8x512xf32>
    %101 = arith.mulf %99, %100 : vector<8x512xf32>
    %c0_116 = arith.constant 0 : index
    %c128_117 = arith.constant 128 : index
    %102 = vector.load %arg18[%c0_116, %c128_117] : memref<8x768xf32, #tpu.memory_space<vmem>>, vector<8x512xf32>
    tpu.vector_store %arg18[%c0_116, %c128_117], %101 {strides = array<i32>} : memref<8x768xf32, #tpu.memory_space<vmem>>, vector<8x512xf32>,
    %c0_118 = arith.constant 0 : index
    %c107_119 = arith.constant 107 : index
    %103 = vector.load %arg18[%c0_118, %c107_119] : memref<8x768xf32, #tpu.memory_space<vmem>>, vector<8x512xf32>
    %c0_120 = arith.constant 0 : index
    %c108_121 = arith.constant 108 : index
    %104 = vector.load %arg18[%c0_120, %c108_121] : memref<8x768xf32, #tpu.memory_space<vmem>>, vector<8x512xf32>
    %c0_122 = arith.constant 0 : index
    %c109_123 = arith.constant 109 : index
    %105 = vector.load %arg18[%c0_122, %c109_123] : memref<8x768xf32, #tpu.memory_space<vmem>>, vector<8x512xf32>
    %c0_124 = arith.constant 0 : index
    %c127_125 = arith.constant 127 : index
    %106 = vector.load %arg18[%c0_124, %c127_125] : memref<8x768xf32, #tpu.memory_space<vmem>>, vector<8x512xf32>
    %c0_126 = arith.constant 0 : index
    %c128_127 = arith.constant 128 : index
    %107 = vector.load %arg18[%c0_126, %c128_127] : memref<8x768xf32, #tpu.memory_space<vmem>>, vector<8x512xf32>
    %c0_128 = arith.constant 0 : index
    %c129_129 = arith.constant 129 : index
    %108 = vector.load %arg18[%c0_128, %c129_129] : memref<8x768xf32, #tpu.memory_space<vmem>>, vector<8x512xf32>
    %c0_130 = arith.constant 0 : index
    %c147_131 = arith.constant 147 : index
    %109 = vector.load %arg18[%c0_130, %c147_131] : memref<8x768xf32, #tpu.memory_space<vmem>>, vector<8x512xf32>
    %c0_132 = arith.constant 0 : index
    %c148_133 = arith.constant 148 : index
    %110 = vector.load %arg18[%c0_132, %c148_133] : memref<8x768xf32, #tpu.memory_space<vmem>>, vector<8x512xf32>
    %c0_134 = arith.constant 0 : index
    %c149_135 = arith.constant 149 : index
    %111 = vector.load %arg18[%c0_134, %c149_135] : memref<8x768xf32, #tpu.memory_space<vmem>>, vector<8x512xf32>
    %112 = tpu.concatenate %103, %104, %105, %106, %107, %108, %109, %110, %111 in 0 : vector<8x512xf32>, vector<8x512xf32>, vector<8x512xf32>, vector<8x512xf32>, vector<8x512xf32>, vector<8x512xf32>, vector<8x512xf32>, vector<8x512xf32>, vector<8x512xf32> -> vector<72x512xf32>
    %c0_136 = arith.constant 0 : index
    %c0_137 = arith.constant 0 : index
    %113 = vector.load %arg11[%c0_136, %c0_137] : memref<8x72xf32, #tpu.memory_space<vmem>>, vector<8x72xf32>
    %cst_138 = arith.constant dense<0.000000e+00> : vector<8x512xf32>
    %114 = tpu.matmul %113, %112, %cst_138 {dimension_numbers = #tpu.dot_dimension_numbers<[1], [0], [0], [1], [0, 0, 1, 1], [], []>} : vector<8x72xf32>, vector<72x512xf32>, vector<8x512xf32> -> vector<8x512xf32>
    %c0_139 = arith.constant 0 : index
    %c0_140 = arith.constant 0 : index
    %115 = vector.load %arg12[%c0_139, %c0_140] : memref<8x1xf32, #tpu.memory_space<vmem>>, vector<8x1xf32>
    %116 = vector.broadcast %115 : vector<8x1xf32> to vector<8x512xf32>
    %117 = arith.addf %114, %116 : vector<8x512xf32>
    %118 = arith.addf %117, %81 : vector<8x512xf32>
    %119 = vector.broadcast %2 : vector<1x512xf32> to vector<8x512xf32>
    %120 = arith.mulf %118, %119 : vector<8x512xf32>
    %c0_141 = arith.constant 0 : index
    %c128_142 = arith.constant 128 : index
    %121 = vector.load %arg18[%c0_141, %c128_142] : memref<8x768xf32, #tpu.memory_space<vmem>>, vector<8x512xf32>
    tpu.vector_store %arg18[%c0_141, %c128_142], %120 {strides = array<i32>} : memref<8x768xf32, #tpu.memory_space<vmem>>, vector<8x512xf32>,
    %c0_143 = arith.constant 0 : index
    %c107_144 = arith.constant 107 : index
    %122 = vector.load %arg18[%c0_143, %c107_144] : memref<8x768xf32, #tpu.memory_space<vmem>>, vector<8x512xf32>
    %c0_145 = arith.constant 0 : index
    %c108_146 = arith.constant 108 : index
    %123 = vector.load %arg18[%c0_145, %c108_146] : memref<8x768xf32, #tpu.memory_space<vmem>>, vector<8x512xf32>
    %c0_147 = arith.constant 0 : index
    %c109_148 = arith.constant 109 : index
    %124 = vector.load %arg18[%c0_147, %c109_148] : memref<8x768xf32, #tpu.memory_space<vmem>>, vector<8x512xf32>
    %c0_149 = arith.constant 0 : index
    %c127_150 = arith.constant 127 : index
    %125 = vector.load %arg18[%c0_149, %c127_150] : memref<8x768xf32, #tpu.memory_space<vmem>>, vector<8x512xf32>
    %c0_151 = arith.constant 0 : index
    %c128_152 = arith.constant 128 : index
    %126 = vector.load %arg18[%c0_151, %c128_152] : memref<8x768xf32, #tpu.memory_space<vmem>>, vector<8x512xf32>
    %c0_153 = arith.constant 0 : index
    %c129_154 = arith.constant 129 : index
    %127 = vector.load %arg18[%c0_153, %c129_154] : memref<8x768xf32, #tpu.memory_space<vmem>>, vector<8x512xf32>
    %c0_155 = arith.constant 0 : index
    %c147_156 = arith.constant 147 : index
    %128 = vector.load %arg18[%c0_155, %c147_156] : memref<8x768xf32, #tpu.memory_space<vmem>>, vector<8x512xf32>
    %c0_157 = arith.constant 0 : index
    %c148_158 = arith.constant 148 : index
    %129 = vector.load %arg18[%c0_157, %c148_158] : memref<8x768xf32, #tpu.memory_space<vmem>>, vector<8x512xf32>
    %c0_159 = arith.constant 0 : index
    %c149_160 = arith.constant 149 : index
    %130 = vector.load %arg18[%c0_159, %c149_160] : memref<8x768xf32, #tpu.memory_space<vmem>>, vector<8x512xf32>
    %131 = tpu.concatenate %122, %123, %124, %125, %126, %127, %128, %129, %130 in 0 : vector<8x512xf32>, vector<8x512xf32>, vector<8x512xf32>, vector<8x512xf32>, vector<8x512xf32>, vector<8x512xf32>, vector<8x512xf32>, vector<8x512xf32>, vector<8x512xf32> -> vector<72x512xf32>
    %c0_161 = arith.constant 0 : index
    %c0_162 = arith.constant 0 : index
    %132 = vector.load %arg13[%c0_161, %c0_162] : memref<8x72xf32, #tpu.memory_space<vmem>>, vector<8x72xf32>
    %cst_163 = arith.constant dense<0.000000e+00> : vector<8x512xf32>
    %133 = tpu.matmul %132, %131, %cst_163 {dimension_numbers = #tpu.dot_dimension_numbers<[1], [0], [0], [1], [0, 0, 1, 1], [], []>} : vector<8x72xf32>, vector<72x512xf32>, vector<8x512xf32> -> vector<8x512xf32>
    %c0_164 = arith.constant 0 : index
    %c0_165 = arith.constant 0 : index
    %134 = vector.load %arg14[%c0_164, %c0_165] : memref<8x1xf32, #tpu.memory_space<vmem>>, vector<8x1xf32>
    %135 = vector.broadcast %134 : vector<8x1xf32> to vector<8x512xf32>
    %136 = arith.addf %133, %135 : vector<8x512xf32>
    %137 = arith.addf %136, %42 : vector<8x512xf32>
    %138 = vector.broadcast %2 : vector<1x512xf32> to vector<8x512xf32>
    %139 = arith.mulf %137, %138 : vector<8x512xf32>
    %c0_166 = arith.constant 0 : index
    %c128_167 = arith.constant 128 : index
    %140 = vector.load %arg18[%c0_166, %c128_167] : memref<8x768xf32, #tpu.memory_space<vmem>>, vector<8x512xf32>
    tpu.vector_store %arg18[%c0_166, %c128_167], %139 {strides = array<i32>} : memref<8x768xf32, #tpu.memory_space<vmem>>, vector<8x512xf32>,
    %c0_168 = arith.constant 0 : index
    %c107_169 = arith.constant 107 : index
    %141 = vector.load %arg18[%c0_168, %c107_169] : memref<8x768xf32, #tpu.memory_space<vmem>>, vector<8x512xf32>
    %c0_170 = arith.constant 0 : index
    %c108_171 = arith.constant 108 : index
    %142 = vector.load %arg18[%c0_170, %c108_171] : memref<8x768xf32, #tpu.memory_space<vmem>>, vector<8x512xf32>
    %c0_172 = arith.constant 0 : index
    %c109_173 = arith.constant 109 : index
    %143 = vector.load %arg18[%c0_172, %c109_173] : memref<8x768xf32, #tpu.memory_space<vmem>>, vector<8x512xf32>
    %c0_174 = arith.constant 0 : index
    %c127_175 = arith.constant 127 : index
    %144 = vector.load %arg18[%c0_174, %c127_175] : memref<8x768xf32, #tpu.memory_space<vmem>>, vector<8x512xf32>
    %c0_176 = arith.constant 0 : index
    %c128_177 = arith.constant 128 : index
    %145 = vector.load %arg18[%c0_176, %c128_177] : memref<8x768xf32, #tpu.memory_space<vmem>>, vector<8x512xf32>
    %c0_178 = arith.constant 0 : index
    %c129_179 = arith.constant 129 : index
    %146 = vector.load %arg18[%c0_178, %c129_179] : memref<8x768xf32, #tpu.memory_space<vmem>>, vector<8x512xf32>
    %c0_180 = arith.constant 0 : index
    %c147_181 = arith.constant 147 : index
    %147 = vector.load %arg18[%c0_180, %c147_181] : memref<8x768xf32, #tpu.memory_space<vmem>>, vector<8x512xf32>
    %c0_182 = arith.constant 0 : index
    %c148_183 = arith.constant 148 : index
    %148 = vector.load %arg18[%c0_182, %c148_183] : memref<8x768xf32, #tpu.memory_space<vmem>>, vector<8x512xf32>
    %c0_184 = arith.constant 0 : index
    %c149_185 = arith.constant 149 : index
    %149 = vector.load %arg18[%c0_184, %c149_185] : memref<8x768xf32, #tpu.memory_space<vmem>>, vector<8x512xf32>
    %150 = tpu.concatenate %141, %142, %143, %144, %145, %146, %147, %148, %149 in 0 : vector<8x512xf32>, vector<8x512xf32>, vector<8x512xf32>, vector<8x512xf32>, vector<8x512xf32>, vector<8x512xf32>, vector<8x512xf32>, vector<8x512xf32>, vector<8x512xf32> -> vector<72x512xf32>
    %c0_186 = arith.constant 0 : index
    %c0_187 = arith.constant 0 : index
    %151 = vector.load %arg15[%c0_186, %c0_187] : memref<3x72xf32, #tpu.memory_space<vmem>>, vector<3x72xf32>
    %cst_188 = arith.constant dense<0.000000e+00> : vector<3x512xf32>
    %152 = tpu.matmul %151, %150, %cst_188 {dimension_numbers = #tpu.dot_dimension_numbers<[1], [0], [0], [1], [0, 0, 1, 1], [], []>} : vector<3x72xf32>, vector<72x512xf32>, vector<3x512xf32> -> vector<3x512xf32>
    %c0_189 = arith.constant 0 : index
    %c0_190 = arith.constant 0 : index
    %153 = vector.load %arg16[%c0_189, %c0_190] : memref<3x1xf32, #tpu.memory_space<vmem>>, vector<3x1xf32>
    %154 = vector.broadcast %153 : vector<3x1xf32> to vector<3x512xf32>
    %155 = arith.addf %152, %154 : vector<3x512xf32>
    %156 = vector.broadcast %2 : vector<1x512xf32> to vector<3x512xf32>
    %157 = arith.mulf %155, %156 : vector<3x512xf32>
    %c0_191 = arith.constant 0 : index
    %c0_192 = arith.constant 0 : index
    %c0_193 = arith.constant 0 : index
    %158 = vector.load %arg17[%c0_191, %c0_192, %c0_193] : memref<1x3x512xf32, #tpu.memory_space<vmem>>, vector<1x3x512xf32>
    %159 = vector.shape_cast %158 : vector<1x3x512xf32> to vector<3x512xf32>
    %160 = vector.shape_cast %157 : vector<3x512xf32> to vector<1x3x512xf32>
    tpu.vector_store %arg17[%c0_191, %c0_192, %c0_193], %160 {strides = array<i32>} : memref<1x3x512xf32, #tpu.memory_space<vmem>>, vector<1x3x512xf32>,
    return
  }
  func.func @transform_0(%arg0: i32) -> (i32, i32, i32) {
    %c0_i32 = arith.constant 0 : i32
    %c0_i32_0 = arith.constant 0 : i32
    %c0_i32_1 = arith.constant 0 : i32
    return %arg0, %c0_i32, %c0_i32_0 : i32, i32, i32
  }
  func.func @transform_1(%arg0: i32) -> (i32, i32) {
    %c0_i32 = arith.constant 0 : i32
    %c0_i32_0 = arith.constant 0 : i32
    %c0_i32_1 = arith.constant 0 : i32
    return %c0_i32, %c0_i32_0 : i32, i32
  }
  func.func @transform_2(%arg0: i32) -> (i32, i32) {
    %c0_i32 = arith.constant 0 : i32
    %c0_i32_0 = arith.constant 0 : i32
    %c0_i32_1 = arith.constant 0 : i32
    return %c0_i32, %c0_i32_0 : i32, i32
  }
  func.func @transform_3(%arg0: i32) -> (i32, i32) {
    %c0_i32 = arith.constant 0 : i32
    %c0_i32_0 = arith.constant 0 : i32
    %c0_i32_1 = arith.constant 0 : i32
    return %c0_i32, %c0_i32_0 : i32, i32
  }
  func.func @transform_4(%arg0: i32) -> (i32, i32) {
    %c0_i32 = arith.constant 0 : i32
    %c0_i32_0 = arith.constant 0 : i32
    %c0_i32_1 = arith.constant 0 : i32
    return %c0_i32, %c0_i32_0 : i32, i32
  }
  func.func @transform_5(%arg0: i32) -> (i32, i32) {
    %c0_i32 = arith.constant 0 : i32
    %c0_i32_0 = arith.constant 0 : i32
    %c0_i32_1 = arith.constant 0 : i32
    return %c0_i32, %c0_i32_0 : i32, i32
  }
  func.func @transform_6(%arg0: i32) -> (i32, i32) {
    %c0_i32 = arith.constant 0 : i32
    %c0_i32_0 = arith.constant 0 : i32
    %c0_i32_1 = arith.constant 0 : i32
    return %c0_i32, %c0_i32_0 : i32, i32
  }
  func.func @transform_7(%arg0: i32) -> (i32, i32) {
    %c0_i32 = arith.constant 0 : i32
    %c0_i32_0 = arith.constant 0 : i32
    %c0_i32_1 = arith.constant 0 : i32
    return %c0_i32, %c0_i32_0 : i32, i32
  }
  func.func @transform_8(%arg0: i32) -> (i32, i32) {
    %c0_i32 = arith.constant 0 : i32
    %c0_i32_0 = arith.constant 0 : i32
    %c0_i32_1 = arith.constant 0 : i32
    return %c0_i32, %c0_i32_0 : i32, i32
  }
  func.func @transform_9(%arg0: i32) -> (i32, i32) {
    %c0_i32 = arith.constant 0 : i32
    %c0_i32_0 = arith.constant 0 : i32
    %c0_i32_1 = arith.constant 0 : i32
    return %c0_i32, %c0_i32_0 : i32, i32
  }
  func.func @transform_10(%arg0: i32) -> (i32, i32) {
    %c0_i32 = arith.constant 0 : i32
    %c0_i32_0 = arith.constant 0 : i32
    %c0_i32_1 = arith.constant 0 : i32
    return %c0_i32, %c0_i32_0 : i32, i32
  }
  func.func @transform_11(%arg0: i32) -> (i32, i32) {
    %c0_i32 = arith.constant 0 : i32
    %c0_i32_0 = arith.constant 0 : i32
    %c0_i32_1 = arith.constant 0 : i32
    return %c0_i32, %c0_i32_0 : i32, i32
  }
  func.func @transform_12(%arg0: i32) -> (i32, i32) {
    %c0_i32 = arith.constant 0 : i32
    %c0_i32_0 = arith.constant 0 : i32
    %c0_i32_1 = arith.constant 0 : i32
    return %c0_i32, %c0_i32_0 : i32, i32
  }
  func.func @transform_13(%arg0: i32) -> (i32, i32) {
    %c0_i32 = arith.constant 0 : i32
    %c0_i32_0 = arith.constant 0 : i32
    %c0_i32_1 = arith.constant 0 : i32
    return %c0_i32, %c0_i32_0 : i32, i32
  }
  func.func @transform_14(%arg0: i32) -> (i32, i32) {
    %c0_i32 = arith.constant 0 : i32
    %c0_i32_0 = arith.constant 0 : i32
    %c0_i32_1 = arith.constant 0 : i32
    return %c0_i32, %c0_i32_0 : i32, i32
  }
  func.func @transform_15(%arg0: i32) -> (i32, i32) {
    %c0_i32 = arith.constant 0 : i32
    %c0_i32_0 = arith.constant 0 : i32
    %c0_i32_1 = arith.constant 0 : i32
    return %c0_i32, %c0_i32_0 : i32, i32
  }
  func.func @transform_16(%arg0: i32) -> (i32, i32, i32) {
    %c0_i32 = arith.constant 0 : i32
    %c0_i32_0 = arith.constant 0 : i32
    %c0_i32_1 = arith.constant 0 : i32
    return %arg0, %c0_i32, %c0_i32_0 : i32, i32, i32
  }
}

</mosaic_0001>

<llo_original>
// kernel: net_forward.1
$region0: #{net_forward.1}
  #allocation0 [shape = 'u32[]', space=smem, size = 0x4, offset = 0x4, fixed_abs, tag = 'smem constant byte address 0x4 - core index']
  #allocation1 [shape = 'u32[72,128]{1,0:T(1,128)}', space=vmem, size = 0x9000, scoped, tag = 'internal scratch']
  #allocation2 [shape = 'f32[8,768]{1,0:T(8,128)}', space=vmem, size = 0x6000, scoped, tag = 'scratch operand']
  %s0 = inlined_call_operand.vmem [shape: f32[2,8,512], index: 0, kind: input, shape index: {}]
  %s1 = inlined_call_operand.vmem [shape: f32[1,512], index: 1, kind: input, shape index: {}]
  %s2 = inlined_call_operand.vmem [shape: f32[8,200], index: 2, kind: input, shape index: {}]
  %s3 = inlined_call_operand.vmem [shape: f32[8,1], index: 3, kind: input, shape index: {}]
  %s4 = inlined_call_operand.vmem [shape: f32[8,72], index: 4, kind: input, shape index: {}]
  %s5 = inlined_call_operand.vmem [shape: f32[8,1], index: 5, kind: input, shape index: {}]
  %s6 = inlined_call_operand.vmem [shape: f32[8,72], index: 6, kind: input, shape index: {}]
  %s7 = inlined_call_operand.vmem [shape: f32[8,1], index: 7, kind: input, shape index: {}]
  %s8 = inlined_call_operand.vmem [shape: f32[8,72], index: 8, kind: input, shape index: {}]
  %s9 = inlined_call_operand.vmem [shape: f32[8,1], index: 9, kind: input, shape index: {}]
  %s10 = inlined_call_operand.vmem [shape: f32[8,72], index: 10, kind: input, shape index: {}]
  %s11 = inlined_call_operand.vmem [shape: f32[8,1], index: 11, kind: input, shape index: {}]
  %s12 = inlined_call_operand.vmem [shape: f32[8,72], index: 12, kind: input, shape index: {}]
  %s13 = inlined_call_operand.vmem [shape: f32[8,1], index: 13, kind: input, shape index: {}]
  %s14 = inlined_call_operand.vmem [shape: f32[3,72], index: 14, kind: input, shape index: {}]
  %s15 = inlined_call_operand.vmem [shape: f32[3,1], index: 15, kind: input, shape index: {}]
  %s16 = inlined_call_operand.vmem [shape: f32[2,3,512], index: 16, kind: output, shape index: {}]
  %s17 = sld [smem:[#allocation0]]
  $region97: #{net_forward.1} parent=0
    _
  %s19 = ssub.s32 1, %s17
  %s20 = scalar_select 0, %s19, %s17
  loop: start=0, step=1, limit=4
  $region2: #{net_forward.1} parent=0 // loop_pre_header
    _
  $region3: #{net_forward.1} parent=0 // loop_header
    %s22 = sphi 0, %s26
    %p23 = scmp.ge.s32.totalorder %s22, 4
    %s32 = sphi 0, %s34
    %s35 = sphi 0, %s32
    %s36 = sphi 0, %s35
    %s52 = sphi 0, %s36
    %s56 = sphi 0, %s56
    %s58 = sphi 0, %s56
    %s59 = sphi 0, %s58
    %s73 = sphi 0, %s59
    %s77 = sphi 0, %s77
    %s79 = sphi 0, %s77
    %s80 = sphi 0, %s79
    %s94 = sphi 0, %s80
    %s98 = sphi 0, %s98
    %s100 = sphi 0, %s98
    %s101 = sphi 0, %s100
    %s115 = sphi 0, %s101
    %s119 = sphi 0, %s119
    %s121 = sphi 0, %s119
    %s122 = sphi 0, %s121
    %s136 = sphi 0, %s122
    %s140 = sphi 0, %s140
    %s142 = sphi 0, %s140
    %s143 = sphi 0, %s142
    %s157 = sphi 0, %s143
    %s161 = sphi 0, %s161
    %s163 = sphi 0, %s161
    %s164 = sphi 0, %s163
    %s178 = sphi 0, %s164
    %s182 = sphi 0, %s182
    %s184 = sphi 0, %s182
    %s185 = sphi 0, %s184
    %s199 = sphi 0, %s185
    %s203 = sphi 0, %s203
    %s205 = sphi 0, %s203
    %s206 = sphi 0, %s205
    %s220 = sphi 0, %s206
    %s224 = sphi 0, %s224
    %s226 = sphi 0, %s224
    %s227 = sphi 0, %s226
    %s241 = sphi 0, %s227
    %s245 = sphi 0, %s245
    %s247 = sphi 0, %s245
    %s248 = sphi 0, %s247
    %s262 = sphi 0, %s248
    %s266 = sphi 0, %s266
    %s268 = sphi 0, %s266
    %s269 = sphi 0, %s268
    %s283 = sphi 0, %s269
    %s287 = sphi 0, %s287
    %s289 = sphi 0, %s287
    %s290 = sphi 0, %s289
    %s304 = sphi 0, %s290
    %s308 = sphi 0, %s308
    %s310 = sphi 0, %s308
    %s311 = sphi 0, %s310
    %s325 = sphi 0, %s311
    %s329 = sphi 0, %s329
    %s331 = sphi 0, %s329
    %s332 = sphi 0, %s331
    %s346 = sphi 0, %s332
    %s350 = sphi 0, %s350
    %s352 = sphi 0, %s350
    %s353 = sphi 0, %s352
    %s367 = sphi 0, %s353
    %s373 = sphi 0, %s375
    %s376 = sphi 0, %s373
    %s377 = sphi 0, %s376
    %s393 = sphi 0, %s377
  $region4: #{net_forward.1} parent=0 // loop_header_branch
    %25 = sbr.rel (%p23) target = $region8
  $region5: #{net_forward.1} parent=0 // loop_body
    %s27 = ssub.s32 %s22, 1
    %s28 = ssub.s32 %s22, 2
    %s29 = sadd.s32 %s22, 1
    %s30 = ssub.s32 %s22, %s29
    %p31 = scmp.eq.s32.totalorder %s30, 0
    %s33 = sadd.s32 %s32, 1
    %s34 = scalar_select %p31, %s32, %s33
    %p37 = pneg %p31
    %p38 = scmp.eq.s32.totalorder %s22, 1
    %p39 = por %p37, %p38
    %p40 = scmp.ne.s32.totalorder %s32, %s35
    %p41 = scmp.eq.s32.totalorder %s22, 0
    %p42 = por %p40, %p41
    %p43 = scmp.ne.s32.totalorder %s32, %s35
    %p44 = scmp.eq.s32.totalorder %s27, 1
    %p45 = por %p43, %p44
    %p46 = scmp.ne.s32.totalorder %s35, %s36
    %p47 = scmp.eq.s32.totalorder %s27, 0
    %p48 = por %p46, %p47
    %p49 = scmp.ne.s32.totalorder %s35, %s36
    %p50 = scmp.eq.s32.totalorder %s28, 1
    %p51 = por %p49, %p50
    %p53 = scmp.ne.s32.totalorder %s36, %s52
    %p54 = scmp.eq.s32.totalorder %s28, 0
    %p55 = por %p53, %p54
    %s57 = sadd.s32 %s56, 1
    %p60 = scmp.eq.s32.totalorder %s22, 1
    %p61 = scmp.ne.s32.totalorder %s56, %s58
    %p62 = scmp.eq.s32.totalorder %s22, 0
    %p63 = por %p61, %p62
    %p64 = scmp.ne.s32.totalorder %s56, %s58
    %p65 = scmp.eq.s32.totalorder %s27, 1
    %p66 = por %p64, %p65
    %p67 = scmp.ne.s32.totalorder %s58, %s59
    %p68 = scmp.eq.s32.totalorder %s27, 0
    %p69 = por %p67, %p68
    %p70 = scmp.ne.s32.totalorder %s58, %s59
    %p71 = scmp.eq.s32.totalorder %s28, 1
    %p72 = por %p70, %p71
    %p74 = scmp.ne.s32.totalorder %s59, %s73
    %p75 = scmp.eq.s32.totalorder %s28, 0
    %p76 = por %p74, %p75
    %s78 = sadd.s32 %s77, 1
    %p81 = scmp.eq.s32.totalorder %s22, 1
    %p82 = scmp.ne.s32.totalorder %s77, %s79
    %p83 = scmp.eq.s32.totalorder %s22, 0
    %p84 = por %p82, %p83
    %p85 = scmp.ne.s32.totalorder %s77, %s79
    %p86 = scmp.eq.s32.totalorder %s27, 1
    %p87 = por %p85, %p86
    %p88 = scmp.ne.s32.totalorder %s79, %s80
    %p89 = scmp.eq.s32.totalorder %s27, 0
    %p90 = por %p88, %p89
    %p91 = scmp.ne.s32.totalorder %s79, %s80
    %p92 = scmp.eq.s32.totalorder %s28, 1
    %p93 = por %p91, %p92
    %p95 = scmp.ne.s32.totalorder %s80, %s94
    %p96 = scmp.eq.s32.totalorder %s28, 0
    %p97 = por %p95, %p96
    %s99 = sadd.s32 %s98, 1
    %p102 = scmp.eq.s32.totalorder %s22, 1
    %p103 = scmp.ne.s32.totalorder %s98, %s100
    %p104 = scmp.eq.s32.totalorder %s22, 0
    %p105 = por %p103, %p104
    %p106 = scmp.ne.s32.totalorder %s98, %s100
    %p107 = scmp.eq.s32.totalorder %s27, 1
    %p108 = por %p106, %p107
    %p109 = scmp.ne.s32.totalorder %s100, %s101
    %p110 = scmp.eq.s32.totalorder %s27, 0
    %p111 = por %p109, %p110
    %p112 = scmp.ne.s32.totalorder %s100, %s101
    %p113 = scmp.eq.s32.totalorder %s28, 1
    %p114 = por %p112, %p113
    %p116 = scmp.ne.s32.totalorder %s101, %s115
    %p117 = scmp.eq.s32.totalorder %s28, 0
    %p118 = por %p116, %p117
    %s120 = sadd.s32 %s119, 1
    %p123 = scmp.eq.s32.totalorder %s22, 1
    %p124 = scmp.ne.s32.totalorder %s119, %s121
    %p125 = scmp.eq.s32.totalorder %s22, 0
    %p126 = por %p124, %p125
    %p127 = scmp.ne.s32.totalorder %s119, %s121
    %p128 = scmp.eq.s32.totalorder %s27, 1
    %p129 = por %p127, %p128
    %p130 = scmp.ne.s32.totalorder %s121, %s122
    %p131 = scmp.eq.s32.totalorder %s27, 0
    %p132 = por %p130, %p131
    %p133 = scmp.ne.s32.totalorder %s121, %s122
    %p134 = scmp.eq.s32.totalorder %s28, 1
    %p135 = por %p133, %p134
    %p137 = scmp.ne.s32.totalorder %s122, %s136
    %p138 = scmp.eq.s32.totalorder %s28, 0
    %p139 = por %p137, %p138
    %s141 = sadd.s32 %s140, 1
    %p144 = scmp.eq.s32.totalorder %s22, 1
    %p145 = scmp.ne.s32.totalorder %s140, %s142
    %p146 = scmp.eq.s32.totalorder %s22, 0
    %p147 = por %p145, %p146
    %p148 = scmp.ne.s32.totalorder %s140, %s142
    %p149 = scmp.eq.s32.totalorder %s27, 1
    %p150 = por %p148, %p149
    %p151 = scmp.ne.s32.totalorder %s142, %s143
    %p152 = scmp.eq.s32.totalorder %s27, 0
    %p153 = por %p151, %p152
    %p154 = scmp.ne.s32.totalorder %s142, %s143
    %p155 = scmp.eq.s32.totalorder %s28, 1
    %p156 = por %p154, %p155
    %p158 = scmp.ne.s32.totalorder %s143, %s157
    %p159 = scmp.eq.s32.totalorder %s28, 0
    %p160 = por %p158, %p159
    %s162 = sadd.s32 %s161, 1
    %p165 = scmp.eq.s32.totalorder %s22, 1
    %p166 = scmp.ne.s32.totalorder %s161, %s163
    %p167 = scmp.eq.s32.totalorder %s22, 0
    %p168 = por %p166, %p167
    %p169 = scmp.ne.s32.totalorder %s161, %s163
    %p170 = scmp.eq.s32.totalorder %s27, 1
    %p171 = por %p169, %p170
    %p172 = scmp.ne.s32.totalorder %s163, %s164
    %p173 = scmp.eq.s32.totalorder %s27, 0
    %p174 = por %p172, %p173
    %p175 = scmp.ne.s32.totalorder %s163, %s164
    %p176 = scmp.eq.s32.totalorder %s28, 1
    %p177 = por %p175, %p176
    %p179 = scmp.ne.s32.totalorder %s164, %s178
    %p180 = scmp.eq.s32.totalorder %s28, 0
    %p181 = por %p179, %p180
    %s183 = sadd.s32 %s182, 1
    %p186 = scmp.eq.s32.totalorder %s22, 1
    %p187 = scmp.ne.s32.totalorder %s182, %s184
    %p188 = scmp.eq.s32.totalorder %s22, 0
    %p189 = por %p187, %p188
    %p190 = scmp.ne.s32.totalorder %s182, %s184
    %p191 = scmp.eq.s32.totalorder %s27, 1
    %p192 = por %p190, %p191
    %p193 = scmp.ne.s32.totalorder %s184, %s185
    %p194 = scmp.eq.s32.totalorder %s27, 0
    %p195 = por %p193, %p194
    %p196 = scmp.ne.s32.totalorder %s184, %s185
    %p197 = scmp.eq.s32.totalorder %s28, 1
    %p198 = por %p196, %p197
    %p200 = scmp.ne.s32.totalorder %s185, %s199
    %p201 = scmp.eq.s32.totalorder %s28, 0
    %p202 = por %p200, %p201
    %s204 = sadd.s32 %s203, 1
    %p207 = scmp.eq.s32.totalorder %s22, 1
    %p208 = scmp.ne.s32.totalorder %s203, %s205
    %p209 = scmp.eq.s32.totalorder %s22, 0
    %p210 = por %p208, %p209
    %p211 = scmp.ne.s32.totalorder %s203, %s205
    %p212 = scmp.eq.s32.totalorder %s27, 1
    %p213 = por %p211, %p212
    %p214 = scmp.ne.s32.totalorder %s205, %s206
    %p215 = scmp.eq.s32.totalorder %s27, 0
    %p216 = por %p214, %p215
    %p217 = scmp.ne.s32.totalorder %s205, %s206
    %p218 = scmp.eq.s32.totalorder %s28, 1
    %p219 = por %p217, %p218
    %p221 = scmp.ne.s32.totalorder %s206, %s220
    %p222 = scmp.eq.s32.totalorder %s28, 0
    %p223 = por %p221, %p222
    %s225 = sadd.s32 %s224, 1
    %p228 = scmp.eq.s32.totalorder %s22, 1
    %p229 = scmp.ne.s32.totalorder %s224, %s226
    %p230 = scmp.eq.s32.totalorder %s22, 0
    %p231 = por %p229, %p230
    %p232 = scmp.ne.s32.totalorder %s224, %s226
    %p233 = scmp.eq.s32.totalorder %s27, 1
    %p234 = por %p232, %p233
    %p235 = scmp.ne.s32.totalorder %s226, %s227
    %p236 = scmp.eq.s32.totalorder %s27, 0
    %p237 = por %p235, %p236
    %p238 = scmp.ne.s32.totalorder %s226, %s227
    %p239 = scmp.eq.s32.totalorder %s28, 1
    %p240 = por %p238, %p239
    %p242 = scmp.ne.s32.totalorder %s227, %s241
    %p243 = scmp.eq.s32.totalorder %s28, 0
    %p244 = por %p242, %p243
    %s246 = sadd.s32 %s245, 1
    %p249 = scmp.eq.s32.totalorder %s22, 1
    %p250 = scmp.ne.s32.totalorder %s245, %s247
    %p251 = scmp.eq.s32.totalorder %s22, 0
    %p252 = por %p250, %p251
    %p253 = scmp.ne.s32.totalorder %s245, %s247
    %p254 = scmp.eq.s32.totalorder %s27, 1
    %p255 = por %p253, %p254
    %p256 = scmp.ne.s32.totalorder %s247, %s248
    %p257 = scmp.eq.s32.totalorder %s27, 0
    %p258 = por %p256, %p257
    %p259 = scmp.ne.s32.totalorder %s247, %s248
    %p260 = scmp.eq.s32.totalorder %s28, 1
    %p261 = por %p259, %p260
    %p263 = scmp.ne.s32.totalorder %s248, %s262
    %p264 = scmp.eq.s32.totalorder %s28, 0
    %p265 = por %p263, %p264
    %s267 = sadd.s32 %s266, 1
    %p270 = scmp.eq.s32.totalorder %s22, 1
    %p271 = scmp.ne.s32.totalorder %s266, %s268
    %p272 = scmp.eq.s32.totalorder %s22, 0
    %p273 = por %p271, %p272
    %p274 = scmp.ne.s32.totalorder %s266, %s268
    %p275 = scmp.eq.s32.totalorder %s27, 1
    %p276 = por %p274, %p275
    %p277 = scmp.ne.s32.totalorder %s268, %s269
    %p278 = scmp.eq.s32.totalorder %s27, 0
    %p279 = por %p277, %p278
    %p280 = scmp.ne.s32.totalorder %s268, %s269
    %p281 = scmp.eq.s32.totalorder %s28, 1
    %p282 = por %p280, %p281
    %p284 = scmp.ne.s32.totalorder %s269, %s283
    %p285 = scmp.eq.s32.totalorder %s28, 0
    %p286 = por %p284, %p285
    %s288 = sadd.s32 %s287, 1
    %p291 = scmp.eq.s32.totalorder %s22, 1
    %p292 = scmp.ne.s32.totalorder %s287, %s289
    %p293 = scmp.eq.s32.totalorder %s22, 0
    %p294 = por %p292, %p293
    %p295 = scmp.ne.s32.totalorder %s287, %s289
    %p296 = scmp.eq.s32.totalorder %s27, 1
    %p297 = por %p295, %p296
    %p298 = scmp.ne.s32.totalorder %s289, %s290
    %p299 = scmp.eq.s32.totalorder %s27, 0
    %p300 = por %p298, %p299
    %p301 = scmp.ne.s32.totalorder %s289, %s290
    %p302 = scmp.eq.s32.totalorder %s28, 1
    %p303 = por %p301, %p302
    %p305 = scmp.ne.s32.totalorder %s290, %s304
    %p306 = scmp.eq.s32.totalorder %s28, 0
    %p307 = por %p305, %p306
    %s309 = sadd.s32 %s308, 1
    %p312 = scmp.eq.s32.totalorder %s22, 1
    %p313 = scmp.ne.s32.totalorder %s308, %s310
    %p314 = scmp.eq.s32.totalorder %s22, 0
    %p315 = por %p313, %p314
    %p316 = scmp.ne.s32.totalorder %s308, %s310
    %p317 = scmp.eq.s32.totalorder %s27, 1
    %p318 = por %p316, %p317
    %p319 = scmp.ne.s32.totalorder %s310, %s311
    %p320 = scmp.eq.s32.totalorder %s27, 0
    %p321 = por %p319, %p320
    %p322 = scmp.ne.s32.totalorder %s310, %s311
    %p323 = scmp.eq.s32.totalorder %s28, 1
    %p324 = por %p322, %p323
    %p326 = scmp.ne.s32.totalorder %s311, %s325
    %p327 = scmp.eq.s32.totalorder %s28, 0
    %p328 = por %p326, %p327
    %s330 = sadd.s32 %s329, 1
    %p333 = scmp.eq.s32.totalorder %s22, 1
    %p334 = scmp.ne.s32.totalorder %s329, %s331
    %p335 = scmp.eq.s32.totalorder %s22, 0
    %p336 = por %p334, %p335
    %p337 = scmp.ne.s32.totalorder %s329, %s331
    %p338 = scmp.eq.s32.totalorder %s27, 1
    %p339 = por %p337, %p338
    %p340 = scmp.ne.s32.totalorder %s331, %s332
    %p341 = scmp.eq.s32.totalorder %s27, 0
    %p342 = por %p340, %p341
    %p343 = scmp.ne.s32.totalorder %s331, %s332
    %p344 = scmp.eq.s32.totalorder %s28, 1
    %p345 = por %p343, %p344
    %p347 = scmp.ne.s32.totalorder %s332, %s346
    %p348 = scmp.eq.s32.totalorder %s28, 0
    %p349 = por %p347, %p348
    %s351 = sadd.s32 %s350, 1
    %p354 = scmp.eq.s32.totalorder %s22, 1
    %p355 = scmp.ne.s32.totalorder %s350, %s352
    %p356 = scmp.eq.s32.totalorder %s22, 0
    %p357 = por %p355, %p356
    %p358 = scmp.ne.s32.totalorder %s350, %s352
    %p359 = scmp.eq.s32.totalorder %s27, 1
    %p360 = por %p358, %p359
    %p361 = scmp.ne.s32.totalorder %s352, %s353
    %p362 = scmp.eq.s32.totalorder %s27, 0
    %p363 = por %p361, %p362
    %p364 = scmp.ne.s32.totalorder %s352, %s353
    %p365 = scmp.eq.s32.totalorder %s28, 1
    %p366 = por %p364, %p365
    %p368 = scmp.ne.s32.totalorder %s353, %s367
    %p369 = scmp.eq.s32.totalorder %s28, 0
    %p370 = por %p368, %p369
    %s371 = ssub.s32 %s22, %s29
    %p372 = scmp.eq.s32.totalorder %s371, 0
    %s374 = sadd.s32 %s373, 1
    %s375 = scalar_select %p372, %s373, %s374
    %p378 = pneg %p372
    %p379 = scmp.eq.s32.totalorder %s22, 1
    %p380 = por %p378, %p379
    %p381 = scmp.ne.s32.totalorder %s373, %s376
    %p382 = scmp.eq.s32.totalorder %s22, 0
    %p383 = por %p381, %p382
    %p384 = scmp.ne.s32.totalorder %s373, %s376
    %p385 = scmp.eq.s32.totalorder %s27, 1
    %p386 = por %p384, %p385
    %p387 = scmp.ne.s32.totalorder %s376, %s377
    %p388 = scmp.eq.s32.totalorder %s27, 0
    %p389 = por %p387, %p388
    %p390 = scmp.ne.s32.totalorder %s376, %s377
    %p391 = scmp.eq.s32.totalorder %s28, 1
    %p392 = por %p390, %p391
    %p394 = scmp.ne.s32.totalorder %s377, %s393
    %p395 = scmp.eq.s32.totalorder %s28, 0
    %p396 = por %p394, %p395
    %p397 = scmp.le.s32.totalorder 1, %s22
    %p398 = scmp.lt.s32.totalorder %s22, 3
    %p399 = pnand %p397, %p398
    %p400 = pneg %p399
    // Predicated region
    $region9: #{net_forward.1} parent=5 // pred_check
      _
    $region10: #{net_forward.1} parent=5 // pred_check_branch
      %402 = sbr.rel (%p399) target = $region12
    $region11: #{net_forward.1} parent=5 // pred_region
      %s403 = ssub.s32 %s22, 1
      // Predicated region
      $region13: #{net_forward.1} parent=11 // pred_check
        %p404 = pneg %p69
      $region14: #{net_forward.1} parent=11 // pred_check_branch
        %406 = sbr.rel (%p404) target = $region16
      $region15: #{net_forward.1} parent=11 // pred_region
        _
      $region16: #{net_forward.1} parent=11 // pred_fallthru
        _
      // Predicated region
      $region17: #{net_forward.1} parent=11 // pred_check
        %p407 = pneg %p90
      $region18: #{net_forward.1} parent=11 // pred_check_branch
        %409 = sbr.rel (%p407) target = $region20
      $region19: #{net_forward.1} parent=11 // pred_region
        _
      $region20: #{net_forward.1} parent=11 // pred_fallthru
        _
      // Predicated region
      $region21: #{net_forward.1} parent=11 // pred_check
        %p410 = pneg %p111
      $region22: #{net_forward.1} parent=11 // pred_check_branch
        %412 = sbr.rel (%p410) target = $region24
      $region23: #{net_forward.1} parent=11 // pred_region
        _
      $region24: #{net_forward.1} parent=11 // pred_fallthru
        _
      // Predicated region
      $region25: #{net_forward.1} parent=11 // pred_check
        %p413 = pneg %p132
      $region26: #{net_forward.1} parent=11 // pred_check_branch
        %415 = sbr.rel (%p413) target = $region28
      $region27: #{net_forward.1} parent=11 // pred_region
        _
      $region28: #{net_forward.1} parent=11 // pred_fallthru
        _
      // Predicated region
      $region29: #{net_forward.1} parent=11 // pred_check
        %p416 = pneg %p153
      $region30: #{net_forward.1} parent=11 // pred_check_branch
        %418 = sbr.rel (%p416) target = $region32
      $region31: #{net_forward.1} parent=11 // pred_region
        _
      $region32: #{net_forward.1} parent=11 // pred_fallthru
        _
      // Predicated region
      $region33: #{net_forward.1} parent=11 // pred_check
        %p419 = pneg %p174
      $region34: #{net_forward.1} parent=11 // pred_check_branch
        %421 = sbr.rel (%p419) target = $region36
      $region35: #{net_forward.1} parent=11 // pred_region
        _
      $region36: #{net_forward.1} parent=11 // pred_fallthru
        _
      // Predicated region
      $region37: #{net_forward.1} parent=11 // pred_check
        %p422 = pneg %p195
      $region38: #{net_forward.1} parent=11 // pred_check_branch
        %424 = sbr.rel (%p422) target = $region40
      $region39: #{net_forward.1} parent=11 // pred_region
        _
      $region40: #{net_forward.1} parent=11 // pred_fallthru
        _
      // Predicated region
      $region41: #{net_forward.1} parent=11 // pred_check
        %p425 = pneg %p216
      $region42: #{net_forward.1} parent=11 // pred_check_branch
        %427 = sbr.rel (%p425) target = $region44
      $region43: #{net_forward.1} parent=11 // pred_region
        _
      $region44: #{net_forward.1} parent=11 // pred_fallthru
        _
      // Predicated region
      $region45: #{net_forward.1} parent=11 // pred_check
        %p428 = pneg %p237
      $region46: #{net_forward.1} parent=11 // pred_check_branch
        %430 = sbr.rel (%p428) target = $region48
      $region47: #{net_forward.1} parent=11 // pred_region
        _
      $region48: #{net_forward.1} parent=11 // pred_fallthru
        _
      // Predicated region
      $region49: #{net_forward.1} parent=11 // pred_check
        %p431 = pneg %p258
      $region50: #{net_forward.1} parent=11 // pred_check_branch
        %433 = sbr.rel (%p431) target = $region52
      $region51: #{net_forward.1} parent=11 // pred_region
        _
      $region52: #{net_forward.1} parent=11 // pred_fallthru
        _
      // Predicated region
      $region53: #{net_forward.1} parent=11 // pred_check
        %p434 = pneg %p279
      $region54: #{net_forward.1} parent=11 // pred_check_branch
        %436 = sbr.rel (%p434) target = $region56
      $region55: #{net_forward.1} parent=11 // pred_region
        _
      $region56: #{net_forward.1} parent=11 // pred_fallthru
        _
      // Predicated region
      $region57: #{net_forward.1} parent=11 // pred_check
        %p437 = pneg %p300
      $region58: #{net_forward.1} parent=11 // pred_check_branch
        %439 = sbr.rel (%p437) target = $region60
      $region59: #{net_forward.1} parent=11 // pred_region
        _
      $region60: #{net_forward.1} parent=11 // pred_fallthru
        _
      // Predicated region
      $region61: #{net_forward.1} parent=11 // pred_check
        %p440 = pneg %p321
      $region62: #{net_forward.1} parent=11 // pred_check_branch
        %442 = sbr.rel (%p440) target = $region64
      $region63: #{net_forward.1} parent=11 // pred_region
        _
      $region64: #{net_forward.1} parent=11 // pred_fallthru
        _
      // Predicated region
      $region65: #{net_forward.1} parent=11 // pred_check
        %p443 = pneg %p342
      $region66: #{net_forward.1} parent=11 // pred_check_branch
        %445 = sbr.rel (%p443) target = $region68
      $region67: #{net_forward.1} parent=11 // pred_region
        _
      $region68: #{net_forward.1} parent=11 // pred_fallthru
        _
      // Predicated region
      $region69: #{net_forward.1} parent=11 // pred_check
        %p446 = pneg %p363
      $region70: #{net_forward.1} parent=11 // pred_check_branch
        %448 = sbr.rel (%p446) target = $region72
      $region71: #{net_forward.1} parent=11 // pred_region
        _
      $region72: #{net_forward.1} parent=11 // pred_fallthru
        _
    $region12: #{net_forward.1} parent=5 // pred_fallthru
      _
    %p449 = scmp.lt.s32.totalorder %s22, 2
    // Predicated region
    $region73: #{net_forward.1} parent=5 // pred_check
      %p450 = pneg %p449
    $region74: #{net_forward.1} parent=5 // pred_check_branch
      %452 = sbr.rel (%p450) target = $region76
    $region75: #{net_forward.1} parent=5 // pred_region
      // Predicated region
      $region77: #{net_forward.1} parent=75 // pred_check
        %p453 = pneg %p42
      $region78: #{net_forward.1} parent=75 // pred_check_branch
        %455 = sbr.rel (%p453) target = $region80
      $region79: #{net_forward.1} parent=75 // pred_region
        %p456 = scmp.lt.s32.totalorder %s22, 1
        %s457 = scalar_select %p456, %s22, 1
        %s458 = smul.addr %s457, 4
        %s459 = smul.addr %s458, 8
        %s460 = scalar_lea.vmem %s0, %s459
      $region80: #{net_forward.1} parent=75 // pred_fallthru
        _
    $region76: #{net_forward.1} parent=5 // pred_fallthru
      _
    %p461 = scmp.le.s32.totalorder 1, %s22
    %p462 = scmp.lt.s32.totalorder %s22, 3
    %p463 = pnand %p461, %p462
    %p464 = pneg %p463
    // Predicated region
    $region81: #{net_forward.1} parent=5 // pred_check
      _
    $region82: #{net_forward.1} parent=5 // pred_check_branch
      %466 = sbr.rel (%p463) target = $region84
    $region83: #{net_forward.1} parent=5 // pred_region
      %s467 = ssub.s32 %s22, 1
      %p468 = scmp.lt.s32.totalorder %s27, 1
      %s469 = scalar_select %p468, %s27, 1
      %s470 = smul.addr %s469, 4
      %s471 = smul.addr %s470, 8
      %s472 = scalar_lea.vmem %s0, %s471
      %p473 = pneg %p48
      %p474 = pneg %p45
      %p475 = pneg %p69
      %p476 = pneg %p66
      %p477 = pneg %p90
      %p478 = pneg %p87
      %p479 = pneg %p111
      %p480 = pneg %p108
      %p481 = pneg %p132
      %p482 = pneg %p129
      %p483 = pneg %p153
      %p484 = pneg %p150
      %p485 = pneg %p174
      %p486 = pneg %p171
      %p487 = pneg %p195
      %p488 = pneg %p192
      %p489 = pneg %p216
      %p490 = pneg %p213
      %p491 = pneg %p237
      %p492 = pneg %p234
      %p493 = pneg %p258
      %p494 = pneg %p255
      %p495 = pneg %p279
      %p496 = pneg %p276
      %p497 = pneg %p300
      %p498 = pneg %p297
      %p499 = pneg %p321
      %p500 = pneg %p318
      %p501 = pneg %p342
      %p502 = pneg %p339
      %p503 = pneg %p363
      %p504 = pneg %p360
      %p505 = pneg %p389
      %p506 = pneg %p386
      %p507 = scmp.lt.s32.totalorder %s27, 1
      %s508 = scalar_select %p507, %s27, 1
      %s509 = smul.addr %s508, 4
      %s510 = smul.addr %s509, 4
      %s511 = scalar_lea.vmem %s16, %s510
      %p512 = scmp.lt.s32.totalorder %s27, 1
      %s513 = scalar_select %p512, %s27, 1
      %s514 = smul.addr %s513, 4
      %s515 = smul.addr %s514, 8
      %s516 = scalar_lea.vmem %s0, %s515
      %p517 = scmp.lt.s32.totalorder %s27, 1
      %s518 = scalar_select %p517, %s27, 1
      %s519 = smul.addr %s518, 4
      %s520 = smul.addr %s519, 4
      %s521 = scalar_lea.vmem %s16, %s520
      %522 = vst [vmem:[#allocation2] sm:$0xff] 0.0
      %523 = vst [vmem:[#allocation2 + $0x8] sm:$0xff] 0.0
      %524 = vst [vmem:[#allocation2 + $0x10] sm:$0xff] 0.0
      %525 = vst [vmem:[#allocation2 + $0x18] sm:$0xff] 0.0
      %526 = vst [vmem:[#allocation2 + $0x20] sm:$0xff] 0.0
      %527 = vst [vmem:[#allocation2 + $0x28] sm:$0xff] 0.0
      %v528 = vld [vmem:[%s1] sm:$0xf]
      %v529 = vld [vmem:[%s516] sm:$0xff]
      %v530 = vld [vmem:[%s516 + $0x8] sm:$0xff]
      %v531 = vld [vmem:[%s516 + $0x10] sm:$0xff]
      %v532 = vld [vmem:[%s516 + $0x18] sm:$0xff]
      %533 = vst [vmem:[#allocation2 + $0x8] sm:$0xff] %v529
      %534 = vst [vmem:[#allocation2 + $0x10] sm:$0xff] %v530
      %535 = vst [vmem:[#allocation2 + $0x18] sm:$0xff] %v531
      %536 = vst [vmem:[#allocation2 + $0x20] sm:$0xff] %v532
      %v537 = vld [vmem:[#allocation2] sm:$0xff]
      %v538 = vld [vmem:[#allocation2 + $0x8] sm:$0xff]
      %v539 = vld [vmem:[#allocation2 + $0x10] sm:$0xff]
      %v540 = vld [vmem:[#allocation2 + $0x18] sm:$0xff]
      %v541 = vld [vmem:[#allocation2 + $0x20] sm:$0xff]
      %v542 = vld [vmem:[#allocation2 + $0x8] sm:$0xff]
      %v543 = vld [vmem:[#allocation2 + $0x10] sm:$0xff]
      %v544 = vld [vmem:[#allocation2 + $0x18] sm:$0xff]
      %v545 = vld [vmem:[#allocation2 + $0x20] sm:$0xff]
      %v546 = vld [vmem:[#allocation2 + $0x28] sm:$0xff]
      %552 = vrot.lane.b32.xlu0 %v537, 127
      %v553 = vpop.permute.xlu0 %552
      %554 = vrot.lane.b32.xlu0 %v538, 127
      %v555 = vpop.permute.xlu0 %554
      %556 = vrot.lane.b32.xlu0 %v539, 127
      %v557 = vpop.permute.xlu0 %556
      %558 = vrot.lane.b32.xlu0 %v540, 127
      %v559 = vpop.permute.xlu0 %558
      %560 = vrot.lane.b32.xlu0 %v541, 127
      %v561 = vpop.permute.xlu0 %560
      %vm562 = vcmask 1039360
      %v563 = vsel %vm562, %v553, %v555
      %v564 = vsel %vm562, %v555, %v557
      %v565 = vsel %vm562, %v557, %v559
      %v566 = vsel %vm562, %v559, %v561
      %567 = vrot.lane.b32.xlu0 %v537, 126
      %v568 = vpop.permute.xlu0 %567
      %569 = vrot.lane.b32.xlu0 %v538, 126
      %v570 = vpop.permute.xlu0 %569
      %571 = vrot.lane.b32.xlu0 %v539, 126
      %v572 = vpop.permute.xlu0 %571
      %573 = vrot.lane.b32.xlu0 %v540, 126
      %v574 = vpop.permute.xlu0 %573
      %575 = vrot.lane.b32.xlu0 %v541, 126
      %v576 = vpop.permute.xlu0 %575
      %vm577 = vcmask 1031168
      %v578 = vsel %vm577, %v568, %v570
      %v579 = vsel %vm577, %v570, %v572
      %v580 = vsel %vm577, %v572, %v574
      %v581 = vsel %vm577, %v574, %v576
      %582 = vrot.lane.b32.xlu0 %v537, 125
      %v583 = vpop.permute.xlu0 %582
      %584 = vrot.lane.b32.xlu0 %v538, 125
      %v585 = vpop.permute.xlu0 %584
      %586 = vrot.lane.b32.xlu0 %v539, 125
      %v587 = vpop.permute.xlu0 %586
      %588 = vrot.lane.b32.xlu0 %v540, 125
      %v589 = vpop.permute.xlu0 %588
      %590 = vrot.lane.b32.xlu0 %v541, 125
      %v591 = vpop.permute.xlu0 %590
      %vm592 = vcmask 1022976
      %v593 = vsel %vm592, %v583, %v585
      %v594 = vsel %vm592, %v585, %v587
      %v595 = vsel %vm592, %v587, %v589
      %v596 = vsel %vm592, %v589, %v591
      %597 = vrot.lane.b32.xlu0 %v537, 124
      %v598 = vpop.permute.xlu0 %597
      %599 = vrot.lane.b32.xlu0 %v538, 124
      %v600 = vpop.permute.xlu0 %599
      %601 = vrot.lane.b32.xlu0 %v539, 124
      %v602 = vpop.permute.xlu0 %601
      %603 = vrot.lane.b32.xlu0 %v540, 124
      %v604 = vpop.permute.xlu0 %603
      %605 = vrot.lane.b32.xlu0 %v541, 124
      %v606 = vpop.permute.xlu0 %605
      %vm607 = vcmask 1014784
      %v608 = vsel %vm607, %v598, %v600
      %v609 = vsel %vm607, %v600, %v602
      %v610 = vsel %vm607, %v602, %v604
      %v611 = vsel %vm607, %v604, %v606
      %612 = vrot.lane.b32.xlu0 %v537, 108
      %v613 = vpop.permute.xlu0 %612
      %614 = vrot.lane.b32.xlu0 %v538, 108
      %v615 = vpop.permute.xlu0 %614
      %616 = vrot.lane.b32.xlu0 %v539, 108
      %v617 = vpop.permute.xlu0 %616
      %618 = vrot.lane.b32.xlu0 %v540, 108
      %v619 = vpop.permute.xlu0 %618
      %620 = vrot.lane.b32.xlu0 %v541, 108
      %v621 = vpop.permute.xlu0 %620
      %vm622 = vcmask 883712
      %v623 = vsel %vm622, %v613, %v615
      %v624 = vsel %vm622, %v615, %v617
      %v625 = vsel %vm622, %v617, %v619
      %v626 = vsel %vm622, %v619, %v621
      %627 = vrot.lane.b32.xlu0 %v537, 107
      %v628 = vpop.permute.xlu0 %627
      %629 = vrot.lane.b32.xlu0 %v538, 107
      %v630 = vpop.permute.xlu0 %629
      %631 = vrot.lane.b32.xlu0 %v539, 107
      %v632 = vpop.permute.xlu0 %631
      %633 = vrot.lane.b32.xlu0 %v540, 107
      %v634 = vpop.permute.xlu0 %633
      %635 = vrot.lane.b32.xlu0 %v541, 107
      %v636 = vpop.permute.xlu0 %635
      %vm637 = vcmask 875520
      %v638 = vsel %vm637, %v628, %v630
      %v639 = vsel %vm637, %v630, %v632
      %v640 = vsel %vm637, %v632, %v634
      %v641 = vsel %vm637, %v634, %v636
      %642 = vrot.lane.b32.xlu0 %v537, 106
      %v643 = vpop.permute.xlu0 %642
      %644 = vrot.lane.b32.xlu0 %v538, 106
      %v645 = vpop.permute.xlu0 %644
      %646 = vrot.lane.b32.xlu0 %v539, 106
      %v647 = vpop.permute.xlu0 %646
      %648 = vrot.lane.b32.xlu0 %v540, 106
      %v649 = vpop.permute.xlu0 %648
      %650 = vrot.lane.b32.xlu0 %v541, 106
      %v651 = vpop.permute.xlu0 %650
      %vm652 = vcmask 867328
      %v653 = vsel %vm652, %v643, %v645
      %v654 = vsel %vm652, %v645, %v647
      %v655 = vsel %vm652, %v647, %v649
      %v656 = vsel %vm652, %v649, %v651
      %657 = vrot.lane.b32.xlu0 %v537, 105
      %v658 = vpop.permute.xlu0 %657
      %659 = vrot.lane.b32.xlu0 %v538, 105
      %v660 = vpop.permute.xlu0 %659
      %661 = vrot.lane.b32.xlu0 %v539, 105
      %v662 = vpop.permute.xlu0 %661
      %663 = vrot.lane.b32.xlu0 %v540, 105
      %v664 = vpop.permute.xlu0 %663
      %665 = vrot.lane.b32.xlu0 %v541, 105
      %v666 = vpop.permute.xlu0 %665
      %vm667 = vcmask 859136
      %v668 = vsel %vm667, %v658, %v660
      %v669 = vsel %vm667, %v660, %v662
      %v670 = vsel %vm667, %v662, %v664
      %v671 = vsel %vm667, %v664, %v666
      %672 = vrot.lane.b32.xlu0 %v537, 104
      %v673 = vpop.permute.xlu0 %672
      %674 = vrot.lane.b32.xlu0 %v538, 104
      %v675 = vpop.permute.xlu0 %674
      %676 = vrot.lane.b32.xlu0 %v539, 104
      %v677 = vpop.permute.xlu0 %676
      %678 = vrot.lane.b32.xlu0 %v540, 104
      %v679 = vpop.permute.xlu0 %678
      %680 = vrot.lane.b32.xlu0 %v541, 104
      %v681 = vpop.permute.xlu0 %680
      %vm682 = vcmask 850944
      %v683 = vsel %vm682, %v673, %v675
      %v684 = vsel %vm682, %v675, %v677
      %v685 = vsel %vm682, %v677, %v679
      %v686 = vsel %vm682, %v679, %v681
      %687 = vrot.lane.b32.xlu0 %v537, 88
      %v688 = vpop.permute.xlu0 %687
      %689 = vrot.lane.b32.xlu0 %v538, 88
      %v690 = vpop.permute.xlu0 %689
      %691 = vrot.lane.b32.xlu0 %v539, 88
      %v692 = vpop.permute.xlu0 %691
      %693 = vrot.lane.b32.xlu0 %v540, 88
      %v694 = vpop.permute.xlu0 %693
      %695 = vrot.lane.b32.xlu0 %v541, 88
      %v696 = vpop.permute.xlu0 %695
      %vm697 = vcmask 719872
      %v698 = vsel %vm697, %v688, %v690
      %v699 = vsel %vm697, %v690, %v692
      %v700 = vsel %vm697, %v692, %v694
      %v701 = vsel %vm697, %v694, %v696
      %702 = vrot.lane.b32.xlu0 %v537, 87
      %v703 = vpop.permute.xlu0 %702
      %704 = vrot.lane.b32.xlu0 %v538, 87
      %v705 = vpop.permute.xlu0 %704
      %706 = vrot.lane.b32.xlu0 %v539, 87
      %v707 = vpop.permute.xlu0 %706
      %708 = vrot.lane.b32.xlu0 %v540, 87
      %v709 = vpop.permute.xlu0 %708
      %710 = vrot.lane.b32.xlu0 %v541, 87
      %v711 = vpop.permute.xlu0 %710
      %vm712 = vcmask 711680
      %v713 = vsel %vm712, %v703, %v705
      %v714 = vsel %vm712, %v705, %v707
      %v715 = vsel %vm712, %v707, %v709
      %v716 = vsel %vm712, %v709, %v711
      %717 = vrot.lane.b32.xlu0 %v538, 86
      %v718 = vpop.permute.xlu0 %717
      %719 = vrot.lane.b32.xlu0 %v539, 86
      %v720 = vpop.permute.xlu0 %719
      %721 = vrot.lane.b32.xlu0 %v540, 86
      %v722 = vpop.permute.xlu0 %721
      %723 = vrot.lane.b32.xlu0 %v541, 86
      %v724 = vpop.permute.xlu0 %723
      %vm725 = vcmask 703488
      %v726 = vsel %vm725, %v718, %v720
      %v727 = vsel %vm725, %v720, %v722
      %v728 = vsel %vm725, %v722, %v724
      %734 = vrot.lane.b32.xlu0 %v542, 85
      %v735 = vpop.permute.xlu0 %734
      %736 = vrot.lane.b32.xlu0 %v543, 85
      %v737 = vpop.permute.xlu0 %736
      %738 = vrot.lane.b32.xlu0 %v544, 85
      %v739 = vpop.permute.xlu0 %738
      %740 = vrot.lane.b32.xlu0 %v545, 85
      %v741 = vpop.permute.xlu0 %740
      %742 = vrot.lane.b32.xlu0 %v546, 85
      %v743 = vpop.permute.xlu0 %742
      %vm744 = vcmask 695296
      %v745 = vsel %vm744, %v735, %v737
      %v746 = vsel %vm744, %v737, %v739
      %v747 = vsel %vm744, %v739, %v741
      %v748 = vsel %vm744, %v741, %v743
      %749 = vrot.lane.b32.xlu0 %v542, 84
      %v750 = vpop.permute.xlu0 %749
      %751 = vrot.lane.b32.xlu0 %v543, 84
      %v752 = vpop.permute.xlu0 %751
      %753 = vrot.lane.b32.xlu0 %v544, 84
      %v754 = vpop.permute.xlu0 %753
      %755 = vrot.lane.b32.xlu0 %v545, 84
      %v756 = vpop.permute.xlu0 %755
      %757 = vrot.lane.b32.xlu0 %v546, 84
      %v758 = vpop.permute.xlu0 %757
      %vm759 = vcmask 687104
      %v760 = vsel %vm759, %v750, %v752
      %v761 = vsel %vm759, %v752, %v754
      %v762 = vsel %vm759, %v754, %v756
      %v763 = vsel %vm759, %v756, %v758
      %764 = vrot.lane.b32.xlu0 %v542, 68
      %v765 = vpop.permute.xlu0 %764
      %766 = vrot.lane.b32.xlu0 %v543, 68
      %v767 = vpop.permute.xlu0 %766
      %768 = vrot.lane.b32.xlu0 %v544, 68
      %v769 = vpop.permute.xlu0 %768
      %770 = vrot.lane.b32.xlu0 %v545, 68
      %v771 = vpop.permute.xlu0 %770
      %772 = vrot.lane.b32.xlu0 %v546, 68
      %v773 = vpop.permute.xlu0 %772
      %vm774 = vcmask 556032
      %v775 = vsel %vm774, %v765, %v767
      %v776 = vsel %vm774, %v767, %v769
      %v777 = vsel %vm774, %v769, %v771
      %v778 = vsel %vm774, %v771, %v773
      %779 = vrot.lane.b32.xlu0 %v542, 127
      %v780 = vpop.permute.xlu0 %779
      %781 = vrot.lane.b32.xlu0 %v543, 127
      %v782 = vpop.permute.xlu0 %781
      %783 = vrot.lane.b32.xlu0 %v544, 127
      %v784 = vpop.permute.xlu0 %783
      %785 = vrot.lane.b32.xlu0 %v545, 127
      %v786 = vpop.permute.xlu0 %785
      %787 = vrot.lane.b32.xlu0 %v546, 127
      %v788 = vpop.permute.xlu0 %787
      %v789 = vsel %vm562, %v780, %v782
      %v790 = vsel %vm562, %v782, %v784
      %v791 = vsel %vm562, %v784, %v786
      %v792 = vsel %vm562, %v786, %v788
      %793 = vrot.lane.b32.xlu0 %v542, 126
      %v794 = vpop.permute.xlu0 %793
      %795 = vrot.lane.b32.xlu0 %v543, 126
      %v796 = vpop.permute.xlu0 %795
      %797 = vrot.lane.b32.xlu0 %v544, 126
      %v798 = vpop.permute.xlu0 %797
      %799 = vrot.lane.b32.xlu0 %v545, 126
      %v800 = vpop.permute.xlu0 %799
      %801 = vrot.lane.b32.xlu0 %v546, 126
      %v802 = vpop.permute.xlu0 %801
      %v803 = vsel %vm577, %v794, %v796
      %v804 = vsel %vm577, %v796, %v798
      %v805 = vsel %vm577, %v798, %v800
      %v806 = vsel %vm577, %v800, %v802
      %807 = vrot.lane.b32.xlu0 %v542, 125
      %v808 = vpop.permute.xlu0 %807
      %809 = vrot.lane.b32.xlu0 %v543, 125
      %v810 = vpop.permute.xlu0 %809
      %811 = vrot.lane.b32.xlu0 %v544, 125
      %v812 = vpop.permute.xlu0 %811
      %813 = vrot.lane.b32.xlu0 %v545, 125
      %v814 = vpop.permute.xlu0 %813
      %815 = vrot.lane.b32.xlu0 %v546, 125
      %v816 = vpop.permute.xlu0 %815
      %v817 = vsel %vm592, %v808, %v810
      %v818 = vsel %vm592, %v810, %v812
      %v819 = vsel %vm592, %v812, %v814
      %v820 = vsel %vm592, %v814, %v816
      %821 = vrot.lane.b32.xlu0 %v542, 109
      %v822 = vpop.permute.xlu0 %821
      %823 = vrot.lane.b32.xlu0 %v543, 109
      %v824 = vpop.permute.xlu0 %823
      %825 = vrot.lane.b32.xlu0 %v544, 109
      %v826 = vpop.permute.xlu0 %825
      %827 = vrot.lane.b32.xlu0 %v545, 109
      %v828 = vpop.permute.xlu0 %827
      %829 = vrot.lane.b32.xlu0 %v546, 109
      %v830 = vpop.permute.xlu0 %829
      %vm831 = vcmask 891904
      %v832 = vsel %vm831, %v822, %v824
      %v833 = vsel %vm831, %v824, %v826
      %v834 = vsel %vm831, %v826, %v828
      %v835 = vsel %vm831, %v828, %v830
      %836 = vrot.lane.b32.xlu0 %v542, 108
      %v837 = vpop.permute.xlu0 %836
      %838 = vrot.lane.b32.xlu0 %v543, 108
      %v839 = vpop.permute.xlu0 %838
      %840 = vrot.lane.b32.xlu0 %v544, 108
      %v841 = vpop.permute.xlu0 %840
      %842 = vrot.lane.b32.xlu0 %v545, 108
      %v843 = vpop.permute.xlu0 %842
      %844 = vrot.lane.b32.xlu0 %v546, 108
      %v845 = vpop.permute.xlu0 %844
      %v846 = vsel %vm622, %v837, %v839
      %v847 = vsel %vm622, %v839, %v841
      %v848 = vsel %vm622, %v841, %v843
      %v849 = vsel %vm622, %v843, %v845
      %850 = vrot.lane.b32.xlu0 %v542, 107
      %v851 = vpop.permute.xlu0 %850
      %852 = vrot.lane.b32.xlu0 %v543, 107
      %v853 = vpop.permute.xlu0 %852
      %854 = vrot.lane.b32.xlu0 %v544, 107
      %v855 = vpop.permute.xlu0 %854
      %856 = vrot.lane.b32.xlu0 %v545, 107
      %v857 = vpop.permute.xlu0 %856
      %858 = vrot.lane.b32.xlu0 %v546, 107
      %v859 = vpop.permute.xlu0 %858
      %v860 = vsel %vm637, %v851, %v853
      %v861 = vsel %vm637, %v853, %v855
      %v862 = vsel %vm637, %v855, %v857
      %v863 = vsel %vm637, %v857, %v859
      %864 = vrot.lane.b32.xlu0 %v542, 106
      %v865 = vpop.permute.xlu0 %864
      %866 = vrot.lane.b32.xlu0 %v543, 106
      %v867 = vpop.permute.xlu0 %866
      %868 = vrot.lane.b32.xlu0 %v544, 106
      %v869 = vpop.permute.xlu0 %868
      %870 = vrot.lane.b32.xlu0 %v545, 106
      %v871 = vpop.permute.xlu0 %870
      %872 = vrot.lane.b32.xlu0 %v546, 106
      %v873 = vpop.permute.xlu0 %872
      %v874 = vsel %vm652, %v865, %v867
      %v875 = vsel %vm652, %v867, %v869
      %v876 = vsel %vm652, %v869, %v871
      %v877 = vsel %vm652, %v871, %v873
      %878 = vrot.lane.b32.xlu0 %v542, 105
      %v879 = vpop.permute.xlu0 %878
      %880 = vrot.lane.b32.xlu0 %v543, 105
      %v881 = vpop.permute.xlu0 %880
      %882 = vrot.lane.b32.xlu0 %v544, 105
      %v883 = vpop.permute.xlu0 %882
      %884 = vrot.lane.b32.xlu0 %v545, 105
      %v885 = vpop.permute.xlu0 %884
      %886 = vrot.lane.b32.xlu0 %v546, 105
      %v887 = vpop.permute.xlu0 %886
      %v888 = vsel %vm667, %v879, %v881
      %v889 = vsel %vm667, %v881, %v883
      %v890 = vsel %vm667, %v883, %v885
      %v891 = vsel %vm667, %v885, %v887
      %892 = vrot.lane.b32.xlu0 %v542, 67
      %v893 = vpop.permute.xlu0 %892
      %894 = vrot.lane.b32.xlu0 %v543, 67
      %v895 = vpop.permute.xlu0 %894
      %896 = vrot.lane.b32.xlu0 %v544, 67
      %v897 = vpop.permute.xlu0 %896
      %898 = vrot.lane.b32.xlu0 %v545, 67
      %v899 = vpop.permute.xlu0 %898
      %900 = vrot.lane.b32.xlu0 %v546, 67
      %v901 = vpop.permute.xlu0 %900
      %902 = vrot.lane.b32.xlu0 %v789, 67
      %v903 = vpop.permute.xlu0 %902
      %904 = vrot.lane.b32.xlu0 %v790, 67
      %v905 = vpop.permute.xlu0 %904
      %906 = vrot.lane.b32.xlu0 %v791, 67
      %v907 = vpop.permute.xlu0 %906
      %908 = vrot.lane.b32.xlu0 %v792, 67
      %v909 = vpop.permute.xlu0 %908
      %910 = vrot.lane.b32.xlu0 %v788, 67
      %v911 = vpop.permute.xlu0 %910
      %912 = vrot.lane.b32.xlu0 %v803, 67
      %v913 = vpop.permute.xlu0 %912
      %914 = vrot.lane.b32.xlu0 %v804, 67
      %v915 = vpop.permute.xlu0 %914
      %916 = vrot.lane.b32.xlu0 %v805, 67
      %v917 = vpop.permute.xlu0 %916
      %918 = vrot.lane.b32.xlu0 %v806, 67
      %v919 = vpop.permute.xlu0 %918
      %920 = vrot.lane.b32.xlu0 %v802, 67
      %v921 = vpop.permute.xlu0 %920
      %922 = vrot.lane.b32.xlu0 %v817, 67
      %v923 = vpop.permute.xlu0 %922
      %924 = vrot.lane.b32.xlu0 %v818, 67
      %v925 = vpop.permute.xlu0 %924
      %926 = vrot.lane.b32.xlu0 %v819, 67
      %v927 = vpop.permute.xlu0 %926
      %928 = vrot.lane.b32.xlu0 %v820, 67
      %v929 = vpop.permute.xlu0 %928
      %930 = vrot.lane.b32.xlu0 %v816, 67
      %v931 = vpop.permute.xlu0 %930
      %932 = vrot.lane.b32.xlu0 %v832, 67
      %v933 = vpop.permute.xlu0 %932
      %934 = vrot.lane.b32.xlu0 %v833, 67
      %v935 = vpop.permute.xlu0 %934
      %936 = vrot.lane.b32.xlu0 %v834, 67
      %v937 = vpop.permute.xlu0 %936
      %938 = vrot.lane.b32.xlu0 %v835, 67
      %v939 = vpop.permute.xlu0 %938
      %940 = vrot.lane.b32.xlu0 %v830, 67
      %v941 = vpop.permute.xlu0 %940
      %942 = vrot.lane.b32.xlu0 %v846, 67
      %v943 = vpop.permute.xlu0 %942
      %944 = vrot.lane.b32.xlu0 %v847, 67
      %v945 = vpop.permute.xlu0 %944
      %946 = vrot.lane.b32.xlu0 %v848, 67
      %v947 = vpop.permute.xlu0 %946
      %948 = vrot.lane.b32.xlu0 %v849, 67
      %v949 = vpop.permute.xlu0 %948
      %950 = vrot.lane.b32.xlu0 %v845, 67
      %v951 = vpop.permute.xlu0 %950
      %952 = vrot.lane.b32.xlu0 %v860, 67
      %v953 = vpop.permute.xlu0 %952
      %954 = vrot.lane.b32.xlu0 %v861, 67
      %v955 = vpop.permute.xlu0 %954
      %956 = vrot.lane.b32.xlu0 %v862, 67
      %v957 = vpop.permute.xlu0 %956
      %958 = vrot.lane.b32.xlu0 %v863, 67
      %v959 = vpop.permute.xlu0 %958
      %960 = vrot.lane.b32.xlu0 %v859, 67
      %v961 = vpop.permute.xlu0 %960
      %962 = vrot.lane.b32.xlu0 %v874, 67
      %v963 = vpop.permute.xlu0 %962
      %964 = vrot.lane.b32.xlu0 %v875, 67
      %v965 = vpop.permute.xlu0 %964
      %966 = vrot.lane.b32.xlu0 %v876, 67
      %v967 = vpop.permute.xlu0 %966
      %968 = vrot.lane.b32.xlu0 %v877, 67
      %v969 = vpop.permute.xlu0 %968
      %970 = vrot.lane.b32.xlu0 %v873, 67
      %v971 = vpop.permute.xlu0 %970
      %972 = vrot.lane.b32.xlu0 %v888, 67
      %v973 = vpop.permute.xlu0 %972
      %974 = vrot.lane.b32.xlu0 %v889, 67
      %v975 = vpop.permute.xlu0 %974
      %976 = vrot.lane.b32.xlu0 %v890, 67
      %v977 = vpop.permute.xlu0 %976
      %978 = vrot.lane.b32.xlu0 %v891, 67
      %v979 = vpop.permute.xlu0 %978
      %980 = vrot.lane.b32.xlu0 %v887, 67
      %v981 = vpop.permute.xlu0 %980
      %vm982 = vcmask 547840
      %v983 = vsel %vm982, %v893, %v895
      %v984 = vsel %vm982, %v895, %v897
      %v985 = vsel %vm982, %v897, %v899
      %v986 = vsel %vm982, %v899, %v901
      %v987 = vsel %vm982, %v903, %v905
      %v988 = vsel %vm982, %v905, %v907
      %v989 = vsel %vm982, %v907, %v909
      %v990 = vsel %vm982, %v909, %v911
      %v991 = vsel %vm982, %v913, %v915
      %v992 = vsel %vm982, %v915, %v917
      %v993 = vsel %vm982, %v917, %v919
      %v994 = vsel %vm982, %v919, %v921
      %v995 = vsel %vm982, %v923, %v925
      %v996 = vsel %vm982, %v925, %v927
      %v997 = vsel %vm982, %v927, %v929
      %v998 = vsel %vm982, %v929, %v931
      %v999 = vsel %vm982, %v933, %v935
      %v1000 = vsel %vm982, %v935, %v937
      %v1001 = vsel %vm982, %v937, %v939
      %v1002 = vsel %vm982, %v939, %v941
      %v1003 = vsel %vm982, %v943, %v945
      %v1004 = vsel %vm982, %v945, %v947
      %v1005 = vsel %vm982, %v947, %v949
      %v1006 = vsel %vm982, %v949, %v951
      %v1007 = vsel %vm982, %v953, %v955
      %v1008 = vsel %vm982, %v955, %v957
      %v1009 = vsel %vm982, %v957, %v959
      %v1010 = vsel %vm982, %v959, %v961
      %v1011 = vsel %vm982, %v963, %v965
      %v1012 = vsel %vm982, %v965, %v967
      %v1013 = vsel %vm982, %v967, %v969
      %v1014 = vsel %vm982, %v969, %v971
      %v1015 = vsel %vm982, %v973, %v975
      %v1016 = vsel %vm982, %v975, %v977
      %v1017 = vsel %vm982, %v977, %v979
      %v1018 = vsel %vm982, %v979, %v981
      %v1019 = vld [vmem:[%s2] sm:$0xff]
      %v1020 = vld [vmem:[%s2 + $0x8] sm:$0xff]
      %v1021 = vld [vmem:[%s3] sm:$0xff]
      %1023 = vset.pattern.permute.xlu0 0
      %1024 = vperm.xlu0 %1023, %v1021
      %v1025 = vpop.permute.xlu0 %1024
      %1027 = vrot.lane.b32.xlu0 %v537, 42
      %v1028 = vpop.permute.xlu0 %1027
      %1029 = vrot.lane.b32.xlu0 %v538, 42
      %v1030 = vpop.permute.xlu0 %1029
      %1031 = vrot.lane.b32.xlu0 %v539, 42
      %v1032 = vpop.permute.xlu0 %1031
      %1033 = vrot.lane.b32.xlu0 %v540, 42
      %v1034 = vpop.permute.xlu0 %1033
      %1035 = vrot.lane.b32.xlu0 %v541, 42
      %v1036 = vpop.permute.xlu0 %1035
      %1037 = vrot.lane.b32.xlu0 %v563, 42
      %v1038 = vpop.permute.xlu0 %1037
      %1039 = vrot.lane.b32.xlu0 %v564, 42
      %v1040 = vpop.permute.xlu0 %1039
      %1041 = vrot.lane.b32.xlu0 %v565, 42
      %v1042 = vpop.permute.xlu0 %1041
      %1043 = vrot.lane.b32.xlu0 %v566, 42
      %v1044 = vpop.permute.xlu0 %1043
      %1045 = vrot.lane.b32.xlu0 %v561, 42
      %v1046 = vpop.permute.xlu0 %1045
      %1047 = vrot.lane.b32.xlu0 %v578, 42
      %v1048 = vpop.permute.xlu0 %1047
      %1049 = vrot.lane.b32.xlu0 %v579, 42
      %v1050 = vpop.permute.xlu0 %1049
      %1051 = vrot.lane.b32.xlu0 %v580, 42
      %v1052 = vpop.permute.xlu0 %1051
      %1053 = vrot.lane.b32.xlu0 %v581, 42
      %v1054 = vpop.permute.xlu0 %1053
      %1055 = vrot.lane.b32.xlu0 %v576, 42
      %v1056 = vpop.permute.xlu0 %1055
      %1057 = vrot.lane.b32.xlu0 %v593, 42
      %v1058 = vpop.permute.xlu0 %1057
      %1059 = vrot.lane.b32.xlu0 %v594, 42
      %v1060 = vpop.permute.xlu0 %1059
      %1061 = vrot.lane.b32.xlu0 %v595, 42
      %v1062 = vpop.permute.xlu0 %1061
      %1063 = vrot.lane.b32.xlu0 %v596, 42
      %v1064 = vpop.permute.xlu0 %1063
      %1065 = vrot.lane.b32.xlu0 %v591, 42
      %v1066 = vpop.permute.xlu0 %1065
      %1067 = vrot.lane.b32.xlu0 %v608, 42
      %v1068 = vpop.permute.xlu0 %1067
      %1069 = vrot.lane.b32.xlu0 %v609, 42
      %v1070 = vpop.permute.xlu0 %1069
      %1071 = vrot.lane.b32.xlu0 %v610, 42
      %v1072 = vpop.permute.xlu0 %1071
      %1073 = vrot.lane.b32.xlu0 %v611, 42
      %v1074 = vpop.permute.xlu0 %1073
      %1075 = vrot.lane.b32.xlu0 %v606, 42
      %v1076 = vpop.permute.xlu0 %1075
      %1077 = vrot.lane.b32.xlu0 %v623, 42
      %v1078 = vpop.permute.xlu0 %1077
      %1079 = vrot.lane.b32.xlu0 %v624, 42
      %v1080 = vpop.permute.xlu0 %1079
      %1081 = vrot.lane.b32.xlu0 %v625, 42
      %v1082 = vpop.permute.xlu0 %1081
      %1083 = vrot.lane.b32.xlu0 %v626, 42
      %v1084 = vpop.permute.xlu0 %1083
      %1085 = vrot.lane.b32.xlu0 %v621, 42
      %v1086 = vpop.permute.xlu0 %1085
      %1087 = vrot.lane.b32.xlu0 %v638, 42
      %v1088 = vpop.permute.xlu0 %1087
      %1089 = vrot.lane.b32.xlu0 %v639, 42
      %v1090 = vpop.permute.xlu0 %1089
      %1091 = vrot.lane.b32.xlu0 %v640, 42
      %v1092 = vpop.permute.xlu0 %1091
      %1093 = vrot.lane.b32.xlu0 %v641, 42
      %v1094 = vpop.permute.xlu0 %1093
      %1095 = vrot.lane.b32.xlu0 %v636, 42
      %v1096 = vpop.permute.xlu0 %1095
      %1097 = vrot.lane.b32.xlu0 %v653, 42
      %v1098 = vpop.permute.xlu0 %1097
      %1099 = vrot.lane.b32.xlu0 %v654, 42
      %v1100 = vpop.permute.xlu0 %1099
      %1101 = vrot.lane.b32.xlu0 %v655, 42
      %v1102 = vpop.permute.xlu0 %1101
      %1103 = vrot.lane.b32.xlu0 %v656, 42
      %v1104 = vpop.permute.xlu0 %1103
      %1105 = vrot.lane.b32.xlu0 %v651, 42
      %v1106 = vpop.permute.xlu0 %1105
      %1107 = vrot.lane.b32.xlu0 %v668, 42
      %v1108 = vpop.permute.xlu0 %1107
      %1109 = vrot.lane.b32.xlu0 %v669, 42
      %v1110 = vpop.permute.xlu0 %1109
      %1111 = vrot.lane.b32.xlu0 %v670, 42
      %v1112 = vpop.permute.xlu0 %1111
      %1113 = vrot.lane.b32.xlu0 %v671, 42
      %v1114 = vpop.permute.xlu0 %1113
      %1115 = vrot.lane.b32.xlu0 %v666, 42
      %v1116 = vpop.permute.xlu0 %1115
      %1117 = vrot.lane.b32.xlu0 %v683, 42
      %v1118 = vpop.permute.xlu0 %1117
      %1119 = vrot.lane.b32.xlu0 %v684, 42
      %v1120 = vpop.permute.xlu0 %1119
      %1121 = vrot.lane.b32.xlu0 %v685, 42
      %v1122 = vpop.permute.xlu0 %1121
      %1123 = vrot.lane.b32.xlu0 %v686, 42
      %v1124 = vpop.permute.xlu0 %1123
      %1125 = vrot.lane.b32.xlu0 %v681, 42
      %v1126 = vpop.permute.xlu0 %1125
      %1127 = vrot.lane.b32.xlu0 %v698, 42
      %v1128 = vpop.permute.xlu0 %1127
      %1129 = vrot.lane.b32.xlu0 %v699, 42
      %v1130 = vpop.permute.xlu0 %1129
      %1131 = vrot.lane.b32.xlu0 %v700, 42
      %v1132 = vpop.permute.xlu0 %1131
      %1133 = vrot.lane.b32.xlu0 %v701, 42
      %v1134 = vpop.permute.xlu0 %1133
      %1135 = vrot.lane.b32.xlu0 %v696, 42
      %v1136 = vpop.permute.xlu0 %1135
      %1137 = vrot.lane.b32.xlu0 %v713, 42
      %v1138 = vpop.permute.xlu0 %1137
      %1139 = vrot.lane.b32.xlu0 %v714, 42
      %v1140 = vpop.permute.xlu0 %1139
      %1141 = vrot.lane.b32.xlu0 %v715, 42
      %v1142 = vpop.permute.xlu0 %1141
      %1143 = vrot.lane.b32.xlu0 %v716, 42
      %v1144 = vpop.permute.xlu0 %1143
      %1145 = vrot.lane.b32.xlu0 %v711, 42
      %v1146 = vpop.permute.xlu0 %1145
      %1147 = vrot.lane.b32.xlu0 %v718, 42
      %v1148 = vpop.permute.xlu0 %1147
      %1149 = vrot.lane.b32.xlu0 %v726, 42
      %v1150 = vpop.permute.xlu0 %1149
      %1151 = vrot.lane.b32.xlu0 %v727, 42
      %v1152 = vpop.permute.xlu0 %1151
      %1153 = vrot.lane.b32.xlu0 %v728, 42
      %v1154 = vpop.permute.xlu0 %1153
      %1155 = vrot.lane.b32.xlu0 %v724, 42
      %v1156 = vpop.permute.xlu0 %1155
      %1157 = vrot.lane.b32.xlu0 %v735, 42
      %v1158 = vpop.permute.xlu0 %1157
      %1159 = vrot.lane.b32.xlu0 %v745, 42
      %v1160 = vpop.permute.xlu0 %1159
      %1161 = vrot.lane.b32.xlu0 %v746, 42
      %v1162 = vpop.permute.xlu0 %1161
      %1163 = vrot.lane.b32.xlu0 %v747, 42
      %v1164 = vpop.permute.xlu0 %1163
      %1165 = vrot.lane.b32.xlu0 %v748, 42
      %v1166 = vpop.permute.xlu0 %1165
      %1167 = vrot.lane.b32.xlu0 %v750, 42
      %v1168 = vpop.permute.xlu0 %1167
      %1169 = vrot.lane.b32.xlu0 %v760, 42
      %v1170 = vpop.permute.xlu0 %1169
      %1171 = vrot.lane.b32.xlu0 %v761, 42
      %v1172 = vpop.permute.xlu0 %1171
      %1173 = vrot.lane.b32.xlu0 %v762, 42
      %v1174 = vpop.permute.xlu0 %1173
      %1175 = vrot.lane.b32.xlu0 %v763, 42
      %v1176 = vpop.permute.xlu0 %1175
      %1177 = vrot.lane.b32.xlu0 %v765, 42
      %v1178 = vpop.permute.xlu0 %1177
      %1179 = vrot.lane.b32.xlu0 %v775, 42
      %v1180 = vpop.permute.xlu0 %1179
      %1181 = vrot.lane.b32.xlu0 %v776, 42
      %v1182 = vpop.permute.xlu0 %1181
      %1183 = vrot.lane.b32.xlu0 %v777, 42
      %v1184 = vpop.permute.xlu0 %1183
      %1185 = vrot.lane.b32.xlu0 %v778, 42
      %v1186 = vpop.permute.xlu0 %1185
      %1187 = vrot.lane.b32.xlu0 %v893, 42
      %v1188 = vpop.permute.xlu0 %1187
      %1189 = vrot.lane.b32.xlu0 %v983, 42
      %v1190 = vpop.permute.xlu0 %1189
      %1191 = vrot.lane.b32.xlu0 %v984, 42
      %v1192 = vpop.permute.xlu0 %1191
      %1193 = vrot.lane.b32.xlu0 %v985, 42
      %v1194 = vpop.permute.xlu0 %1193
      %1195 = vrot.lane.b32.xlu0 %v986, 42
      %v1196 = vpop.permute.xlu0 %1195
      %1197 = vrot.lane.b32.xlu0 %v903, 42
      %v1198 = vpop.permute.xlu0 %1197
      %1199 = vrot.lane.b32.xlu0 %v987, 42
      %v1200 = vpop.permute.xlu0 %1199
      %1201 = vrot.lane.b32.xlu0 %v988, 42
      %v1202 = vpop.permute.xlu0 %1201
      %1203 = vrot.lane.b32.xlu0 %v989, 42
      %v1204 = vpop.permute.xlu0 %1203
      %1205 = vrot.lane.b32.xlu0 %v990, 42
      %v1206 = vpop.permute.xlu0 %1205
      %1207 = vrot.lane.b32.xlu0 %v913, 42
      %v1208 = vpop.permute.xlu0 %1207
      %1209 = vrot.lane.b32.xlu0 %v991, 42
      %v1210 = vpop.permute.xlu0 %1209
      %1211 = vrot.lane.b32.xlu0 %v992, 42
      %v1212 = vpop.permute.xlu0 %1211
      %1213 = vrot.lane.b32.xlu0 %v993, 42
      %v1214 = vpop.permute.xlu0 %1213
      %1215 = vrot.lane.b32.xlu0 %v994, 42
      %v1216 = vpop.permute.xlu0 %1215
      %1217 = vrot.lane.b32.xlu0 %v923, 42
      %v1218 = vpop.permute.xlu0 %1217
      %1219 = vrot.lane.b32.xlu0 %v995, 42
      %v1220 = vpop.permute.xlu0 %1219
      %1221 = vrot.lane.b32.xlu0 %v996, 42
      %v1222 = vpop.permute.xlu0 %1221
      %1223 = vrot.lane.b32.xlu0 %v997, 42
      %v1224 = vpop.permute.xlu0 %1223
      %1225 = vrot.lane.b32.xlu0 %v998, 42
      %v1226 = vpop.permute.xlu0 %1225
      %1227 = vrot.lane.b32.xlu0 %v933, 42
      %v1228 = vpop.permute.xlu0 %1227
      %1229 = vrot.lane.b32.xlu0 %v999, 42
      %v1230 = vpop.permute.xlu0 %1229
      %1231 = vrot.lane.b32.xlu0 %v1000, 42
      %v1232 = vpop.permute.xlu0 %1231
      %1233 = vrot.lane.b32.xlu0 %v1001, 42
      %v1234 = vpop.permute.xlu0 %1233
      %1235 = vrot.lane.b32.xlu0 %v1002, 42
      %v1236 = vpop.permute.xlu0 %1235
      %1237 = vrot.lane.b32.xlu0 %v943, 42
      %v1238 = vpop.permute.xlu0 %1237
      %1239 = vrot.lane.b32.xlu0 %v1003, 42
      %v1240 = vpop.permute.xlu0 %1239
      %1241 = vrot.lane.b32.xlu0 %v1004, 42
      %v1242 = vpop.permute.xlu0 %1241
      %1243 = vrot.lane.b32.xlu0 %v1005, 42
      %v1244 = vpop.permute.xlu0 %1243
      %1245 = vrot.lane.b32.xlu0 %v1006, 42
      %v1246 = vpop.permute.xlu0 %1245
      %1247 = vrot.lane.b32.xlu0 %v953, 42
      %v1248 = vpop.permute.xlu0 %1247
      %1249 = vrot.lane.b32.xlu0 %v1007, 42
      %v1250 = vpop.permute.xlu0 %1249
      %1251 = vrot.lane.b32.xlu0 %v1008, 42
      %v1252 = vpop.permute.xlu0 %1251
      %1253 = vrot.lane.b32.xlu0 %v1009, 42
      %v1254 = vpop.permute.xlu0 %1253
      %1255 = vrot.lane.b32.xlu0 %v1010, 42
      %v1256 = vpop.permute.xlu0 %1255
      %1257 = vrot.lane.b32.xlu0 %v963, 42
      %v1258 = vpop.permute.xlu0 %1257
      %1259 = vrot.lane.b32.xlu0 %v1011, 42
      %v1260 = vpop.permute.xlu0 %1259
      %1261 = vrot.lane.b32.xlu0 %v1012, 42
      %v1262 = vpop.permute.xlu0 %1261
      %1263 = vrot.lane.b32.xlu0 %v1013, 42
      %v1264 = vpop.permute.xlu0 %1263
      %1265 = vrot.lane.b32.xlu0 %v1014, 42
      %v1266 = vpop.permute.xlu0 %1265
      %1267 = vrot.lane.b32.xlu0 %v973, 42
      %v1268 = vpop.permute.xlu0 %1267
      %1269 = vrot.lane.b32.xlu0 %v1015, 42
      %v1270 = vpop.permute.xlu0 %1269
      %1271 = vrot.lane.b32.xlu0 %v1016, 42
      %v1272 = vpop.permute.xlu0 %1271
      %1273 = vrot.lane.b32.xlu0 %v1017, 42
      %v1274 = vpop.permute.xlu0 %1273
      %1275 = vrot.lane.b32.xlu0 %v1018, 42
      %v1276 = vpop.permute.xlu0 %1275
      %vm1277 = vcmask 343040
      %v1278 = vsel %vm1277, %v1028, %v1030
      %v1279 = vsel %vm1277, %v1030, %v1032
      %v1280 = vsel %vm1277, %v1032, %v1034
      %v1281 = vsel %vm1277, %v1034, %v1036
      %v1282 = vsel %vm1277, %v1038, %v1040
      %v1283 = vsel %vm1277, %v1040, %v1042
      %v1284 = vsel %vm1277, %v1042, %v1044
      %v1285 = vsel %vm1277, %v1044, %v1046
      %v1286 = vsel %vm1277, %v1048, %v1050
      %v1287 = vsel %vm1277, %v1050, %v1052
      %v1288 = vsel %vm1277, %v1052, %v1054
      %v1289 = vsel %vm1277, %v1054, %v1056
      %v1290 = vsel %vm1277, %v1058, %v1060
      %v1291 = vsel %vm1277, %v1060, %v1062
      %v1292 = vsel %vm1277, %v1062, %v1064
      %v1293 = vsel %vm1277, %v1064, %v1066
      %v1294 = vsel %vm1277, %v1068, %v1070
      %v1295 = vsel %vm1277, %v1070, %v1072
      %v1296 = vsel %vm1277, %v1072, %v1074
      %v1297 = vsel %vm1277, %v1074, %v1076
      %v1298 = vsel %vm1277, %v1078, %v1080
      %v1299 = vsel %vm1277, %v1080, %v1082
      %v1300 = vsel %vm1277, %v1082, %v1084
      %v1301 = vsel %vm1277, %v1084, %v1086
      %v1302 = vsel %vm1277, %v1088, %v1090
      %v1303 = vsel %vm1277, %v1090, %v1092
      %v1304 = vsel %vm1277, %v1092, %v1094
      %v1305 = vsel %vm1277, %v1094, %v1096
      %v1306 = vsel %vm1277, %v1098, %v1100
      %v1307 = vsel %vm1277, %v1100, %v1102
      %v1308 = vsel %vm1277, %v1102, %v1104
      %v1309 = vsel %vm1277, %v1104, %v1106
      %v1310 = vsel %vm1277, %v1108, %v1110
      %v1311 = vsel %vm1277, %v1110, %v1112
      %v1312 = vsel %vm1277, %v1112, %v1114
      %v1313 = vsel %vm1277, %v1114, %v1116
      %v1314 = vsel %vm1277, %v1118, %v1120
      %v1315 = vsel %vm1277, %v1120, %v1122
      %v1316 = vsel %vm1277, %v1122, %v1124
      %v1317 = vsel %vm1277, %v1124, %v1126
      %v1318 = vsel %vm1277, %v1128, %v1130
      %v1319 = vsel %vm1277, %v1130, %v1132
      %v1320 = vsel %vm1277, %v1132, %v1134
      %v1321 = vsel %vm1277, %v1134, %v1136
      %v1322 = vsel %vm1277, %v1138, %v1140
      %v1323 = vsel %vm1277, %v1140, %v1142
      %v1324 = vsel %vm1277, %v1142, %v1144
      %v1325 = vsel %vm1277, %v1144, %v1146
      %v1326 = vsel %vm1277, %v1148, %v1150
      %v1327 = vsel %vm1277, %v1150, %v1152
      %v1328 = vsel %vm1277, %v1152, %v1154
      %v1329 = vsel %vm1277, %v1154, %v1156
      %v1330 = vsel %vm1277, %v1158, %v1160
      %v1331 = vsel %vm1277, %v1160, %v1162
      %v1332 = vsel %vm1277, %v1162, %v1164
      %v1333 = vsel %vm1277, %v1164, %v1166
      %v1334 = vsel %vm1277, %v1168, %v1170
      %v1335 = vsel %vm1277, %v1170, %v1172
      %v1336 = vsel %vm1277, %v1172, %v1174
      %v1337 = vsel %vm1277, %v1174, %v1176
      %v1338 = vsel %vm1277, %v1178, %v1180
      %v1339 = vsel %vm1277, %v1180, %v1182
      %v1340 = vsel %vm1277, %v1182, %v1184
      %v1341 = vsel %vm1277, %v1184, %v1186
      %v1342 = vsel %vm1277, %v1188, %v1190
      %v1343 = vsel %vm1277, %v1190, %v1192
      %v1344 = vsel %vm1277, %v1192, %v1194
      %v1345 = vsel %vm1277, %v1194, %v1196
      %v1346 = vsel %vm1277, %v1198, %v1200
      %v1347 = vsel %vm1277, %v1200, %v1202
      %v1348 = vsel %vm1277, %v1202, %v1204
      %v1349 = vsel %vm1277, %v1204, %v1206
      %v1350 = vsel %vm1277, %v1208, %v1210
      %v1351 = vsel %vm1277, %v1210, %v1212
      %v1352 = vsel %vm1277, %v1212, %v1214
      %v1353 = vsel %vm1277, %v1214, %v1216
      %v1354 = vsel %vm1277, %v1218, %v1220
      %v1355 = vsel %vm1277, %v1220, %v1222
      %v1356 = vsel %vm1277, %v1222, %v1224
      %v1357 = vsel %vm1277, %v1224, %v1226
      %v1358 = vsel %vm1277, %v1228, %v1230
      %v1359 = vsel %vm1277, %v1230, %v1232
      %v1360 = vsel %vm1277, %v1232, %v1234
      %v1361 = vsel %vm1277, %v1234, %v1236
      %v1362 = vsel %vm1277, %v1238, %v1240
      %v1363 = vsel %vm1277, %v1240, %v1242
      %v1364 = vsel %vm1277, %v1242, %v1244
      %v1365 = vsel %vm1277, %v1244, %v1246
      %v1366 = vsel %vm1277, %v1248, %v1250
      %v1367 = vsel %vm1277, %v1250, %v1252
      %v1368 = vsel %vm1277, %v1252, %v1254
      %v1369 = vsel %vm1277, %v1254, %v1256
      %v1370 = vsel %vm1277, %v1258, %v1260
      %v1371 = vsel %vm1277, %v1260, %v1262
      %v1372 = vsel %vm1277, %v1262, %v1264
      %v1373 = vsel %vm1277, %v1264, %v1266
      %v1374 = vsel %vm1277, %v1268, %v1270
      %v1375 = vsel %vm1277, %v1270, %v1272
      %v1376 = vsel %vm1277, %v1272, %v1274
      %v1377 = vsel %vm1277, %v1274, %v1276
      %vm1478 = vcmask 588800
      %v1480 = vsel %vm1478, %v1020, 0
      %1482 = vmatpush.msra.mxu0 %v1338
      %1483 = vmatpush.msra.mxu0 %v1334
      %1484 = vmatpush.msra.mxu0 %v1330
      %1485 = vmatpush.msra.mxu0 %v1326
      %1486 = vmatpush.msra.mxu0 %v1322
      %1487 = vmatpush.msra.mxu0 %v1318
      %1488 = vmatpush.msra.mxu0 %v1314
      %1489 = vmatpush.msra.mxu0 %v1310
      %1490 = vmatpush.msra.mxu0 %v1306
      %1491 = vmatpush.msra.mxu0 %v1302
      %1492 = vmatpush.msra.mxu0 %v1298
      %1493 = vmatpush.msra.mxu0 %v1294
      %1494 = vmatpush.msra.mxu0 %v1290
      %1495 = vmatpush.msra.mxu0 %v1286
      %1496 = vmatpush.msra.mxu0 %v1282
      %1497 = vmatpush.msra.mxu0 %v1278
      %1498 = vmatmul.f32.gmra.mxu0 %v1019
      %v1499 = vpop.f32.mrf.mxu0
      %v1500 = vadd.f32 %v1025, %v1499
      %1501 = vdwg.mxu0
      %1502 = vmatpush.msra.mxu0 0.0
      %1503 = vmatpush.msra.mxu0 0.0
      %1504 = vmatpush.msra.mxu0 0.0
      %1505 = vmatpush.msra.mxu0 0.0
      %1506 = vmatpush.msra.mxu0 0.0
      %1507 = vmatpush.msra.mxu0 0.0
      %1508 = vmatpush.msra.mxu0 0.0
      %1509 = vmatpush.msra.mxu0 %v1374
      %1510 = vmatpush.msra.mxu0 %v1370
      %1511 = vmatpush.msra.mxu0 %v1366
      %1512 = vmatpush.msra.mxu0 %v1362
      %1513 = vmatpush.msra.mxu0 %v1358
      %1514 = vmatpush.msra.mxu0 %v1354
      %1515 = vmatpush.msra.mxu0 %v1350
      %1516 = vmatpush.msra.mxu0 %v1346
      %1517 = vmatpush.msra.mxu0 %v1342
      %1518 = vmatmul.f32.gmra.mxu0 %v1480
      %v1519 = vpop.f32.mrf.mxu0
      %v1520 = vadd.f32 %v1500, %v1519
      %1521 = vdwg.mxu0
      %1522 = vmatpush.msra.mxu0 %v1339
      %1523 = vmatpush.msra.mxu0 %v1335
      %1524 = vmatpush.msra.mxu0 %v1331
      %1525 = vmatpush.msra.mxu0 %v1327
      %1526 = vmatpush.msra.mxu0 %v1323
      %1527 = vmatpush.msra.mxu0 %v1319
      %1528 = vmatpush.msra.mxu0 %v1315
      %1529 = vmatpush.msra.mxu0 %v1311
      %1530 = vmatpush.msra.mxu0 %v1307
      %1531 = vmatpush.msra.mxu0 %v1303
      %1532 = vmatpush.msra.mxu0 %v1299
      %1533 = vmatpush.msra.mxu0 %v1295
      %1534 = vmatpush.msra.mxu0 %v1291
      %1535 = vmatpush.msra.mxu0 %v1287
      %1536 = vmatpush.msra.mxu0 %v1283
      %1537 = vmatpush.msra.mxu0 %v1279
      %1538 = vmatmul.f32.gmra.mxu0 %v1019
      %v1539 = vpop.f32.mrf.mxu0
      %v1540 = vadd.f32 %v1025, %v1539
      %1541 = vdwg.mxu0
      %1542 = vmatpush.msra.mxu0 0.0
      %1543 = vmatpush.msra.mxu0 0.0
      %1544 = vmatpush.msra.mxu0 0.0
      %1545 = vmatpush.msra.mxu0 0.0
      %1546 = vmatpush.msra.mxu0 0.0
      %1547 = vmatpush.msra.mxu0 0.0
      %1548 = vmatpush.msra.mxu0 0.0
      %1549 = vmatpush.msra.mxu0 %v1375
      %1550 = vmatpush.msra.mxu0 %v1371
      %1551 = vmatpush.msra.mxu0 %v1367
      %1552 = vmatpush.msra.mxu0 %v1363
      %1553 = vmatpush.msra.mxu0 %v1359
      %1554 = vmatpush.msra.mxu0 %v1355
      %1555 = vmatpush.msra.mxu0 %v1351
      %1556 = vmatpush.msra.mxu0 %v1347
      %1557 = vmatpush.msra.mxu0 %v1343
      %1558 = vmatmul.f32.gmra.mxu0 %v1480
      %v1559 = vpop.f32.mrf.mxu0
      %v1560 = vadd.f32 %v1540, %v1559
      %1561 = vdwg.mxu0
      %1562 = vmatpush.msra.mxu0 %v1340
      %1563 = vmatpush.msra.mxu0 %v1336
      %1564 = vmatpush.msra.mxu0 %v1332
      %1565 = vmatpush.msra.mxu0 %v1328
      %1566 = vmatpush.msra.mxu0 %v1324
      %1567 = vmatpush.msra.mxu0 %v1320
      %1568 = vmatpush.msra.mxu0 %v1316
      %1569 = vmatpush.msra.mxu0 %v1312
      %1570 = vmatpush.msra.mxu0 %v1308
      %1571 = vmatpush.msra.mxu0 %v1304
      %1572 = vmatpush.msra.mxu0 %v1300
      %1573 = vmatpush.msra.mxu0 %v1296
      %1574 = vmatpush.msra.mxu0 %v1292
      %1575 = vmatpush.msra.mxu0 %v1288
      %1576 = vmatpush.msra.mxu0 %v1284
      %1577 = vmatpush.msra.mxu0 %v1280
      %1578 = vmatmul.f32.gmra.mxu0 %v1019
      %v1579 = vpop.f32.mrf.mxu0
      %v1580 = vadd.f32 %v1025, %v1579
      %1581 = vdwg.mxu0
      %1582 = vmatpush.msra.mxu0 0.0
      %1583 = vmatpush.msra.mxu0 0.0
      %1584 = vmatpush.msra.mxu0 0.0
      %1585 = vmatpush.msra.mxu0 0.0
      %1586 = vmatpush.msra.mxu0 0.0
      %1587 = vmatpush.msra.mxu0 0.0
      %1588 = vmatpush.msra.mxu0 0.0
      %1589 = vmatpush.msra.mxu0 %v1376
      %1590 = vmatpush.msra.mxu0 %v1372
      %1591 = vmatpush.msra.mxu0 %v1368
      %1592 = vmatpush.msra.mxu0 %v1364
      %1593 = vmatpush.msra.mxu0 %v1360
      %1594 = vmatpush.msra.mxu0 %v1356
      %1595 = vmatpush.msra.mxu0 %v1352
      %1596 = vmatpush.msra.mxu0 %v1348
      %1597 = vmatpush.msra.mxu0 %v1344
      %1598 = vmatmul.f32.gmra.mxu0 %v1480
      %v1599 = vpop.f32.mrf.mxu0
      %v1600 = vadd.f32 %v1580, %v1599
      %1601 = vdwg.mxu0
      %1602 = vmatpush.msra.mxu0 %v1341
      %1603 = vmatpush.msra.mxu0 %v1337
      %1604 = vmatpush.msra.mxu0 %v1333
      %1605 = vmatpush.msra.mxu0 %v1329
      %1606 = vmatpush.msra.mxu0 %v1325
      %1607 = vmatpush.msra.mxu0 %v1321
      %1608 = vmatpush.msra.mxu0 %v1317
      %1609 = vmatpush.msra.mxu0 %v1313
      %1610 = vmatpush.msra.mxu0 %v1309
      %1611 = vmatpush.msra.mxu0 %v1305
      %1612 = vmatpush.msra.mxu0 %v1301
      %1613 = vmatpush.msra.mxu0 %v1297
      %1614 = vmatpush.msra.mxu0 %v1293
      %1615 = vmatpush.msra.mxu0 %v1289
      %1616 = vmatpush.msra.mxu0 %v1285
      %1617 = vmatpush.msra.mxu0 %v1281
      %1618 = vmatmul.f32.gmra.mxu0 %v1019
      %v1619 = vpop.f32.mrf.mxu0
      %v1620 = vadd.f32 %v1025, %v1619
      %1621 = vdwg.mxu0
      %1622 = vmatpush.msra.mxu0 0.0
      %1623 = vmatpush.msra.mxu0 0.0
      %1624 = vmatpush.msra.mxu0 0.0
      %1625 = vmatpush.msra.mxu0 0.0
      %1626 = vmatpush.msra.mxu0 0.0
      %1627 = vmatpush.msra.mxu0 0.0
      %1628 = vmatpush.msra.mxu0 0.0
      %1629 = vmatpush.msra.mxu0 %v1377
      %1630 = vmatpush.msra.mxu0 %v1373
      %1631 = vmatpush.msra.mxu0 %v1369
      %1632 = vmatpush.msra.mxu0 %v1365
      %1633 = vmatpush.msra.mxu0 %v1361
      %1634 = vmatpush.msra.mxu0 %v1357
      %1635 = vmatpush.msra.mxu0 %v1353
      %1636 = vmatpush.msra.mxu0 %v1349
      %1637 = vmatpush.msra.mxu0 %v1345
      %1638 = vmatmul.f32.gmra.mxu0 %v1480
      %v1639 = vpop.f32.mrf.mxu0
      %v1640 = vadd.f32 %v1620, %v1639
      %1641 = vdwg.mxu0
      %v1642 = vmax.f32 %v1520, 0.0
      %v1643 = vmax.f32 %v1560, 0.0
      %v1644 = vmax.f32 %v1600, 0.0
      %v1645 = vmax.f32 %v1640, 0.0
      %v1647 = vperm.slane %v528, 0
      %v1648 = vperm.slane %v528, 1
      %v1649 = vperm.slane %v528, 2
      %v1650 = vperm.slane %v528, 3
      %v1655 = vmul.f32 %v1642, %v1647
      %v1656 = vmul.f32 %v1643, %v1648
      %v1657 = vmul.f32 %v1644, %v1649
      %v1658 = vmul.f32 %v1645, %v1650
      %1659 = vst [vmem:[#allocation2 + $0x8] sm:$0xff] %v1655
      %1660 = vst [vmem:[#allocation2 + $0x10] sm:$0xff] %v1656
      %1661 = vst [vmem:[#allocation2 + $0x18] sm:$0xff] %v1657
      %1662 = vst [vmem:[#allocation2 + $0x20] sm:$0xff] %v1658
      %v1663 = vld [vmem:[#allocation2] sm:$0xff]
      %v1664 = vld [vmem:[#allocation2 + $0x8] sm:$0xff]
      %v1665 = vld [vmem:[#allocation2 + $0x10] sm:$0xff]
      %v1666 = vld [vmem:[#allocation2 + $0x18] sm:$0xff]
      %v1667 = vld [vmem:[#allocation2 + $0x20] sm:$0xff]
      %v1668 = vld [vmem:[#allocation2 + $0x8] sm:$0xff]
      %v1669 = vld [vmem:[#allocation2 + $0x10] sm:$0xff]
      %v1670 = vld [vmem:[#allocation2 + $0x18] sm:$0xff]
      %v1671 = vld [vmem:[#allocation2 + $0x20] sm:$0xff]
      %v1672 = vld [vmem:[#allocation2 + $0x28] sm:$0xff]
      %1678 = vrot.lane.b32.xlu0 %v1663, 127
      %v1679 = vpop.permute.xlu0 %1678
      %1680 = vrot.lane.b32.xlu0 %v1664, 127
      %v1681 = vpop.permute.xlu0 %1680
      %1682 = vrot.lane.b32.xlu0 %v1665, 127
      %v1683 = vpop.permute.xlu0 %1682
      %1684 = vrot.lane.b32.xlu0 %v1666, 127
      %v1685 = vpop.permute.xlu0 %1684
      %1686 = vrot.lane.b32.xlu0 %v1667, 127
      %v1687 = vpop.permute.xlu0 %1686
      %v1688 = vsel %vm562, %v1679, %v1681
      %v1689 = vsel %vm562, %v1681, %v1683
      %v1690 = vsel %vm562, %v1683, %v1685
      %v1691 = vsel %vm562, %v1685, %v1687
      %1692 = vrot.lane.b32.xlu0 %v1663, 126
      %v1693 = vpop.permute.xlu0 %1692
      %1694 = vrot.lane.b32.xlu0 %v1664, 126
      %v1695 = vpop.permute.xlu0 %1694
      %1696 = vrot.lane.b32.xlu0 %v1665, 126
      %v1697 = vpop.permute.xlu0 %1696
      %1698 = vrot.lane.b32.xlu0 %v1666, 126
      %v1699 = vpop.permute.xlu0 %1698
      %1700 = vrot.lane.b32.xlu0 %v1667, 126
      %v1701 = vpop.permute.xlu0 %1700
      %v1702 = vsel %vm577, %v1693, %v1695
      %v1703 = vsel %vm577, %v1695, %v1697
      %v1704 = vsel %vm577, %v1697, %v1699
      %v1705 = vsel %vm577, %v1699, %v1701
      %1706 = vrot.lane.b32.xlu0 %v1663, 108
      %v1707 = vpop.permute.xlu0 %1706
      %1708 = vrot.lane.b32.xlu0 %v1664, 108
      %v1709 = vpop.permute.xlu0 %1708
      %1710 = vrot.lane.b32.xlu0 %v1665, 108
      %v1711 = vpop.permute.xlu0 %1710
      %1712 = vrot.lane.b32.xlu0 %v1666, 108
      %v1713 = vpop.permute.xlu0 %1712
      %1714 = vrot.lane.b32.xlu0 %v1667, 108
      %v1715 = vpop.permute.xlu0 %1714
      %v1716 = vsel %vm622, %v1707, %v1709
      %v1717 = vsel %vm622, %v1709, %v1711
      %v1718 = vsel %vm622, %v1711, %v1713
      %v1719 = vsel %vm622, %v1713, %v1715
      %1720 = vrot.lane.b32.xlu0 %v1664, 107
      %v1721 = vpop.permute.xlu0 %1720
      %1722 = vrot.lane.b32.xlu0 %v1665, 107
      %v1723 = vpop.permute.xlu0 %1722
      %1724 = vrot.lane.b32.xlu0 %v1666, 107
      %v1725 = vpop.permute.xlu0 %1724
      %1726 = vrot.lane.b32.xlu0 %v1667, 107
      %v1727 = vpop.permute.xlu0 %1726
      %v1728 = vsel %vm637, %v1721, %v1723
      %v1729 = vsel %vm637, %v1723, %v1725
      %v1730 = vsel %vm637, %v1725, %v1727
      %1736 = vrot.lane.b32.xlu0 %v1668, 106
      %v1737 = vpop.permute.xlu0 %1736
      %1738 = vrot.lane.b32.xlu0 %v1669, 106
      %v1739 = vpop.permute.xlu0 %1738
      %1740 = vrot.lane.b32.xlu0 %v1670, 106
      %v1741 = vpop.permute.xlu0 %1740
      %1742 = vrot.lane.b32.xlu0 %v1671, 106
      %v1743 = vpop.permute.xlu0 %1742
      %1744 = vrot.lane.b32.xlu0 %v1672, 106
      %v1745 = vpop.permute.xlu0 %1744
      %v1746 = vsel %vm652, %v1737, %v1739
      %v1747 = vsel %vm652, %v1739, %v1741
      %v1748 = vsel %vm652, %v1741, %v1743
      %v1749 = vsel %vm652, %v1743, %v1745
      %1750 = vrot.lane.b32.xlu0 %v1668, 88
      %v1751 = vpop.permute.xlu0 %1750
      %1752 = vrot.lane.b32.xlu0 %v1669, 88
      %v1753 = vpop.permute.xlu0 %1752
      %1754 = vrot.lane.b32.xlu0 %v1670, 88
      %v1755 = vpop.permute.xlu0 %1754
      %1756 = vrot.lane.b32.xlu0 %v1671, 88
      %v1757 = vpop.permute.xlu0 %1756
      %1758 = vrot.lane.b32.xlu0 %v1672, 88
      %v1759 = vpop.permute.xlu0 %1758
      %v1760 = vsel %vm697, %v1751, %v1753
      %v1761 = vsel %vm697, %v1753, %v1755
      %v1762 = vsel %vm697, %v1755, %v1757
      %v1763 = vsel %vm697, %v1757, %v1759
      %1764 = vrot.lane.b32.xlu0 %v1668, 87
      %v1765 = vpop.permute.xlu0 %1764
      %1766 = vrot.lane.b32.xlu0 %v1669, 87
      %v1767 = vpop.permute.xlu0 %1766
      %1768 = vrot.lane.b32.xlu0 %v1670, 87
      %v1769 = vpop.permute.xlu0 %1768
      %1770 = vrot.lane.b32.xlu0 %v1671, 87
      %v1771 = vpop.permute.xlu0 %1770
      %1772 = vrot.lane.b32.xlu0 %v1672, 87
      %v1773 = vpop.permute.xlu0 %1772
      %v1774 = vsel %vm712, %v1765, %v1767
      %v1775 = vsel %vm712, %v1767, %v1769
      %v1776 = vsel %vm712, %v1769, %v1771
      %v1777 = vsel %vm712, %v1771, %v1773
      %1778 = vrot.lane.b32.xlu0 %v1668, 86
      %v1779 = vpop.permute.xlu0 %1778
      %1780 = vrot.lane.b32.xlu0 %v1669, 86
      %v1781 = vpop.permute.xlu0 %1780
      %1782 = vrot.lane.b32.xlu0 %v1670, 86
      %v1783 = vpop.permute.xlu0 %1782
      %1784 = vrot.lane.b32.xlu0 %v1671, 86
      %v1785 = vpop.permute.xlu0 %1784
      %1786 = vrot.lane.b32.xlu0 %v1672, 86
      %v1787 = vpop.permute.xlu0 %1786
      %v1788 = vsel %vm725, %v1779, %v1781
      %v1789 = vsel %vm725, %v1781, %v1783
      %v1790 = vsel %vm725, %v1783, %v1785
      %v1791 = vsel %vm725, %v1785, %v1787
      %v1792 = vld [vmem:[%s4] sm:$0xff]
      %v1793 = vld [vmem:[%s5] sm:$0xff]
      %1795 = vset.pattern.permute.xlu0 0
      %1796 = vperm.xlu0 %1795, %v1793
      %v1797 = vpop.permute.xlu0 %1796
      %1799 = vrot.lane.b32.xlu0 %v1663, 21
      %v1800 = vpop.permute.xlu0 %1799
      %1801 = vrot.lane.b32.xlu0 %v1664, 21
      %v1802 = vpop.permute.xlu0 %1801
      %1803 = vrot.lane.b32.xlu0 %v1665, 21
      %v1804 = vpop.permute.xlu0 %1803
      %1805 = vrot.lane.b32.xlu0 %v1666, 21
      %v1806 = vpop.permute.xlu0 %1805
      %1807 = vrot.lane.b32.xlu0 %v1667, 21
      %v1808 = vpop.permute.xlu0 %1807
      %1809 = vrot.lane.b32.xlu0 %v1688, 21
      %v1810 = vpop.permute.xlu0 %1809
      %1811 = vrot.lane.b32.xlu0 %v1689, 21
      %v1812 = vpop.permute.xlu0 %1811
      %1813 = vrot.lane.b32.xlu0 %v1690, 21
      %v1814 = vpop.permute.xlu0 %1813
      %1815 = vrot.lane.b32.xlu0 %v1691, 21
      %v1816 = vpop.permute.xlu0 %1815
      %1817 = vrot.lane.b32.xlu0 %v1687, 21
      %v1818 = vpop.permute.xlu0 %1817
      %1819 = vrot.lane.b32.xlu0 %v1702, 21
      %v1820 = vpop.permute.xlu0 %1819
      %1821 = vrot.lane.b32.xlu0 %v1703, 21
      %v1822 = vpop.permute.xlu0 %1821
      %1823 = vrot.lane.b32.xlu0 %v1704, 21
      %v1824 = vpop.permute.xlu0 %1823
      %1825 = vrot.lane.b32.xlu0 %v1705, 21
      %v1826 = vpop.permute.xlu0 %1825
      %1827 = vrot.lane.b32.xlu0 %v1701, 21
      %v1828 = vpop.permute.xlu0 %1827
      %1829 = vrot.lane.b32.xlu0 %v1716, 21
      %v1830 = vpop.permute.xlu0 %1829
      %1831 = vrot.lane.b32.xlu0 %v1717, 21
      %v1832 = vpop.permute.xlu0 %1831
      %1833 = vrot.lane.b32.xlu0 %v1718, 21
      %v1834 = vpop.permute.xlu0 %1833
      %1835 = vrot.lane.b32.xlu0 %v1719, 21
      %v1836 = vpop.permute.xlu0 %1835
      %1837 = vrot.lane.b32.xlu0 %v1715, 21
      %v1838 = vpop.permute.xlu0 %1837
      %1839 = vrot.lane.b32.xlu0 %v1721, 21
      %v1840 = vpop.permute.xlu0 %1839
      %1841 = vrot.lane.b32.xlu0 %v1728, 21
      %v1842 = vpop.permute.xlu0 %1841
      %1843 = vrot.lane.b32.xlu0 %v1729, 21
      %v1844 = vpop.permute.xlu0 %1843
      %1845 = vrot.lane.b32.xlu0 %v1730, 21
      %v1846 = vpop.permute.xlu0 %1845
      %1847 = vrot.lane.b32.xlu0 %v1727, 21
      %v1848 = vpop.permute.xlu0 %1847
      %1849 = vrot.lane.b32.xlu0 %v1737, 21
      %v1850 = vpop.permute.xlu0 %1849
      %1851 = vrot.lane.b32.xlu0 %v1746, 21
      %v1852 = vpop.permute.xlu0 %1851
      %1853 = vrot.lane.b32.xlu0 %v1747, 21
      %v1854 = vpop.permute.xlu0 %1853
      %1855 = vrot.lane.b32.xlu0 %v1748, 21
      %v1856 = vpop.permute.xlu0 %1855
      %1857 = vrot.lane.b32.xlu0 %v1749, 21
      %v1858 = vpop.permute.xlu0 %1857
      %1859 = vrot.lane.b32.xlu0 %v1751, 21
      %v1860 = vpop.permute.xlu0 %1859
      %1861 = vrot.lane.b32.xlu0 %v1760, 21
      %v1862 = vpop.permute.xlu0 %1861
      %1863 = vrot.lane.b32.xlu0 %v1761, 21
      %v1864 = vpop.permute.xlu0 %1863
      %1865 = vrot.lane.b32.xlu0 %v1762, 21
      %v1866 = vpop.permute.xlu0 %1865
      %1867 = vrot.lane.b32.xlu0 %v1763, 21
      %v1868 = vpop.permute.xlu0 %1867
      %1869 = vrot.lane.b32.xlu0 %v1765, 21
      %v1870 = vpop.permute.xlu0 %1869
      %1871 = vrot.lane.b32.xlu0 %v1774, 21
      %v1872 = vpop.permute.xlu0 %1871
      %1873 = vrot.lane.b32.xlu0 %v1775, 21
      %v1874 = vpop.permute.xlu0 %1873
      %1875 = vrot.lane.b32.xlu0 %v1776, 21
      %v1876 = vpop.permute.xlu0 %1875
      %1877 = vrot.lane.b32.xlu0 %v1777, 21
      %v1878 = vpop.permute.xlu0 %1877
      %1879 = vrot.lane.b32.xlu0 %v1779, 21
      %v1880 = vpop.permute.xlu0 %1879
      %1881 = vrot.lane.b32.xlu0 %v1788, 21
      %v1882 = vpop.permute.xlu0 %1881
      %1883 = vrot.lane.b32.xlu0 %v1789, 21
      %v1884 = vpop.permute.xlu0 %1883
      %1885 = vrot.lane.b32.xlu0 %v1790, 21
      %v1886 = vpop.permute.xlu0 %1885
      %1887 = vrot.lane.b32.xlu0 %v1791, 21
      %v1888 = vpop.permute.xlu0 %1887
      %vm1889 = vcmask 171008
      %v1890 = vsel %vm1889, %v1800, %v1802
      %v1891 = vsel %vm1889, %v1802, %v1804
      %v1892 = vsel %vm1889, %v1804, %v1806
      %v1893 = vsel %vm1889, %v1806, %v1808
      %v1894 = vsel %vm1889, %v1810, %v1812
      %v1895 = vsel %vm1889, %v1812, %v1814
      %v1896 = vsel %vm1889, %v1814, %v1816
      %v1897 = vsel %vm1889, %v1816, %v1818
      %v1898 = vsel %vm1889, %v1820, %v1822
      %v1899 = vsel %vm1889, %v1822, %v1824
      %v1900 = vsel %vm1889, %v1824, %v1826
      %v1901 = vsel %vm1889, %v1826, %v1828
      %v1902 = vsel %vm1889, %v1830, %v1832
      %v1903 = vsel %vm1889, %v1832, %v1834
      %v1904 = vsel %vm1889, %v1834, %v1836
      %v1905 = vsel %vm1889, %v1836, %v1838
      %v1906 = vsel %vm1889, %v1840, %v1842
      %v1907 = vsel %vm1889, %v1842, %v1844
      %v1908 = vsel %vm1889, %v1844, %v1846
      %v1909 = vsel %vm1889, %v1846, %v1848
      %v1910 = vsel %vm1889, %v1850, %v1852
      %v1911 = vsel %vm1889, %v1852, %v1854
      %v1912 = vsel %vm1889, %v1854, %v1856
      %v1913 = vsel %vm1889, %v1856, %v1858
      %v1914 = vsel %vm1889, %v1860, %v1862
      %v1915 = vsel %vm1889, %v1862, %v1864
      %v1916 = vsel %vm1889, %v1864, %v1866
      %v1917 = vsel %vm1889, %v1866, %v1868
      %v1918 = vsel %vm1889, %v1870, %v1872
      %v1919 = vsel %vm1889, %v1872, %v1874
      %v1920 = vsel %vm1889, %v1874, %v1876
      %v1921 = vsel %vm1889, %v1876, %v1878
      %v1922 = vsel %vm1889, %v1880, %v1882
      %v1923 = vsel %vm1889, %v1882, %v1884
      %v1924 = vsel %vm1889, %v1884, %v1886
      %v1925 = vsel %vm1889, %v1886, %v1888
      %v1963 = vsel %vm1478, %v1792, 0
      %1965 = vmatpush.msra.mxu0 0.0
      %1966 = vmatpush.msra.mxu0 0.0
      %1967 = vmatpush.msra.mxu0 0.0
      %1968 = vmatpush.msra.mxu0 0.0
      %1969 = vmatpush.msra.mxu0 0.0
      %1970 = vmatpush.msra.mxu0 0.0
      %1971 = vmatpush.msra.mxu0 0.0
      %1972 = vmatpush.msra.mxu0 %v1922
      %1973 = vmatpush.msra.mxu0 %v1918
      %1974 = vmatpush.msra.mxu0 %v1914
      %1975 = vmatpush.msra.mxu0 %v1910
      %1976 = vmatpush.msra.mxu0 %v1906
      %1977 = vmatpush.msra.mxu0 %v1902
      %1978 = vmatpush.msra.mxu0 %v1898
      %1979 = vmatpush.msra.mxu0 %v1894
      %1980 = vmatpush.msra.mxu0 %v1890
      %1981 = vmatmul.f32.gmra.mxu0 %v1963
      %v1982 = vpop.f32.mrf.mxu0
      %v1983 = vadd.f32 %v1797, %v1982
      %1984 = vdwg.mxu0
      %1985 = vmatpush.msra.mxu0 0.0
      %1986 = vmatpush.msra.mxu0 0.0
      %1987 = vmatpush.msra.mxu0 0.0
      %1988 = vmatpush.msra.mxu0 0.0
      %1989 = vmatpush.msra.mxu0 0.0
      %1990 = vmatpush.msra.mxu0 0.0
      %1991 = vmatpush.msra.mxu0 0.0
      %1992 = vmatpush.msra.mxu0 %v1923
      %1993 = vmatpush.msra.mxu0 %v1919
      %1994 = vmatpush.msra.mxu0 %v1915
      %1995 = vmatpush.msra.mxu0 %v1911
      %1996 = vmatpush.msra.mxu0 %v1907
      %1997 = vmatpush.msra.mxu0 %v1903
      %1998 = vmatpush.msra.mxu0 %v1899
      %1999 = vmatpush.msra.mxu0 %v1895
      %2000 = vmatpush.msra.mxu0 %v1891
      %2001 = vmatmul.f32.gmra.mxu0 %v1963
      %v2002 = vpop.f32.mrf.mxu0
      %v2003 = vadd.f32 %v1797, %v2002
      %2004 = vdwg.mxu0
      %2005 = vmatpush.msra.mxu0 0.0
      %2006 = vmatpush.msra.mxu0 0.0
      %2007 = vmatpush.msra.mxu0 0.0
      %2008 = vmatpush.msra.mxu0 0.0
      %2009 = vmatpush.msra.mxu0 0.0
      %2010 = vmatpush.msra.mxu0 0.0
      %2011 = vmatpush.msra.mxu0 0.0
      %2012 = vmatpush.msra.mxu0 %v1924
      %2013 = vmatpush.msra.mxu0 %v1920
      %2014 = vmatpush.msra.mxu0 %v1916
      %2015 = vmatpush.msra.mxu0 %v1912
      %2016 = vmatpush.msra.mxu0 %v1908
      %2017 = vmatpush.msra.mxu0 %v1904
      %2018 = vmatpush.msra.mxu0 %v1900
      %2019 = vmatpush.msra.mxu0 %v1896
      %2020 = vmatpush.msra.mxu0 %v1892
      %2021 = vmatmul.f32.gmra.mxu0 %v1963
      %v2022 = vpop.f32.mrf.mxu0
      %v2023 = vadd.f32 %v1797, %v2022
      %2024 = vdwg.mxu0
      %2025 = vmatpush.msra.mxu0 0.0
      %2026 = vmatpush.msra.mxu0 0.0
      %2027 = vmatpush.msra.mxu0 0.0
      %2028 = vmatpush.msra.mxu0 0.0
      %2029 = vmatpush.msra.mxu0 0.0
      %2030 = vmatpush.msra.mxu0 0.0
      %2031 = vmatpush.msra.mxu0 0.0
      %2032 = vmatpush.msra.mxu0 %v1925
      %2033 = vmatpush.msra.mxu0 %v1921
      %2034 = vmatpush.msra.mxu0 %v1917
      %2035 = vmatpush.msra.mxu0 %v1913
      %2036 = vmatpush.msra.mxu0 %v1909
      %2037 = vmatpush.msra.mxu0 %v1905
      %2038 = vmatpush.msra.mxu0 %v1901
      %2039 = vmatpush.msra.mxu0 %v1897
      %2040 = vmatpush.msra.mxu0 %v1893
      %2041 = vmatmul.f32.gmra.mxu0 %v1963
      %v2042 = vpop.f32.mrf.mxu0
      %v2043 = vadd.f32 %v1797, %v2042
      %2044 = vdwg.mxu0
      %v2045 = vmax.f32 %v1983, 0.0
      %v2046 = vmax.f32 %v2003, 0.0
      %v2047 = vmax.f32 %v2023, 0.0
      %v2048 = vmax.f32 %v2043, 0.0
      %v2049 = vmul.f32 %v2045, %v1647
      %v2050 = vmul.f32 %v2046, %v1648
      %v2051 = vmul.f32 %v2047, %v1649
      %v2052 = vmul.f32 %v2048, %v1650
      %2053 = vst [vmem:[#allocation2 + $0x8] sm:$0xff] %v2049
      %2054 = vst [vmem:[#allocation2 + $0x10] sm:$0xff] %v2050
      %2055 = vst [vmem:[#allocation2 + $0x18] sm:$0xff] %v2051
      %2056 = vst [vmem:[#allocation2 + $0x20] sm:$0xff] %v2052
      %v2057 = vld [vmem:[#allocation2] sm:$0xff]
      %v2058 = vld [vmem:[#allocation2 + $0x8] sm:$0xff]
      %v2059 = vld [vmem:[#allocation2 + $0x10] sm:$0xff]
      %v2060 = vld [vmem:[#allocation2 + $0x18] sm:$0xff]
      %v2061 = vld [vmem:[#allocation2 + $0x20] sm:$0xff]
      %v2062 = vld [vmem:[#allocation2 + $0x8] sm:$0xff]
      %v2063 = vld [vmem:[#allocation2 + $0x10] sm:$0xff]
      %v2064 = vld [vmem:[#allocation2 + $0x18] sm:$0xff]
      %v2065 = vld [vmem:[#allocation2 + $0x20] sm:$0xff]
      %v2066 = vld [vmem:[#allocation2 + $0x28] sm:$0xff]
      %2072 = vrot.lane.b32.xlu0 %v2057, 127
      %v2073 = vpop.permute.xlu0 %2072
      %2074 = vrot.lane.b32.xlu0 %v2058, 127
      %v2075 = vpop.permute.xlu0 %2074
      %2076 = vrot.lane.b32.xlu0 %v2059, 127
      %v2077 = vpop.permute.xlu0 %2076
      %2078 = vrot.lane.b32.xlu0 %v2060, 127
      %v2079 = vpop.permute.xlu0 %2078
      %2080 = vrot.lane.b32.xlu0 %v2061, 127
      %v2081 = vpop.permute.xlu0 %2080
      %v2082 = vsel %vm562, %v2073, %v2075
      %v2083 = vsel %vm562, %v2075, %v2077
      %v2084 = vsel %vm562, %v2077, %v2079
      %v2085 = vsel %vm562, %v2079, %v2081
      %2086 = vrot.lane.b32.xlu0 %v2057, 126
      %v2087 = vpop.permute.xlu0 %2086
      %2088 = vrot.lane.b32.xlu0 %v2058, 126
      %v2089 = vpop.permute.xlu0 %2088
      %2090 = vrot.lane.b32.xlu0 %v2059, 126
      %v2091 = vpop.permute.xlu0 %2090
      %2092 = vrot.lane.b32.xlu0 %v2060, 126
      %v2093 = vpop.permute.xlu0 %2092
      %2094 = vrot.lane.b32.xlu0 %v2061, 126
      %v2095 = vpop.permute.xlu0 %2094
      %v2096 = vsel %vm577, %v2087, %v2089
      %v2097 = vsel %vm577, %v2089, %v2091
      %v2098 = vsel %vm577, %v2091, %v2093
      %v2099 = vsel %vm577, %v2093, %v2095
      %2100 = vrot.lane.b32.xlu0 %v2057, 108
      %v2101 = vpop.permute.xlu0 %2100
      %2102 = vrot.lane.b32.xlu0 %v2058, 108
      %v2103 = vpop.permute.xlu0 %2102
      %2104 = vrot.lane.b32.xlu0 %v2059, 108
      %v2105 = vpop.permute.xlu0 %2104
      %2106 = vrot.lane.b32.xlu0 %v2060, 108
      %v2107 = vpop.permute.xlu0 %2106
      %2108 = vrot.lane.b32.xlu0 %v2061, 108
      %v2109 = vpop.permute.xlu0 %2108
      %v2110 = vsel %vm622, %v2101, %v2103
      %v2111 = vsel %vm622, %v2103, %v2105
      %v2112 = vsel %vm622, %v2105, %v2107
      %v2113 = vsel %vm622, %v2107, %v2109
      %2114 = vrot.lane.b32.xlu0 %v2058, 107
      %v2115 = vpop.permute.xlu0 %2114
      %2116 = vrot.lane.b32.xlu0 %v2059, 107
      %v2117 = vpop.permute.xlu0 %2116
      %2118 = vrot.lane.b32.xlu0 %v2060, 107
      %v2119 = vpop.permute.xlu0 %2118
      %2120 = vrot.lane.b32.xlu0 %v2061, 107
      %v2121 = vpop.permute.xlu0 %2120
      %v2122 = vsel %vm637, %v2115, %v2117
      %v2123 = vsel %vm637, %v2117, %v2119
      %v2124 = vsel %vm637, %v2119, %v2121
      %2130 = vrot.lane.b32.xlu0 %v2062, 106
      %v2131 = vpop.permute.xlu0 %2130
      %2132 = vrot.lane.b32.xlu0 %v2063, 106
      %v2133 = vpop.permute.xlu0 %2132
      %2134 = vrot.lane.b32.xlu0 %v2064, 106
      %v2135 = vpop.permute.xlu0 %2134
      %2136 = vrot.lane.b32.xlu0 %v2065, 106
      %v2137 = vpop.permute.xlu0 %2136
      %2138 = vrot.lane.b32.xlu0 %v2066, 106
      %v2139 = vpop.permute.xlu0 %2138
      %v2140 = vsel %vm652, %v2131, %v2133
      %v2141 = vsel %vm652, %v2133, %v2135
      %v2142 = vsel %vm652, %v2135, %v2137
      %v2143 = vsel %vm652, %v2137, %v2139
      %2144 = vrot.lane.b32.xlu0 %v2062, 88
      %v2145 = vpop.permute.xlu0 %2144
      %2146 = vrot.lane.b32.xlu0 %v2063, 88
      %v2147 = vpop.permute.xlu0 %2146
      %2148 = vrot.lane.b32.xlu0 %v2064, 88
      %v2149 = vpop.permute.xlu0 %2148
      %2150 = vrot.lane.b32.xlu0 %v2065, 88
      %v2151 = vpop.permute.xlu0 %2150
      %2152 = vrot.lane.b32.xlu0 %v2066, 88
      %v2153 = vpop.permute.xlu0 %2152
      %v2154 = vsel %vm697, %v2145, %v2147
      %v2155 = vsel %vm697, %v2147, %v2149
      %v2156 = vsel %vm697, %v2149, %v2151
      %v2157 = vsel %vm697, %v2151, %v2153
      %2158 = vrot.lane.b32.xlu0 %v2062, 87
      %v2159 = vpop.permute.xlu0 %2158
      %2160 = vrot.lane.b32.xlu0 %v2063, 87
      %v2161 = vpop.permute.xlu0 %2160
      %2162 = vrot.lane.b32.xlu0 %v2064, 87
      %v2163 = vpop.permute.xlu0 %2162
      %2164 = vrot.lane.b32.xlu0 %v2065, 87
      %v2165 = vpop.permute.xlu0 %2164
      %2166 = vrot.lane.b32.xlu0 %v2066, 87
      %v2167 = vpop.permute.xlu0 %2166
      %v2168 = vsel %vm712, %v2159, %v2161
      %v2169 = vsel %vm712, %v2161, %v2163
      %v2170 = vsel %vm712, %v2163, %v2165
      %v2171 = vsel %vm712, %v2165, %v2167
      %2172 = vrot.lane.b32.xlu0 %v2062, 86
      %v2173 = vpop.permute.xlu0 %2172
      %2174 = vrot.lane.b32.xlu0 %v2063, 86
      %v2175 = vpop.permute.xlu0 %2174
      %2176 = vrot.lane.b32.xlu0 %v2064, 86
      %v2177 = vpop.permute.xlu0 %2176
      %2178 = vrot.lane.b32.xlu0 %v2065, 86
      %v2179 = vpop.permute.xlu0 %2178
      %2180 = vrot.lane.b32.xlu0 %v2066, 86
      %v2181 = vpop.permute.xlu0 %2180
      %v2182 = vsel %vm725, %v2173, %v2175
      %v2183 = vsel %vm725, %v2175, %v2177
      %v2184 = vsel %vm725, %v2177, %v2179
      %v2185 = vsel %vm725, %v2179, %v2181
      %v2186 = vld [vmem:[%s6] sm:$0xff]
      %v2187 = vld [vmem:[%s7] sm:$0xff]
      %2189 = vset.pattern.permute.xlu0 0
      %2190 = vperm.xlu0 %2189, %v2187
      %v2191 = vpop.permute.xlu0 %2190
      %2193 = vrot.lane.b32.xlu0 %v2057, 21
      %v2194 = vpop.permute.xlu0 %2193
      %2195 = vrot.lane.b32.xlu0 %v2058, 21
      %v2196 = vpop.permute.xlu0 %2195
      %2197 = vrot.lane.b32.xlu0 %v2059, 21
      %v2198 = vpop.permute.xlu0 %2197
      %2199 = vrot.lane.b32.xlu0 %v2060, 21
      %v2200 = vpop.permute.xlu0 %2199
      %2201 = vrot.lane.b32.xlu0 %v2061, 21
      %v2202 = vpop.permute.xlu0 %2201
      %2203 = vrot.lane.b32.xlu0 %v2082, 21
      %v2204 = vpop.permute.xlu0 %2203
      %2205 = vrot.lane.b32.xlu0 %v2083, 21
      %v2206 = vpop.permute.xlu0 %2205
      %2207 = vrot.lane.b32.xlu0 %v2084, 21
      %v2208 = vpop.permute.xlu0 %2207
      %2209 = vrot.lane.b32.xlu0 %v2085, 21
      %v2210 = vpop.permute.xlu0 %2209
      %2211 = vrot.lane.b32.xlu0 %v2081, 21
      %v2212 = vpop.permute.xlu0 %2211
      %2213 = vrot.lane.b32.xlu0 %v2096, 21
      %v2214 = vpop.permute.xlu0 %2213
      %2215 = vrot.lane.b32.xlu0 %v2097, 21
      %v2216 = vpop.permute.xlu0 %2215
      %2217 = vrot.lane.b32.xlu0 %v2098, 21
      %v2218 = vpop.permute.xlu0 %2217
      %2219 = vrot.lane.b32.xlu0 %v2099, 21
      %v2220 = vpop.permute.xlu0 %2219
      %2221 = vrot.lane.b32.xlu0 %v2095, 21
      %v2222 = vpop.permute.xlu0 %2221
      %2223 = vrot.lane.b32.xlu0 %v2110, 21
      %v2224 = vpop.permute.xlu0 %2223
      %2225 = vrot.lane.b32.xlu0 %v2111, 21
      %v2226 = vpop.permute.xlu0 %2225
      %2227 = vrot.lane.b32.xlu0 %v2112, 21
      %v2228 = vpop.permute.xlu0 %2227
      %2229 = vrot.lane.b32.xlu0 %v2113, 21
      %v2230 = vpop.permute.xlu0 %2229
      %2231 = vrot.lane.b32.xlu0 %v2109, 21
      %v2232 = vpop.permute.xlu0 %2231
      %2233 = vrot.lane.b32.xlu0 %v2115, 21
      %v2234 = vpop.permute.xlu0 %2233
      %2235 = vrot.lane.b32.xlu0 %v2122, 21
      %v2236 = vpop.permute.xlu0 %2235
      %2237 = vrot.lane.b32.xlu0 %v2123, 21
      %v2238 = vpop.permute.xlu0 %2237
      %2239 = vrot.lane.b32.xlu0 %v2124, 21
      %v2240 = vpop.permute.xlu0 %2239
      %2241 = vrot.lane.b32.xlu0 %v2121, 21
      %v2242 = vpop.permute.xlu0 %2241
      %2243 = vrot.lane.b32.xlu0 %v2131, 21
      %v2244 = vpop.permute.xlu0 %2243
      %2245 = vrot.lane.b32.xlu0 %v2140, 21
      %v2246 = vpop.permute.xlu0 %2245
      %2247 = vrot.lane.b32.xlu0 %v2141, 21
      %v2248 = vpop.permute.xlu0 %2247
      %2249 = vrot.lane.b32.xlu0 %v2142, 21
      %v2250 = vpop.permute.xlu0 %2249
      %2251 = vrot.lane.b32.xlu0 %v2143, 21
      %v2252 = vpop.permute.xlu0 %2251
      %2253 = vrot.lane.b32.xlu0 %v2145, 21
      %v2254 = vpop.permute.xlu0 %2253
      %2255 = vrot.lane.b32.xlu0 %v2154, 21
      %v2256 = vpop.permute.xlu0 %2255
      %2257 = vrot.lane.b32.xlu0 %v2155, 21
      %v2258 = vpop.permute.xlu0 %2257
      %2259 = vrot.lane.b32.xlu0 %v2156, 21
      %v2260 = vpop.permute.xlu0 %2259
      %2261 = vrot.lane.b32.xlu0 %v2157, 21
      %v2262 = vpop.permute.xlu0 %2261
      %2263 = vrot.lane.b32.xlu0 %v2159, 21
      %v2264 = vpop.permute.xlu0 %2263
      %2265 = vrot.lane.b32.xlu0 %v2168, 21
      %v2266 = vpop.permute.xlu0 %2265
      %2267 = vrot.lane.b32.xlu0 %v2169, 21
      %v2268 = vpop.permute.xlu0 %2267
      %2269 = vrot.lane.b32.xlu0 %v2170, 21
      %v2270 = vpop.permute.xlu0 %2269
      %2271 = vrot.lane.b32.xlu0 %v2171, 21
      %v2272 = vpop.permute.xlu0 %2271
      %2273 = vrot.lane.b32.xlu0 %v2173, 21
      %v2274 = vpop.permute.xlu0 %2273
      %2275 = vrot.lane.b32.xlu0 %v2182, 21
      %v2276 = vpop.permute.xlu0 %2275
      %2277 = vrot.lane.b32.xlu0 %v2183, 21
      %v2278 = vpop.permute.xlu0 %2277
      %2279 = vrot.lane.b32.xlu0 %v2184, 21
      %v2280 = vpop.permute.xlu0 %2279
      %2281 = vrot.lane.b32.xlu0 %v2185, 21
      %v2282 = vpop.permute.xlu0 %2281
      %v2283 = vsel %vm1889, %v2194, %v2196
      %v2284 = vsel %vm1889, %v2196, %v2198
      %v2285 = vsel %vm1889, %v2198, %v2200
      %v2286 = vsel %vm1889, %v2200, %v2202
      %v2287 = vsel %vm1889, %v2204, %v2206
      %v2288 = vsel %vm1889, %v2206, %v2208
      %v2289 = vsel %vm1889, %v2208, %v2210
      %v2290 = vsel %vm1889, %v2210, %v2212
      %v2291 = vsel %vm1889, %v2214, %v2216
      %v2292 = vsel %vm1889, %v2216, %v2218
      %v2293 = vsel %vm1889, %v2218, %v2220
      %v2294 = vsel %vm1889, %v2220, %v2222
      %v2295 = vsel %vm1889, %v2224, %v2226
      %v2296 = vsel %vm1889, %v2226, %v2228
      %v2297 = vsel %vm1889, %v2228, %v2230
      %v2298 = vsel %vm1889, %v2230, %v2232
      %v2299 = vsel %vm1889, %v2234, %v2236
      %v2300 = vsel %vm1889, %v2236, %v2238
      %v2301 = vsel %vm1889, %v2238, %v2240
      %v2302 = vsel %vm1889, %v2240, %v2242
      %v2303 = vsel %vm1889, %v2244, %v2246
      %v2304 = vsel %vm1889, %v2246, %v2248
      %v2305 = vsel %vm1889, %v2248, %v2250
      %v2306 = vsel %vm1889, %v2250, %v2252
      %v2307 = vsel %vm1889, %v2254, %v2256
      %v2308 = vsel %vm1889, %v2256, %v2258
      %v2309 = vsel %vm1889, %v2258, %v2260
      %v2310 = vsel %vm1889, %v2260, %v2262
      %v2311 = vsel %vm1889, %v2264, %v2266
      %v2312 = vsel %vm1889, %v2266, %v2268
      %v2313 = vsel %vm1889, %v2268, %v2270
      %v2314 = vsel %vm1889, %v2270, %v2272
      %v2315 = vsel %vm1889, %v2274, %v2276
      %v2316 = vsel %vm1889, %v2276, %v2278
      %v2317 = vsel %vm1889, %v2278, %v2280
      %v2318 = vsel %vm1889, %v2280, %v2282
      %v2356 = vsel %vm1478, %v2186, 0
      %2358 = vmatpush.msra.mxu0 0.0
      %2359 = vmatpush.msra.mxu0 0.0
      %2360 = vmatpush.msra.mxu0 0.0
      %2361 = vmatpush.msra.mxu0 0.0
      %2362 = vmatpush.msra.mxu0 0.0
      %2363 = vmatpush.msra.mxu0 0.0
      %2364 = vmatpush.msra.mxu0 0.0
      %2365 = vmatpush.msra.mxu0 %v2315
      %2366 = vmatpush.msra.mxu0 %v2311
      %2367 = vmatpush.msra.mxu0 %v2307
      %2368 = vmatpush.msra.mxu0 %v2303
      %2369 = vmatpush.msra.mxu0 %v2299
      %2370 = vmatpush.msra.mxu0 %v2295
      %2371 = vmatpush.msra.mxu0 %v2291
      %2372 = vmatpush.msra.mxu0 %v2287
      %2373 = vmatpush.msra.mxu0 %v2283
      %2374 = vmatmul.f32.gmra.mxu0 %v2356
      %v2375 = vpop.f32.mrf.mxu0
      %v2376 = vadd.f32 %v2191, %v2375
      %2377 = vdwg.mxu0
      %2378 = vmatpush.msra.mxu0 0.0
      %2379 = vmatpush.msra.mxu0 0.0
      %2380 = vmatpush.msra.mxu0 0.0
      %2381 = vmatpush.msra.mxu0 0.0
      %2382 = vmatpush.msra.mxu0 0.0
      %2383 = vmatpush.msra.mxu0 0.0
      %2384 = vmatpush.msra.mxu0 0.0
      %2385 = vmatpush.msra.mxu0 %v2316
      %2386 = vmatpush.msra.mxu0 %v2312
      %2387 = vmatpush.msra.mxu0 %v2308
      %2388 = vmatpush.msra.mxu0 %v2304
      %2389 = vmatpush.msra.mxu0 %v2300
      %2390 = vmatpush.msra.mxu0 %v2296
      %2391 = vmatpush.msra.mxu0 %v2292
      %2392 = vmatpush.msra.mxu0 %v2288
      %2393 = vmatpush.msra.mxu0 %v2284
      %2394 = vmatmul.f32.gmra.mxu0 %v2356
      %v2395 = vpop.f32.mrf.mxu0
      %v2396 = vadd.f32 %v2191, %v2395
      %2397 = vdwg.mxu0
      %2398 = vmatpush.msra.mxu0 0.0
      %2399 = vmatpush.msra.mxu0 0.0
      %2400 = vmatpush.msra.mxu0 0.0
      %2401 = vmatpush.msra.mxu0 0.0
      %2402 = vmatpush.msra.mxu0 0.0
      %2403 = vmatpush.msra.mxu0 0.0
      %2404 = vmatpush.msra.mxu0 0.0
      %2405 = vmatpush.msra.mxu0 %v2317
      %2406 = vmatpush.msra.mxu0 %v2313
      %2407 = vmatpush.msra.mxu0 %v2309
      %2408 = vmatpush.msra.mxu0 %v2305
      %2409 = vmatpush.msra.mxu0 %v2301
      %2410 = vmatpush.msra.mxu0 %v2297
      %2411 = vmatpush.msra.mxu0 %v2293
      %2412 = vmatpush.msra.mxu0 %v2289
      %2413 = vmatpush.msra.mxu0 %v2285
      %2414 = vmatmul.f32.gmra.mxu0 %v2356
      %v2415 = vpop.f32.mrf.mxu0
      %v2416 = vadd.f32 %v2191, %v2415
      %2417 = vdwg.mxu0
      %2418 = vmatpush.msra.mxu0 0.0
      %2419 = vmatpush.msra.mxu0 0.0
      %2420 = vmatpush.msra.mxu0 0.0
      %2421 = vmatpush.msra.mxu0 0.0
      %2422 = vmatpush.msra.mxu0 0.0
      %2423 = vmatpush.msra.mxu0 0.0
      %2424 = vmatpush.msra.mxu0 0.0
      %2425 = vmatpush.msra.mxu0 %v2318
      %2426 = vmatpush.msra.mxu0 %v2314
      %2427 = vmatpush.msra.mxu0 %v2310
      %2428 = vmatpush.msra.mxu0 %v2306
      %2429 = vmatpush.msra.mxu0 %v2302
      %2430 = vmatpush.msra.mxu0 %v2298
      %2431 = vmatpush.msra.mxu0 %v2294
      %2432 = vmatpush.msra.mxu0 %v2290
      %2433 = vmatpush.msra.mxu0 %v2286
      %2434 = vmatmul.f32.gmra.mxu0 %v2356
      %v2435 = vpop.f32.mrf.mxu0
      %v2436 = vadd.f32 %v2191, %v2435
      %2437 = vdwg.mxu0
      %v2438 = vadd.f32 %v2376, %v1655
      %v2439 = vadd.f32 %v2396, %v1656
      %v2440 = vadd.f32 %v2416, %v1657
      %v2441 = vadd.f32 %v2436, %v1658
      %v2442 = vmul.f32 %v2438, %v1647
      %v2443 = vmul.f32 %v2439, %v1648
      %v2444 = vmul.f32 %v2440, %v1649
      %v2445 = vmul.f32 %v2441, %v1650
      %2446 = vst [vmem:[#allocation2 + $0x8] sm:$0xff] %v2442
      %2447 = vst [vmem:[#allocation2 + $0x10] sm:$0xff] %v2443
      %2448 = vst [vmem:[#allocation2 + $0x18] sm:$0xff] %v2444
      %2449 = vst [vmem:[#allocation2 + $0x20] sm:$0xff] %v2445
      %v2450 = vld [vmem:[#allocation2] sm:$0xff]
      %v2451 = vld [vmem:[#allocation2 + $0x8] sm:$0xff]
      %v2452 = vld [vmem:[#allocation2 + $0x10] sm:$0xff]
      %v2453 = vld [vmem:[#allocation2 + $0x18] sm:$0xff]
      %v2454 = vld [vmem:[#allocation2 + $0x20] sm:$0xff]
      %v2455 = vld [vmem:[#allocation2 + $0x8] sm:$0xff]
      %v2456 = vld [vmem:[#allocation2 + $0x10] sm:$0xff]
      %v2457 = vld [vmem:[#allocation2 + $0x18] sm:$0xff]
      %v2458 = vld [vmem:[#allocation2 + $0x20] sm:$0xff]
      %v2459 = vld [vmem:[#allocation2 + $0x28] sm:$0xff]
      %2465 = vrot.lane.b32.xlu0 %v2450, 127
      %v2466 = vpop.permute.xlu0 %2465
      %2467 = vrot.lane.b32.xlu0 %v2451, 127
      %v2468 = vpop.permute.xlu0 %2467
      %2469 = vrot.lane.b32.xlu0 %v2452, 127
      %v2470 = vpop.permute.xlu0 %2469
      %2471 = vrot.lane.b32.xlu0 %v2453, 127
      %v2472 = vpop.permute.xlu0 %2471
      %2473 = vrot.lane.b32.xlu0 %v2454, 127
      %v2474 = vpop.permute.xlu0 %2473
      %v2475 = vsel %vm562, %v2466, %v2468
      %v2476 = vsel %vm562, %v2468, %v2470
      %v2477 = vsel %vm562, %v2470, %v2472
      %v2478 = vsel %vm562, %v2472, %v2474
      %2479 = vrot.lane.b32.xlu0 %v2450, 126
      %v2480 = vpop.permute.xlu0 %2479
      %2481 = vrot.lane.b32.xlu0 %v2451, 126
      %v2482 = vpop.permute.xlu0 %2481
      %2483 = vrot.lane.b32.xlu0 %v2452, 126
      %v2484 = vpop.permute.xlu0 %2483
      %2485 = vrot.lane.b32.xlu0 %v2453, 126
      %v2486 = vpop.permute.xlu0 %2485
      %2487 = vrot.lane.b32.xlu0 %v2454, 126
      %v2488 = vpop.permute.xlu0 %2487
      %v2489 = vsel %vm577, %v2480, %v2482
      %v2490 = vsel %vm577, %v2482, %v2484
      %v2491 = vsel %vm577, %v2484, %v2486
      %v2492 = vsel %vm577, %v2486, %v2488
      %2493 = vrot.lane.b32.xlu0 %v2450, 108
      %v2494 = vpop.permute.xlu0 %2493
      %2495 = vrot.lane.b32.xlu0 %v2451, 108
      %v2496 = vpop.permute.xlu0 %2495
      %2497 = vrot.lane.b32.xlu0 %v2452, 108
      %v2498 = vpop.permute.xlu0 %2497
      %2499 = vrot.lane.b32.xlu0 %v2453, 108
      %v2500 = vpop.permute.xlu0 %2499
      %2501 = vrot.lane.b32.xlu0 %v2454, 108
      %v2502 = vpop.permute.xlu0 %2501
      %v2503 = vsel %vm622, %v2494, %v2496
      %v2504 = vsel %vm622, %v2496, %v2498
      %v2505 = vsel %vm622, %v2498, %v2500
      %v2506 = vsel %vm622, %v2500, %v2502
      %2507 = vrot.lane.b32.xlu0 %v2451, 107
      %v2508 = vpop.permute.xlu0 %2507
      %2509 = vrot.lane.b32.xlu0 %v2452, 107
      %v2510 = vpop.permute.xlu0 %2509
      %2511 = vrot.lane.b32.xlu0 %v2453, 107
      %v2512 = vpop.permute.xlu0 %2511
      %2513 = vrot.lane.b32.xlu0 %v2454, 107
      %v2514 = vpop.permute.xlu0 %2513
      %v2515 = vsel %vm637, %v2508, %v2510
      %v2516 = vsel %vm637, %v2510, %v2512
      %v2517 = vsel %vm637, %v2512, %v2514
      %2523 = vrot.lane.b32.xlu0 %v2455, 106
      %v2524 = vpop.permute.xlu0 %2523
      %2525 = vrot.lane.b32.xlu0 %v2456, 106
      %v2526 = vpop.permute.xlu0 %2525
      %2527 = vrot.lane.b32.xlu0 %v2457, 106
      %v2528 = vpop.permute.xlu0 %2527
      %2529 = vrot.lane.b32.xlu0 %v2458, 106
      %v2530 = vpop.permute.xlu0 %2529
      %2531 = vrot.lane.b32.xlu0 %v2459, 106
      %v2532 = vpop.permute.xlu0 %2531
      %v2533 = vsel %vm652, %v2524, %v2526
      %v2534 = vsel %vm652, %v2526, %v2528
      %v2535 = vsel %vm652, %v2528, %v2530
      %v2536 = vsel %vm652, %v2530, %v2532
      %2537 = vrot.lane.b32.xlu0 %v2455, 88
      %v2538 = vpop.permute.xlu0 %2537
      %2539 = vrot.lane.b32.xlu0 %v2456, 88
      %v2540 = vpop.permute.xlu0 %2539
      %2541 = vrot.lane.b32.xlu0 %v2457, 88
      %v2542 = vpop.permute.xlu0 %2541
      %2543 = vrot.lane.b32.xlu0 %v2458, 88
      %v2544 = vpop.permute.xlu0 %2543
      %2545 = vrot.lane.b32.xlu0 %v2459, 88
      %v2546 = vpop.permute.xlu0 %2545
      %v2547 = vsel %vm697, %v2538, %v2540
      %v2548 = vsel %vm697, %v2540, %v2542
      %v2549 = vsel %vm697, %v2542, %v2544
      %v2550 = vsel %vm697, %v2544, %v2546
      %2551 = vrot.lane.b32.xlu0 %v2455, 87
      %v2552 = vpop.permute.xlu0 %2551
      %2553 = vrot.lane.b32.xlu0 %v2456, 87
      %v2554 = vpop.permute.xlu0 %2553
      %2555 = vrot.lane.b32.xlu0 %v2457, 87
      %v2556 = vpop.permute.xlu0 %2555
      %2557 = vrot.lane.b32.xlu0 %v2458, 87
      %v2558 = vpop.permute.xlu0 %2557
      %2559 = vrot.lane.b32.xlu0 %v2459, 87
      %v2560 = vpop.permute.xlu0 %2559
      %v2561 = vsel %vm712, %v2552, %v2554
      %v2562 = vsel %vm712, %v2554, %v2556
      %v2563 = vsel %vm712, %v2556, %v2558
      %v2564 = vsel %vm712, %v2558, %v2560
      %2565 = vrot.lane.b32.xlu0 %v2455, 86
      %v2566 = vpop.permute.xlu0 %2565
      %2567 = vrot.lane.b32.xlu0 %v2456, 86
      %v2568 = vpop.permute.xlu0 %2567
      %2569 = vrot.lane.b32.xlu0 %v2457, 86
      %v2570 = vpop.permute.xlu0 %2569
      %2571 = vrot.lane.b32.xlu0 %v2458, 86
      %v2572 = vpop.permute.xlu0 %2571
      %2573 = vrot.lane.b32.xlu0 %v2459, 86
      %v2574 = vpop.permute.xlu0 %2573
      %v2575 = vsel %vm725, %v2566, %v2568
      %v2576 = vsel %vm725, %v2568, %v2570
      %v2577 = vsel %vm725, %v2570, %v2572
      %v2578 = vsel %vm725, %v2572, %v2574
      %v2579 = vld [vmem:[%s8] sm:$0xff]
      %v2580 = vld [vmem:[%s9] sm:$0xff]
      %2582 = vset.pattern.permute.xlu0 0
      %2583 = vperm.xlu0 %2582, %v2580
      %v2584 = vpop.permute.xlu0 %2583
      %2586 = vrot.lane.b32.xlu0 %v2450, 21
      %v2587 = vpop.permute.xlu0 %2586
      %2588 = vrot.lane.b32.xlu0 %v2451, 21
      %v2589 = vpop.permute.xlu0 %2588
      %2590 = vrot.lane.b32.xlu0 %v2452, 21
      %v2591 = vpop.permute.xlu0 %2590
      %2592 = vrot.lane.b32.xlu0 %v2453, 21
      %v2593 = vpop.permute.xlu0 %2592
      %2594 = vrot.lane.b32.xlu0 %v2454, 21
      %v2595 = vpop.permute.xlu0 %2594
      %2596 = vrot.lane.b32.xlu0 %v2475, 21
      %v2597 = vpop.permute.xlu0 %2596
      %2598 = vrot.lane.b32.xlu0 %v2476, 21
      %v2599 = vpop.permute.xlu0 %2598
      %2600 = vrot.lane.b32.xlu0 %v2477, 21
      %v2601 = vpop.permute.xlu0 %2600
      %2602 = vrot.lane.b32.xlu0 %v2478, 21
      %v2603 = vpop.permute.xlu0 %2602
      %2604 = vrot.lane.b32.xlu0 %v2474, 21
      %v2605 = vpop.permute.xlu0 %2604
      %2606 = vrot.lane.b32.xlu0 %v2489, 21
      %v2607 = vpop.permute.xlu0 %2606
      %2608 = vrot.lane.b32.xlu0 %v2490, 21
      %v2609 = vpop.permute.xlu0 %2608
      %2610 = vrot.lane.b32.xlu0 %v2491, 21
      %v2611 = vpop.permute.xlu0 %2610
      %2612 = vrot.lane.b32.xlu0 %v2492, 21
      %v2613 = vpop.permute.xlu0 %2612
      %2614 = vrot.lane.b32.xlu0 %v2488, 21
      %v2615 = vpop.permute.xlu0 %2614
      %2616 = vrot.lane.b32.xlu0 %v2503, 21
      %v2617 = vpop.permute.xlu0 %2616
      %2618 = vrot.lane.b32.xlu0 %v2504, 21
      %v2619 = vpop.permute.xlu0 %2618
      %2620 = vrot.lane.b32.xlu0 %v2505, 21
      %v2621 = vpop.permute.xlu0 %2620
      %2622 = vrot.lane.b32.xlu0 %v2506, 21
      %v2623 = vpop.permute.xlu0 %2622
      %2624 = vrot.lane.b32.xlu0 %v2502, 21
      %v2625 = vpop.permute.xlu0 %2624
      %2626 = vrot.lane.b32.xlu0 %v2508, 21
      %v2627 = vpop.permute.xlu0 %2626
      %2628 = vrot.lane.b32.xlu0 %v2515, 21
      %v2629 = vpop.permute.xlu0 %2628
      %2630 = vrot.lane.b32.xlu0 %v2516, 21
      %v2631 = vpop.permute.xlu0 %2630
      %2632 = vrot.lane.b32.xlu0 %v2517, 21
      %v2633 = vpop.permute.xlu0 %2632
      %2634 = vrot.lane.b32.xlu0 %v2514, 21
      %v2635 = vpop.permute.xlu0 %2634
      %2636 = vrot.lane.b32.xlu0 %v2524, 21
      %v2637 = vpop.permute.xlu0 %2636
      %2638 = vrot.lane.b32.xlu0 %v2533, 21
      %v2639 = vpop.permute.xlu0 %2638
      %2640 = vrot.lane.b32.xlu0 %v2534, 21
      %v2641 = vpop.permute.xlu0 %2640
      %2642 = vrot.lane.b32.xlu0 %v2535, 21
      %v2643 = vpop.permute.xlu0 %2642
      %2644 = vrot.lane.b32.xlu0 %v2536, 21
      %v2645 = vpop.permute.xlu0 %2644
      %2646 = vrot.lane.b32.xlu0 %v2538, 21
      %v2647 = vpop.permute.xlu0 %2646
      %2648 = vrot.lane.b32.xlu0 %v2547, 21
      %v2649 = vpop.permute.xlu0 %2648
      %2650 = vrot.lane.b32.xlu0 %v2548, 21
      %v2651 = vpop.permute.xlu0 %2650
      %2652 = vrot.lane.b32.xlu0 %v2549, 21
      %v2653 = vpop.permute.xlu0 %2652
      %2654 = vrot.lane.b32.xlu0 %v2550, 21
      %v2655 = vpop.permute.xlu0 %2654
      %2656 = vrot.lane.b32.xlu0 %v2552, 21
      %v2657 = vpop.permute.xlu0 %2656
      %2658 = vrot.lane.b32.xlu0 %v2561, 21
      %v2659 = vpop.permute.xlu0 %2658
      %2660 = vrot.lane.b32.xlu0 %v2562, 21
      %v2661 = vpop.permute.xlu0 %2660
      %2662 = vrot.lane.b32.xlu0 %v2563, 21
      %v2663 = vpop.permute.xlu0 %2662
      %2664 = vrot.lane.b32.xlu0 %v2564, 21
      %v2665 = vpop.permute.xlu0 %2664
      %2666 = vrot.lane.b32.xlu0 %v2566, 21
      %v2667 = vpop.permute.xlu0 %2666
      %2668 = vrot.lane.b32.xlu0 %v2575, 21
      %v2669 = vpop.permute.xlu0 %2668
      %2670 = vrot.lane.b32.xlu0 %v2576, 21
      %v2671 = vpop.permute.xlu0 %2670
      %2672 = vrot.lane.b32.xlu0 %v2577, 21
      %v2673 = vpop.permute.xlu0 %2672
      %2674 = vrot.lane.b32.xlu0 %v2578, 21
      %v2675 = vpop.permute.xlu0 %2674
      %v2676 = vsel %vm1889, %v2587, %v2589
      %v2677 = vsel %vm1889, %v2589, %v2591
      %v2678 = vsel %vm1889, %v2591, %v2593
      %v2679 = vsel %vm1889, %v2593, %v2595
      %v2680 = vsel %vm1889, %v2597, %v2599
      %v2681 = vsel %vm1889, %v2599, %v2601
      %v2682 = vsel %vm1889, %v2601, %v2603
      %v2683 = vsel %vm1889, %v2603, %v2605
      %v2684 = vsel %vm1889, %v2607, %v2609
      %v2685 = vsel %vm1889, %v2609, %v2611
      %v2686 = vsel %vm1889, %v2611, %v2613
      %v2687 = vsel %vm1889, %v2613, %v2615
      %v2688 = vsel %vm1889, %v2617, %v2619
      %v2689 = vsel %vm1889, %v2619, %v2621
      %v2690 = vsel %vm1889, %v2621, %v2623
      %v2691 = vsel %vm1889, %v2623, %v2625
      %v2692 = vsel %vm1889, %v2627, %v2629
      %v2693 = vsel %vm1889, %v2629, %v2631
      %v2694 = vsel %vm1889, %v2631, %v2633
      %v2695 = vsel %vm1889, %v2633, %v2635
      %v2696 = vsel %vm1889, %v2637, %v2639
      %v2697 = vsel %vm1889, %v2639, %v2641
      %v2698 = vsel %vm1889, %v2641, %v2643
      %v2699 = vsel %vm1889, %v2643, %v2645
      %v2700 = vsel %vm1889, %v2647, %v2649
      %v2701 = vsel %vm1889, %v2649, %v2651
      %v2702 = vsel %vm1889, %v2651, %v2653
      %v2703 = vsel %vm1889, %v2653, %v2655
      %v2704 = vsel %vm1889, %v2657, %v2659
      %v2705 = vsel %vm1889, %v2659, %v2661
      %v2706 = vsel %vm1889, %v2661, %v2663
      %v2707 = vsel %vm1889, %v2663, %v2665
      %v2708 = vsel %vm1889, %v2667, %v2669
      %v2709 = vsel %vm1889, %v2669, %v2671
      %v2710 = vsel %vm1889, %v2671, %v2673
      %v2711 = vsel %vm1889, %v2673, %v2675
      %v2749 = vsel %vm1478, %v2579, 0
      %2751 = vmatpush.msra.mxu0 0.0
      %2752 = vmatpush.msra.mxu0 0.0
      %2753 = vmatpush.msra.mxu0 0.0
      %2754 = vmatpush.msra.mxu0 0.0
      %2755 = vmatpush.msra.mxu0 0.0
      %2756 = vmatpush.msra.mxu0 0.0
      %2757 = vmatpush.msra.mxu0 0.0
      %2758 = vmatpush.msra.mxu0 %v2708
      %2759 = vmatpush.msra.mxu0 %v2704
      %2760 = vmatpush.msra.mxu0 %v2700
      %2761 = vmatpush.msra.mxu0 %v2696
      %2762 = vmatpush.msra.mxu0 %v2692
      %2763 = vmatpush.msra.mxu0 %v2688
      %2764 = vmatpush.msra.mxu0 %v2684
      %2765 = vmatpush.msra.mxu0 %v2680
      %2766 = vmatpush.msra.mxu0 %v2676
      %2767 = vmatmul.f32.gmra.mxu0 %v2749
      %v2768 = vpop.f32.mrf.mxu0
      %v2769 = vadd.f32 %v2584, %v2768
      %2770 = vdwg.mxu0
      %2771 = vmatpush.msra.mxu0 0.0
      %2772 = vmatpush.msra.mxu0 0.0
      %2773 = vmatpush.msra.mxu0 0.0
      %2774 = vmatpush.msra.mxu0 0.0
      %2775 = vmatpush.msra.mxu0 0.0
      %2776 = vmatpush.msra.mxu0 0.0
      %2777 = vmatpush.msra.mxu0 0.0
      %2778 = vmatpush.msra.mxu0 %v2709
      %2779 = vmatpush.msra.mxu0 %v2705
      %2780 = vmatpush.msra.mxu0 %v2701
      %2781 = vmatpush.msra.mxu0 %v2697
      %2782 = vmatpush.msra.mxu0 %v2693
      %2783 = vmatpush.msra.mxu0 %v2689
      %2784 = vmatpush.msra.mxu0 %v2685
      %2785 = vmatpush.msra.mxu0 %v2681
      %2786 = vmatpush.msra.mxu0 %v2677
      %2787 = vmatmul.f32.gmra.mxu0 %v2749
      %v2788 = vpop.f32.mrf.mxu0
      %v2789 = vadd.f32 %v2584, %v2788
      %2790 = vdwg.mxu0
      %2791 = vmatpush.msra.mxu0 0.0
      %2792 = vmatpush.msra.mxu0 0.0
      %2793 = vmatpush.msra.mxu0 0.0
      %2794 = vmatpush.msra.mxu0 0.0
      %2795 = vmatpush.msra.mxu0 0.0
      %2796 = vmatpush.msra.mxu0 0.0
      %2797 = vmatpush.msra.mxu0 0.0
      %2798 = vmatpush.msra.mxu0 %v2710
      %2799 = vmatpush.msra.mxu0 %v2706
      %2800 = vmatpush.msra.mxu0 %v2702
      %2801 = vmatpush.msra.mxu0 %v2698
      %2802 = vmatpush.msra.mxu0 %v2694
      %2803 = vmatpush.msra.mxu0 %v2690
      %2804 = vmatpush.msra.mxu0 %v2686
      %2805 = vmatpush.msra.mxu0 %v2682
      %2806 = vmatpush.msra.mxu0 %v2678
      %2807 = vmatmul.f32.gmra.mxu0 %v2749
      %v2808 = vpop.f32.mrf.mxu0
      %v2809 = vadd.f32 %v2584, %v2808
      %2810 = vdwg.mxu0
      %2811 = vmatpush.msra.mxu0 0.0
      %2812 = vmatpush.msra.mxu0 0.0
      %2813 = vmatpush.msra.mxu0 0.0
      %2814 = vmatpush.msra.mxu0 0.0
      %2815 = vmatpush.msra.mxu0 0.0
      %2816 = vmatpush.msra.mxu0 0.0
      %2817 = vmatpush.msra.mxu0 0.0
      %2818 = vmatpush.msra.mxu0 %v2711
      %2819 = vmatpush.msra.mxu0 %v2707
      %2820 = vmatpush.msra.mxu0 %v2703
      %2821 = vmatpush.msra.mxu0 %v2699
      %2822 = vmatpush.msra.mxu0 %v2695
      %2823 = vmatpush.msra.mxu0 %v2691
      %2824 = vmatpush.msra.mxu0 %v2687
      %2825 = vmatpush.msra.mxu0 %v2683
      %2826 = vmatpush.msra.mxu0 %v2679
      %2827 = vmatmul.f32.gmra.mxu0 %v2749
      %v2828 = vpop.f32.mrf.mxu0
      %v2829 = vadd.f32 %v2584, %v2828
      %2830 = vdwg.mxu0
      %v2831 = vmax.f32 %v2769, 0.0
      %v2832 = vmax.f32 %v2789, 0.0
      %v2833 = vmax.f32 %v2809, 0.0
      %v2834 = vmax.f32 %v2829, 0.0
      %v2835 = vmul.f32 %v2831, %v1647
      %v2836 = vmul.f32 %v2832, %v1648
      %v2837 = vmul.f32 %v2833, %v1649
      %v2838 = vmul.f32 %v2834, %v1650
      %2839 = vst [vmem:[#allocation2 + $0x8] sm:$0xff] %v2835
      %2840 = vst [vmem:[#allocation2 + $0x10] sm:$0xff] %v2836
      %2841 = vst [vmem:[#allocation2 + $0x18] sm:$0xff] %v2837
      %2842 = vst [vmem:[#allocation2 + $0x20] sm:$0xff] %v2838
      %v2843 = vld [vmem:[#allocation2] sm:$0xff]
      %v2844 = vld [vmem:[#allocation2 + $0x8] sm:$0xff]
      %v2845 = vld [vmem:[#allocation2 + $0x10] sm:$0xff]
      %v2846 = vld [vmem:[#allocation2 + $0x18] sm:$0xff]
      %v2847 = vld [vmem:[#allocation2 + $0x20] sm:$0xff]
      %v2848 = vld [vmem:[#allocation2 + $0x8] sm:$0xff]
      %v2849 = vld [vmem:[#allocation2 + $0x10] sm:$0xff]
      %v2850 = vld [vmem:[#allocation2 + $0x18] sm:$0xff]
      %v2851 = vld [vmem:[#allocation2 + $0x20] sm:$0xff]
      %v2852 = vld [vmem:[#allocation2 + $0x28] sm:$0xff]
      %2858 = vrot.lane.b32.xlu0 %v2843, 127
      %v2859 = vpop.permute.xlu0 %2858
      %2860 = vrot.lane.b32.xlu0 %v2844, 127
      %v2861 = vpop.permute.xlu0 %2860
      %2862 = vrot.lane.b32.xlu0 %v2845, 127
      %v2863 = vpop.permute.xlu0 %2862
      %2864 = vrot.lane.b32.xlu0 %v2846, 127
      %v2865 = vpop.permute.xlu0 %2864
      %2866 = vrot.lane.b32.xlu0 %v2847, 127
      %v2867 = vpop.permute.xlu0 %2866
      %v2868 = vsel %vm562, %v2859, %v2861
      %v2869 = vsel %vm562, %v2861, %v2863
      %v2870 = vsel %vm562, %v2863, %v2865
      %v2871 = vsel %vm562, %v2865, %v2867
      %2872 = vrot.lane.b32.xlu0 %v2843, 126
      %v2873 = vpop.permute.xlu0 %2872
      %2874 = vrot.lane.b32.xlu0 %v2844, 126
      %v2875 = vpop.permute.xlu0 %2874
      %2876 = vrot.lane.b32.xlu0 %v2845, 126
      %v2877 = vpop.permute.xlu0 %2876
      %2878 = vrot.lane.b32.xlu0 %v2846, 126
      %v2879 = vpop.permute.xlu0 %2878
      %2880 = vrot.lane.b32.xlu0 %v2847, 126
      %v2881 = vpop.permute.xlu0 %2880
      %v2882 = vsel %vm577, %v2873, %v2875
      %v2883 = vsel %vm577, %v2875, %v2877
      %v2884 = vsel %vm577, %v2877, %v2879
      %v2885 = vsel %vm577, %v2879, %v2881
      %2886 = vrot.lane.b32.xlu0 %v2843, 108
      %v2887 = vpop.permute.xlu0 %2886
      %2888 = vrot.lane.b32.xlu0 %v2844, 108
      %v2889 = vpop.permute.xlu0 %2888
      %2890 = vrot.lane.b32.xlu0 %v2845, 108
      %v2891 = vpop.permute.xlu0 %2890
      %2892 = vrot.lane.b32.xlu0 %v2846, 108
      %v2893 = vpop.permute.xlu0 %2892
      %2894 = vrot.lane.b32.xlu0 %v2847, 108
      %v2895 = vpop.permute.xlu0 %2894
      %v2896 = vsel %vm622, %v2887, %v2889
      %v2897 = vsel %vm622, %v2889, %v2891
      %v2898 = vsel %vm622, %v2891, %v2893
      %v2899 = vsel %vm622, %v2893, %v2895
      %2900 = vrot.lane.b32.xlu0 %v2844, 107
      %v2901 = vpop.permute.xlu0 %2900
      %2902 = vrot.lane.b32.xlu0 %v2845, 107
      %v2903 = vpop.permute.xlu0 %2902
      %2904 = vrot.lane.b32.xlu0 %v2846, 107
      %v2905 = vpop.permute.xlu0 %2904
      %2906 = vrot.lane.b32.xlu0 %v2847, 107
      %v2907 = vpop.permute.xlu0 %2906
      %v2908 = vsel %vm637, %v2901, %v2903
      %v2909 = vsel %vm637, %v2903, %v2905
      %v2910 = vsel %vm637, %v2905, %v2907
      %2916 = vrot.lane.b32.xlu0 %v2848, 106
      %v2917 = vpop.permute.xlu0 %2916
      %2918 = vrot.lane.b32.xlu0 %v2849, 106
      %v2919 = vpop.permute.xlu0 %2918
      %2920 = vrot.lane.b32.xlu0 %v2850, 106
      %v2921 = vpop.permute.xlu0 %2920
      %2922 = vrot.lane.b32.xlu0 %v2851, 106
      %v2923 = vpop.permute.xlu0 %2922
      %2924 = vrot.lane.b32.xlu0 %v2852, 106
      %v2925 = vpop.permute.xlu0 %2924
      %v2926 = vsel %vm652, %v2917, %v2919
      %v2927 = vsel %vm652, %v2919, %v2921
      %v2928 = vsel %vm652, %v2921, %v2923
      %v2929 = vsel %vm652, %v2923, %v2925
      %2930 = vrot.lane.b32.xlu0 %v2848, 88
      %v2931 = vpop.permute.xlu0 %2930
      %2932 = vrot.lane.b32.xlu0 %v2849, 88
      %v2933 = vpop.permute.xlu0 %2932
      %2934 = vrot.lane.b32.xlu0 %v2850, 88
      %v2935 = vpop.permute.xlu0 %2934
      %2936 = vrot.lane.b32.xlu0 %v2851, 88
      %v2937 = vpop.permute.xlu0 %2936
      %2938 = vrot.lane.b32.xlu0 %v2852, 88
      %v2939 = vpop.permute.xlu0 %2938
      %v2940 = vsel %vm697, %v2931, %v2933
      %v2941 = vsel %vm697, %v2933, %v2935
      %v2942 = vsel %vm697, %v2935, %v2937
      %v2943 = vsel %vm697, %v2937, %v2939
      %2944 = vrot.lane.b32.xlu0 %v2848, 87
      %v2945 = vpop.permute.xlu0 %2944
      %2946 = vrot.lane.b32.xlu0 %v2849, 87
      %v2947 = vpop.permute.xlu0 %2946
      %2948 = vrot.lane.b32.xlu0 %v2850, 87
      %v2949 = vpop.permute.xlu0 %2948
      %2950 = vrot.lane.b32.xlu0 %v2851, 87
      %v2951 = vpop.permute.xlu0 %2950
      %2952 = vrot.lane.b32.xlu0 %v2852, 87
      %v2953 = vpop.permute.xlu0 %2952
      %v2954 = vsel %vm712, %v2945, %v2947
      %v2955 = vsel %vm712, %v2947, %v2949
      %v2956 = vsel %vm712, %v2949, %v2951
      %v2957 = vsel %vm712, %v2951, %v2953
      %2958 = vrot.lane.b32.xlu0 %v2848, 86
      %v2959 = vpop.permute.xlu0 %2958
      %2960 = vrot.lane.b32.xlu0 %v2849, 86
      %v2961 = vpop.permute.xlu0 %2960
      %2962 = vrot.lane.b32.xlu0 %v2850, 86
      %v2963 = vpop.permute.xlu0 %2962
      %2964 = vrot.lane.b32.xlu0 %v2851, 86
      %v2965 = vpop.permute.xlu0 %2964
      %2966 = vrot.lane.b32.xlu0 %v2852, 86
      %v2967 = vpop.permute.xlu0 %2966
      %v2968 = vsel %vm725, %v2959, %v2961
      %v2969 = vsel %vm725, %v2961, %v2963
      %v2970 = vsel %vm725, %v2963, %v2965
      %v2971 = vsel %vm725, %v2965, %v2967
      %v2972 = vld [vmem:[%s10] sm:$0xff]
      %v2973 = vld [vmem:[%s11] sm:$0xff]
      %2975 = vset.pattern.permute.xlu0 0
      %2976 = vperm.xlu0 %2975, %v2973
      %v2977 = vpop.permute.xlu0 %2976
      %2979 = vrot.lane.b32.xlu0 %v2843, 21
      %v2980 = vpop.permute.xlu0 %2979
      %2981 = vrot.lane.b32.xlu0 %v2844, 21
      %v2982 = vpop.permute.xlu0 %2981
      %2983 = vrot.lane.b32.xlu0 %v2845, 21
      %v2984 = vpop.permute.xlu0 %2983
      %2985 = vrot.lane.b32.xlu0 %v2846, 21
      %v2986 = vpop.permute.xlu0 %2985
      %2987 = vrot.lane.b32.xlu0 %v2847, 21
      %v2988 = vpop.permute.xlu0 %2987
      %2989 = vrot.lane.b32.xlu0 %v2868, 21
      %v2990 = vpop.permute.xlu0 %2989
      %2991 = vrot.lane.b32.xlu0 %v2869, 21
      %v2992 = vpop.permute.xlu0 %2991
      %2993 = vrot.lane.b32.xlu0 %v2870, 21
      %v2994 = vpop.permute.xlu0 %2993
      %2995 = vrot.lane.b32.xlu0 %v2871, 21
      %v2996 = vpop.permute.xlu0 %2995
      %2997 = vrot.lane.b32.xlu0 %v2867, 21
      %v2998 = vpop.permute.xlu0 %2997
      %2999 = vrot.lane.b32.xlu0 %v2882, 21
      %v3000 = vpop.permute.xlu0 %2999
      %3001 = vrot.lane.b32.xlu0 %v2883, 21
      %v3002 = vpop.permute.xlu0 %3001
      %3003 = vrot.lane.b32.xlu0 %v2884, 21
      %v3004 = vpop.permute.xlu0 %3003
      %3005 = vrot.lane.b32.xlu0 %v2885, 21
      %v3006 = vpop.permute.xlu0 %3005
      %3007 = vrot.lane.b32.xlu0 %v2881, 21
      %v3008 = vpop.permute.xlu0 %3007
      %3009 = vrot.lane.b32.xlu0 %v2896, 21
      %v3010 = vpop.permute.xlu0 %3009
      %3011 = vrot.lane.b32.xlu0 %v2897, 21
      %v3012 = vpop.permute.xlu0 %3011
      %3013 = vrot.lane.b32.xlu0 %v2898, 21
      %v3014 = vpop.permute.xlu0 %3013
      %3015 = vrot.lane.b32.xlu0 %v2899, 21
      %v3016 = vpop.permute.xlu0 %3015
      %3017 = vrot.lane.b32.xlu0 %v2895, 21
      %v3018 = vpop.permute.xlu0 %3017
      %3019 = vrot.lane.b32.xlu0 %v2901, 21
      %v3020 = vpop.permute.xlu0 %3019
      %3021 = vrot.lane.b32.xlu0 %v2908, 21
      %v3022 = vpop.permute.xlu0 %3021
      %3023 = vrot.lane.b32.xlu0 %v2909, 21
      %v3024 = vpop.permute.xlu0 %3023
      %3025 = vrot.lane.b32.xlu0 %v2910, 21
      %v3026 = vpop.permute.xlu0 %3025
      %3027 = vrot.lane.b32.xlu0 %v2907, 21
      %v3028 = vpop.permute.xlu0 %3027
      %3029 = vrot.lane.b32.xlu0 %v2917, 21
      %v3030 = vpop.permute.xlu0 %3029
      %3031 = vrot.lane.b32.xlu0 %v2926, 21
      %v3032 = vpop.permute.xlu0 %3031
      %3033 = vrot.lane.b32.xlu0 %v2927, 21
      %v3034 = vpop.permute.xlu0 %3033
      %3035 = vrot.lane.b32.xlu0 %v2928, 21
      %v3036 = vpop.permute.xlu0 %3035
      %3037 = vrot.lane.b32.xlu0 %v2929, 21
      %v3038 = vpop.permute.xlu0 %3037
      %3039 = vrot.lane.b32.xlu0 %v2931, 21
      %v3040 = vpop.permute.xlu0 %3039
      %3041 = vrot.lane.b32.xlu0 %v2940, 21
      %v3042 = vpop.permute.xlu0 %3041
      %3043 = vrot.lane.b32.xlu0 %v2941, 21
      %v3044 = vpop.permute.xlu0 %3043
      %3045 = vrot.lane.b32.xlu0 %v2942, 21
      %v3046 = vpop.permute.xlu0 %3045
      %3047 = vrot.lane.b32.xlu0 %v2943, 21
      %v3048 = vpop.permute.xlu0 %3047
      %3049 = vrot.lane.b32.xlu0 %v2945, 21
      %v3050 = vpop.permute.xlu0 %3049
      %3051 = vrot.lane.b32.xlu0 %v2954, 21
      %v3052 = vpop.permute.xlu0 %3051
      %3053 = vrot.lane.b32.xlu0 %v2955, 21
      %v3054 = vpop.permute.xlu0 %3053
      %3055 = vrot.lane.b32.xlu0 %v2956, 21
      %v3056 = vpop.permute.xlu0 %3055
      %3057 = vrot.lane.b32.xlu0 %v2957, 21
      %v3058 = vpop.permute.xlu0 %3057
      %3059 = vrot.lane.b32.xlu0 %v2959, 21
      %v3060 = vpop.permute.xlu0 %3059
      %3061 = vrot.lane.b32.xlu0 %v2968, 21
      %v3062 = vpop.permute.xlu0 %3061
      %3063 = vrot.lane.b32.xlu0 %v2969, 21
      %v3064 = vpop.permute.xlu0 %3063
      %3065 = vrot.lane.b32.xlu0 %v2970, 21
      %v3066 = vpop.permute.xlu0 %3065
      %3067 = vrot.lane.b32.xlu0 %v2971, 21
      %v3068 = vpop.permute.xlu0 %3067
      %v3069 = vsel %vm1889, %v2980, %v2982
      %v3070 = vsel %vm1889, %v2982, %v2984
      %v3071 = vsel %vm1889, %v2984, %v2986
      %v3072 = vsel %vm1889, %v2986, %v2988
      %v3073 = vsel %vm1889, %v2990, %v2992
      %v3074 = vsel %vm1889, %v2992, %v2994
      %v3075 = vsel %vm1889, %v2994, %v2996
      %v3076 = vsel %vm1889, %v2996, %v2998
      %v3077 = vsel %vm1889, %v3000, %v3002
      %v3078 = vsel %vm1889, %v3002, %v3004
      %v3079 = vsel %vm1889, %v3004, %v3006
      %v3080 = vsel %vm1889, %v3006, %v3008
      %v3081 = vsel %vm1889, %v3010, %v3012
      %v3082 = vsel %vm1889, %v3012, %v3014
      %v3083 = vsel %vm1889, %v3014, %v3016
      %v3084 = vsel %vm1889, %v3016, %v3018
      %v3085 = vsel %vm1889, %v3020, %v3022
      %v3086 = vsel %vm1889, %v3022, %v3024
      %v3087 = vsel %vm1889, %v3024, %v3026
      %v3088 = vsel %vm1889, %v3026, %v3028
      %v3089 = vsel %vm1889, %v3030, %v3032
      %v3090 = vsel %vm1889, %v3032, %v3034
      %v3091 = vsel %vm1889, %v3034, %v3036
      %v3092 = vsel %vm1889, %v3036, %v3038
      %v3093 = vsel %vm1889, %v3040, %v3042
      %v3094 = vsel %vm1889, %v3042, %v3044
      %v3095 = vsel %vm1889, %v3044, %v3046
      %v3096 = vsel %vm1889, %v3046, %v3048
      %v3097 = vsel %vm1889, %v3050, %v3052
      %v3098 = vsel %vm1889, %v3052, %v3054
      %v3099 = vsel %vm1889, %v3054, %v3056
      %v3100 = vsel %vm1889, %v3056, %v3058
      %v3101 = vsel %vm1889, %v3060, %v3062
      %v3102 = vsel %vm1889, %v3062, %v3064
      %v3103 = vsel %vm1889, %v3064, %v3066
      %v3104 = vsel %vm1889, %v3066, %v3068
      %v3142 = vsel %vm1478, %v2972, 0
      %3144 = vmatpush.msra.mxu0 0.0
      %3145 = vmatpush.msra.mxu0 0.0
      %3146 = vmatpush.msra.mxu0 0.0
      %3147 = vmatpush.msra.mxu0 0.0
      %3148 = vmatpush.msra.mxu0 0.0
      %3149 = vmatpush.msra.mxu0 0.0
      %3150 = vmatpush.msra.mxu0 0.0
      %3151 = vmatpush.msra.mxu0 %v3101
      %3152 = vmatpush.msra.mxu0 %v3097
      %3153 = vmatpush.msra.mxu0 %v3093
      %3154 = vmatpush.msra.mxu0 %v3089
      %3155 = vmatpush.msra.mxu0 %v3085
      %3156 = vmatpush.msra.mxu0 %v3081
      %3157 = vmatpush.msra.mxu0 %v3077
      %3158 = vmatpush.msra.mxu0 %v3073
      %3159 = vmatpush.msra.mxu0 %v3069
      %3160 = vmatmul.f32.gmra.mxu0 %v3142
      %v3161 = vpop.f32.mrf.mxu0
      %v3162 = vadd.f32 %v2977, %v3161
      %3163 = vdwg.mxu0
      %3164 = vmatpush.msra.mxu0 0.0
      %3165 = vmatpush.msra.mxu0 0.0
      %3166 = vmatpush.msra.mxu0 0.0
      %3167 = vmatpush.msra.mxu0 0.0
      %3168 = vmatpush.msra.mxu0 0.0
      %3169 = vmatpush.msra.mxu0 0.0
      %3170 = vmatpush.msra.mxu0 0.0
      %3171 = vmatpush.msra.mxu0 %v3102
      %3172 = vmatpush.msra.mxu0 %v3098
      %3173 = vmatpush.msra.mxu0 %v3094
      %3174 = vmatpush.msra.mxu0 %v3090
      %3175 = vmatpush.msra.mxu0 %v3086
      %3176 = vmatpush.msra.mxu0 %v3082
      %3177 = vmatpush.msra.mxu0 %v3078
      %3178 = vmatpush.msra.mxu0 %v3074
      %3179 = vmatpush.msra.mxu0 %v3070
      %3180 = vmatmul.f32.gmra.mxu0 %v3142
      %v3181 = vpop.f32.mrf.mxu0
      %v3182 = vadd.f32 %v2977, %v3181
      %3183 = vdwg.mxu0
      %3184 = vmatpush.msra.mxu0 0.0
      %3185 = vmatpush.msra.mxu0 0.0
      %3186 = vmatpush.msra.mxu0 0.0
      %3187 = vmatpush.msra.mxu0 0.0
      %3188 = vmatpush.msra.mxu0 0.0
      %3189 = vmatpush.msra.mxu0 0.0
      %3190 = vmatpush.msra.mxu0 0.0
      %3191 = vmatpush.msra.mxu0 %v3103
      %3192 = vmatpush.msra.mxu0 %v3099
      %3193 = vmatpush.msra.mxu0 %v3095
      %3194 = vmatpush.msra.mxu0 %v3091
      %3195 = vmatpush.msra.mxu0 %v3087
      %3196 = vmatpush.msra.mxu0 %v3083
      %3197 = vmatpush.msra.mxu0 %v3079
      %3198 = vmatpush.msra.mxu0 %v3075
      %3199 = vmatpush.msra.mxu0 %v3071
      %3200 = vmatmul.f32.gmra.mxu0 %v3142
      %v3201 = vpop.f32.mrf.mxu0
      %v3202 = vadd.f32 %v2977, %v3201
      %3203 = vdwg.mxu0
      %3204 = vmatpush.msra.mxu0 0.0
      %3205 = vmatpush.msra.mxu0 0.0
      %3206 = vmatpush.msra.mxu0 0.0
      %3207 = vmatpush.msra.mxu0 0.0
      %3208 = vmatpush.msra.mxu0 0.0
      %3209 = vmatpush.msra.mxu0 0.0
      %3210 = vmatpush.msra.mxu0 0.0
      %3211 = vmatpush.msra.mxu0 %v3104
      %3212 = vmatpush.msra.mxu0 %v3100
      %3213 = vmatpush.msra.mxu0 %v3096
      %3214 = vmatpush.msra.mxu0 %v3092
      %3215 = vmatpush.msra.mxu0 %v3088
      %3216 = vmatpush.msra.mxu0 %v3084
      %3217 = vmatpush.msra.mxu0 %v3080
      %3218 = vmatpush.msra.mxu0 %v3076
      %3219 = vmatpush.msra.mxu0 %v3072
      %3220 = vmatmul.f32.gmra.mxu0 %v3142
      %v3221 = vpop.f32.mrf.mxu0
      %v3222 = vadd.f32 %v2977, %v3221
      %3223 = vdwg.mxu0
      %v3224 = vadd.f32 %v3162, %v2442
      %v3225 = vadd.f32 %v3182, %v2443
      %v3226 = vadd.f32 %v3202, %v2444
      %v3227 = vadd.f32 %v3222, %v2445
      %v3228 = vmul.f32 %v3224, %v1647
      %v3229 = vmul.f32 %v3225, %v1648
      %v3230 = vmul.f32 %v3226, %v1649
      %v3231 = vmul.f32 %v3227, %v1650
      %3232 = vst [vmem:[#allocation2 + $0x8] sm:$0xff] %v3228
      %3233 = vst [vmem:[#allocation2 + $0x10] sm:$0xff] %v3229
      %3234 = vst [vmem:[#allocation2 + $0x18] sm:$0xff] %v3230
      %3235 = vst [vmem:[#allocation2 + $0x20] sm:$0xff] %v3231
      %v3236 = vld [vmem:[#allocation2] sm:$0xff]
      %v3237 = vld [vmem:[#allocation2 + $0x8] sm:$0xff]
      %v3238 = vld [vmem:[#allocation2 + $0x10] sm:$0xff]
      %v3239 = vld [vmem:[#allocation2 + $0x18] sm:$0xff]
      %v3240 = vld [vmem:[#allocation2 + $0x20] sm:$0xff]
      %v3241 = vld [vmem:[#allocation2 + $0x8] sm:$0xff]
      %v3242 = vld [vmem:[#allocation2 + $0x10] sm:$0xff]
      %v3243 = vld [vmem:[#allocation2 + $0x18] sm:$0xff]
      %v3244 = vld [vmem:[#allocation2 + $0x20] sm:$0xff]
      %v3245 = vld [vmem:[#allocation2 + $0x28] sm:$0xff]
      %3251 = vrot.lane.b32.xlu0 %v3236, 127
      %v3252 = vpop.permute.xlu0 %3251
      %3253 = vrot.lane.b32.xlu0 %v3237, 127
      %v3254 = vpop.permute.xlu0 %3253
      %3255 = vrot.lane.b32.xlu0 %v3238, 127
      %v3256 = vpop.permute.xlu0 %3255
      %3257 = vrot.lane.b32.xlu0 %v3239, 127
      %v3258 = vpop.permute.xlu0 %3257
      %3259 = vrot.lane.b32.xlu0 %v3240, 127
      %v3260 = vpop.permute.xlu0 %3259
      %v3261 = vsel %vm562, %v3252, %v3254
      %v3262 = vsel %vm562, %v3254, %v3256
      %v3263 = vsel %vm562, %v3256, %v3258
      %v3264 = vsel %vm562, %v3258, %v3260
      %3265 = vrot.lane.b32.xlu0 %v3236, 126
      %v3266 = vpop.permute.xlu0 %3265
      %3267 = vrot.lane.b32.xlu0 %v3237, 126
      %v3268 = vpop.permute.xlu0 %3267
      %3269 = vrot.lane.b32.xlu0 %v3238, 126
      %v3270 = vpop.permute.xlu0 %3269
      %3271 = vrot.lane.b32.xlu0 %v3239, 126
      %v3272 = vpop.permute.xlu0 %3271
      %3273 = vrot.lane.b32.xlu0 %v3240, 126
      %v3274 = vpop.permute.xlu0 %3273
      %v3275 = vsel %vm577, %v3266, %v3268
      %v3276 = vsel %vm577, %v3268, %v3270
      %v3277 = vsel %vm577, %v3270, %v3272
      %v3278 = vsel %vm577, %v3272, %v3274
      %3279 = vrot.lane.b32.xlu0 %v3236, 108
      %v3280 = vpop.permute.xlu0 %3279
      %3281 = vrot.lane.b32.xlu0 %v3237, 108
      %v3282 = vpop.permute.xlu0 %3281
      %3283 = vrot.lane.b32.xlu0 %v3238, 108
      %v3284 = vpop.permute.xlu0 %3283
      %3285 = vrot.lane.b32.xlu0 %v3239, 108
      %v3286 = vpop.permute.xlu0 %3285
      %3287 = vrot.lane.b32.xlu0 %v3240, 108
      %v3288 = vpop.permute.xlu0 %3287
      %v3289 = vsel %vm622, %v3280, %v3282
      %v3290 = vsel %vm622, %v3282, %v3284
      %v3291 = vsel %vm622, %v3284, %v3286
      %v3292 = vsel %vm622, %v3286, %v3288
      %3293 = vrot.lane.b32.xlu0 %v3237, 107
      %v3294 = vpop.permute.xlu0 %3293
      %3295 = vrot.lane.b32.xlu0 %v3238, 107
      %v3296 = vpop.permute.xlu0 %3295
      %3297 = vrot.lane.b32.xlu0 %v3239, 107
      %v3298 = vpop.permute.xlu0 %3297
      %3299 = vrot.lane.b32.xlu0 %v3240, 107
      %v3300 = vpop.permute.xlu0 %3299
      %v3301 = vsel %vm637, %v3294, %v3296
      %v3302 = vsel %vm637, %v3296, %v3298
      %v3303 = vsel %vm637, %v3298, %v3300
      %3309 = vrot.lane.b32.xlu0 %v3241, 106
      %v3310 = vpop.permute.xlu0 %3309
      %3311 = vrot.lane.b32.xlu0 %v3242, 106
      %v3312 = vpop.permute.xlu0 %3311
      %3313 = vrot.lane.b32.xlu0 %v3243, 106
      %v3314 = vpop.permute.xlu0 %3313
      %3315 = vrot.lane.b32.xlu0 %v3244, 106
      %v3316 = vpop.permute.xlu0 %3315
      %3317 = vrot.lane.b32.xlu0 %v3245, 106
      %v3318 = vpop.permute.xlu0 %3317
      %v3319 = vsel %vm652, %v3310, %v3312
      %v3320 = vsel %vm652, %v3312, %v3314
      %v3321 = vsel %vm652, %v3314, %v3316
      %v3322 = vsel %vm652, %v3316, %v3318
      %3323 = vrot.lane.b32.xlu0 %v3241, 88
      %v3324 = vpop.permute.xlu0 %3323
      %3325 = vrot.lane.b32.xlu0 %v3242, 88
      %v3326 = vpop.permute.xlu0 %3325
      %3327 = vrot.lane.b32.xlu0 %v3243, 88
      %v3328 = vpop.permute.xlu0 %3327
      %3329 = vrot.lane.b32.xlu0 %v3244, 88
      %v3330 = vpop.permute.xlu0 %3329
      %3331 = vrot.lane.b32.xlu0 %v3245, 88
      %v3332 = vpop.permute.xlu0 %3331
      %v3333 = vsel %vm697, %v3324, %v3326
      %v3334 = vsel %vm697, %v3326, %v3328
      %v3335 = vsel %vm697, %v3328, %v3330
      %v3336 = vsel %vm697, %v3330, %v3332
      %3337 = vrot.lane.b32.xlu0 %v3241, 87
      %v3338 = vpop.permute.xlu0 %3337
      %3339 = vrot.lane.b32.xlu0 %v3242, 87
      %v3340 = vpop.permute.xlu0 %3339
      %3341 = vrot.lane.b32.xlu0 %v3243, 87
      %v3342 = vpop.permute.xlu0 %3341
      %3343 = vrot.lane.b32.xlu0 %v3244, 87
      %v3344 = vpop.permute.xlu0 %3343
      %3345 = vrot.lane.b32.xlu0 %v3245, 87
      %v3346 = vpop.permute.xlu0 %3345
      %v3347 = vsel %vm712, %v3338, %v3340
      %v3348 = vsel %vm712, %v3340, %v3342
      %v3349 = vsel %vm712, %v3342, %v3344
      %v3350 = vsel %vm712, %v3344, %v3346
      %3351 = vrot.lane.b32.xlu0 %v3241, 86
      %v3352 = vpop.permute.xlu0 %3351
      %3353 = vrot.lane.b32.xlu0 %v3242, 86
      %v3354 = vpop.permute.xlu0 %3353
      %3355 = vrot.lane.b32.xlu0 %v3243, 86
      %v3356 = vpop.permute.xlu0 %3355
      %3357 = vrot.lane.b32.xlu0 %v3244, 86
      %v3358 = vpop.permute.xlu0 %3357
      %3359 = vrot.lane.b32.xlu0 %v3245, 86
      %v3360 = vpop.permute.xlu0 %3359
      %v3361 = vsel %vm725, %v3352, %v3354
      %v3362 = vsel %vm725, %v3354, %v3356
      %v3363 = vsel %vm725, %v3356, %v3358
      %v3364 = vsel %vm725, %v3358, %v3360
      %v3365 = vld [vmem:[%s12] sm:$0xff]
      %v3366 = vld [vmem:[%s13] sm:$0xff]
      %3368 = vset.pattern.permute.xlu0 0
      %3369 = vperm.xlu0 %3368, %v3366
      %v3370 = vpop.permute.xlu0 %3369
      %3372 = vrot.lane.b32.xlu0 %v3236, 21
      %v3373 = vpop.permute.xlu0 %3372
      %3374 = vrot.lane.b32.xlu0 %v3237, 21
      %v3375 = vpop.permute.xlu0 %3374
      %3376 = vrot.lane.b32.xlu0 %v3238, 21
      %v3377 = vpop.permute.xlu0 %3376
      %3378 = vrot.lane.b32.xlu0 %v3239, 21
      %v3379 = vpop.permute.xlu0 %3378
      %3380 = vrot.lane.b32.xlu0 %v3240, 21
      %v3381 = vpop.permute.xlu0 %3380
      %3382 = vrot.lane.b32.xlu0 %v3261, 21
      %v3383 = vpop.permute.xlu0 %3382
      %3384 = vrot.lane.b32.xlu0 %v3262, 21
      %v3385 = vpop.permute.xlu0 %3384
      %3386 = vrot.lane.b32.xlu0 %v3263, 21
      %v3387 = vpop.permute.xlu0 %3386
      %3388 = vrot.lane.b32.xlu0 %v3264, 21
      %v3389 = vpop.permute.xlu0 %3388
      %3390 = vrot.lane.b32.xlu0 %v3260, 21
      %v3391 = vpop.permute.xlu0 %3390
      %3392 = vrot.lane.b32.xlu0 %v3275, 21
      %v3393 = vpop.permute.xlu0 %3392
      %3394 = vrot.lane.b32.xlu0 %v3276, 21
      %v3395 = vpop.permute.xlu0 %3394
      %3396 = vrot.lane.b32.xlu0 %v3277, 21
      %v3397 = vpop.permute.xlu0 %3396
      %3398 = vrot.lane.b32.xlu0 %v3278, 21
      %v3399 = vpop.permute.xlu0 %3398
      %3400 = vrot.lane.b32.xlu0 %v3274, 21
      %v3401 = vpop.permute.xlu0 %3400
      %3402 = vrot.lane.b32.xlu0 %v3289, 21
      %v3403 = vpop.permute.xlu0 %3402
      %3404 = vrot.lane.b32.xlu0 %v3290, 21
      %v3405 = vpop.permute.xlu0 %3404
      %3406 = vrot.lane.b32.xlu0 %v3291, 21
      %v3407 = vpop.permute.xlu0 %3406
      %3408 = vrot.lane.b32.xlu0 %v3292, 21
      %v3409 = vpop.permute.xlu0 %3408
      %3410 = vrot.lane.b32.xlu0 %v3288, 21
      %v3411 = vpop.permute.xlu0 %3410
      %3412 = vrot.lane.b32.xlu0 %v3294, 21
      %v3413 = vpop.permute.xlu0 %3412
      %3414 = vrot.lane.b32.xlu0 %v3301, 21
      %v3415 = vpop.permute.xlu0 %3414
      %3416 = vrot.lane.b32.xlu0 %v3302, 21
      %v3417 = vpop.permute.xlu0 %3416
      %3418 = vrot.lane.b32.xlu0 %v3303, 21
      %v3419 = vpop.permute.xlu0 %3418
      %3420 = vrot.lane.b32.xlu0 %v3300, 21
      %v3421 = vpop.permute.xlu0 %3420
      %3422 = vrot.lane.b32.xlu0 %v3310, 21
      %v3423 = vpop.permute.xlu0 %3422
      %3424 = vrot.lane.b32.xlu0 %v3319, 21
      %v3425 = vpop.permute.xlu0 %3424
      %3426 = vrot.lane.b32.xlu0 %v3320, 21
      %v3427 = vpop.permute.xlu0 %3426
      %3428 = vrot.lane.b32.xlu0 %v3321, 21
      %v3429 = vpop.permute.xlu0 %3428
      %3430 = vrot.lane.b32.xlu0 %v3322, 21
      %v3431 = vpop.permute.xlu0 %3430
      %3432 = vrot.lane.b32.xlu0 %v3324, 21
      %v3433 = vpop.permute.xlu0 %3432
      %3434 = vrot.lane.b32.xlu0 %v3333, 21
      %v3435 = vpop.permute.xlu0 %3434
      %3436 = vrot.lane.b32.xlu0 %v3334, 21
      %v3437 = vpop.permute.xlu0 %3436
      %3438 = vrot.lane.b32.xlu0 %v3335, 21
      %v3439 = vpop.permute.xlu0 %3438
      %3440 = vrot.lane.b32.xlu0 %v3336, 21
      %v3441 = vpop.permute.xlu0 %3440
      %3442 = vrot.lane.b32.xlu0 %v3338, 21
      %v3443 = vpop.permute.xlu0 %3442
      %3444 = vrot.lane.b32.xlu0 %v3347, 21
      %v3445 = vpop.permute.xlu0 %3444
      %3446 = vrot.lane.b32.xlu0 %v3348, 21
      %v3447 = vpop.permute.xlu0 %3446
      %3448 = vrot.lane.b32.xlu0 %v3349, 21
      %v3449 = vpop.permute.xlu0 %3448
      %3450 = vrot.lane.b32.xlu0 %v3350, 21
      %v3451 = vpop.permute.xlu0 %3450
      %3452 = vrot.lane.b32.xlu0 %v3352, 21
      %v3453 = vpop.permute.xlu0 %3452
      %3454 = vrot.lane.b32.xlu0 %v3361, 21
      %v3455 = vpop.permute.xlu0 %3454
      %3456 = vrot.lane.b32.xlu0 %v3362, 21
      %v3457 = vpop.permute.xlu0 %3456
      %3458 = vrot.lane.b32.xlu0 %v3363, 21
      %v3459 = vpop.permute.xlu0 %3458
      %3460 = vrot.lane.b32.xlu0 %v3364, 21
      %v3461 = vpop.permute.xlu0 %3460
      %v3462 = vsel %vm1889, %v3373, %v3375
      %v3463 = vsel %vm1889, %v3375, %v3377
      %v3464 = vsel %vm1889, %v3377, %v3379
      %v3465 = vsel %vm1889, %v3379, %v3381
      %v3466 = vsel %vm1889, %v3383, %v3385
      %v3467 = vsel %vm1889, %v3385, %v3387
      %v3468 = vsel %vm1889, %v3387, %v3389
      %v3469 = vsel %vm1889, %v3389, %v3391
      %v3470 = vsel %vm1889, %v3393, %v3395
      %v3471 = vsel %vm1889, %v3395, %v3397
      %v3472 = vsel %vm1889, %v3397, %v3399
      %v3473 = vsel %vm1889, %v3399, %v3401
      %v3474 = vsel %vm1889, %v3403, %v3405
      %v3475 = vsel %vm1889, %v3405, %v3407
      %v3476 = vsel %vm1889, %v3407, %v3409
      %v3477 = vsel %vm1889, %v3409, %v3411
      %v3478 = vsel %vm1889, %v3413, %v3415
      %v3479 = vsel %vm1889, %v3415, %v3417
      %v3480 = vsel %vm1889, %v3417, %v3419
      %v3481 = vsel %vm1889, %v3419, %v3421
      %v3482 = vsel %vm1889, %v3423, %v3425
      %v3483 = vsel %vm1889, %v3425, %v3427
      %v3484 = vsel %vm1889, %v3427, %v3429
      %v3485 = vsel %vm1889, %v3429, %v3431
      %v3486 = vsel %vm1889, %v3433, %v3435
      %v3487 = vsel %vm1889, %v3435, %v3437
      %v3488 = vsel %vm1889, %v3437, %v3439
      %v3489 = vsel %vm1889, %v3439, %v3441
      %v3490 = vsel %vm1889, %v3443, %v3445
      %v3491 = vsel %vm1889, %v3445, %v3447
      %v3492 = vsel %vm1889, %v3447, %v3449
      %v3493 = vsel %vm1889, %v3449, %v3451
      %v3494 = vsel %vm1889, %v3453, %v3455
      %v3495 = vsel %vm1889, %v3455, %v3457
      %v3496 = vsel %vm1889, %v3457, %v3459
      %v3497 = vsel %vm1889, %v3459, %v3461
      %v3535 = vsel %vm1478, %v3365, 0
      %3537 = vmatpush.msra.mxu0 0.0
      %3538 = vmatpush.msra.mxu0 0.0
      %3539 = vmatpush.msra.mxu0 0.0
      %3540 = vmatpush.msra.mxu0 0.0
      %3541 = vmatpush.msra.mxu0 0.0
      %3542 = vmatpush.msra.mxu0 0.0
      %3543 = vmatpush.msra.mxu0 0.0
      %3544 = vmatpush.msra.mxu0 %v3494
      %3545 = vmatpush.msra.mxu0 %v3490
      %3546 = vmatpush.msra.mxu0 %v3486
      %3547 = vmatpush.msra.mxu0 %v3482
      %3548 = vmatpush.msra.mxu0 %v3478
      %3549 = vmatpush.msra.mxu0 %v3474
      %3550 = vmatpush.msra.mxu0 %v3470
      %3551 = vmatpush.msra.mxu0 %v3466
      %3552 = vmatpush.msra.mxu0 %v3462
      %3553 = vmatmul.f32.gmra.mxu0 %v3535
      %v3554 = vpop.f32.mrf.mxu0
      %v3555 = vadd.f32 %v3370, %v3554
      %3556 = vdwg.mxu0
      %3557 = vmatpush.msra.mxu0 0.0
      %3558 = vmatpush.msra.mxu0 0.0
      %3559 = vmatpush.msra.mxu0 0.0
      %3560 = vmatpush.msra.mxu0 0.0
      %3561 = vmatpush.msra.mxu0 0.0
      %3562 = vmatpush.msra.mxu0 0.0
      %3563 = vmatpush.msra.mxu0 0.0
      %3564 = vmatpush.msra.mxu0 %v3495
      %3565 = vmatpush.msra.mxu0 %v3491
      %3566 = vmatpush.msra.mxu0 %v3487
      %3567 = vmatpush.msra.mxu0 %v3483
      %3568 = vmatpush.msra.mxu0 %v3479
      %3569 = vmatpush.msra.mxu0 %v3475
      %3570 = vmatpush.msra.mxu0 %v3471
      %3571 = vmatpush.msra.mxu0 %v3467
      %3572 = vmatpush.msra.mxu0 %v3463
      %3573 = vmatmul.f32.gmra.mxu0 %v3535
      %v3574 = vpop.f32.mrf.mxu0
      %v3575 = vadd.f32 %v3370, %v3574
      %3576 = vdwg.mxu0
      %3577 = vmatpush.msra.mxu0 0.0
      %3578 = vmatpush.msra.mxu0 0.0
      %3579 = vmatpush.msra.mxu0 0.0
      %3580 = vmatpush.msra.mxu0 0.0
      %3581 = vmatpush.msra.mxu0 0.0
      %3582 = vmatpush.msra.mxu0 0.0
      %3583 = vmatpush.msra.mxu0 0.0
      %3584 = vmatpush.msra.mxu0 %v3496
      %3585 = vmatpush.msra.mxu0 %v3492
      %3586 = vmatpush.msra.mxu0 %v3488
      %3587 = vmatpush.msra.mxu0 %v3484
      %3588 = vmatpush.msra.mxu0 %v3480
      %3589 = vmatpush.msra.mxu0 %v3476
      %3590 = vmatpush.msra.mxu0 %v3472
      %3591 = vmatpush.msra.mxu0 %v3468
      %3592 = vmatpush.msra.mxu0 %v3464
      %3593 = vmatmul.f32.gmra.mxu0 %v3535
      %v3594 = vpop.f32.mrf.mxu0
      %v3595 = vadd.f32 %v3370, %v3594
      %3596 = vdwg.mxu0
      %3597 = vmatpush.msra.mxu0 0.0
      %3598 = vmatpush.msra.mxu0 0.0
      %3599 = vmatpush.msra.mxu0 0.0
      %3600 = vmatpush.msra.mxu0 0.0
      %3601 = vmatpush.msra.mxu0 0.0
      %3602 = vmatpush.msra.mxu0 0.0
      %3603 = vmatpush.msra.mxu0 0.0
      %3604 = vmatpush.msra.mxu0 %v3497
      %3605 = vmatpush.msra.mxu0 %v3493
      %3606 = vmatpush.msra.mxu0 %v3489
      %3607 = vmatpush.msra.mxu0 %v3485
      %3608 = vmatpush.msra.mxu0 %v3481
      %3609 = vmatpush.msra.mxu0 %v3477
      %3610 = vmatpush.msra.mxu0 %v3473
      %3611 = vmatpush.msra.mxu0 %v3469
      %3612 = vmatpush.msra.mxu0 %v3465
      %3613 = vmatmul.f32.gmra.mxu0 %v3535
      %v3614 = vpop.f32.mrf.mxu0
      %v3615 = vadd.f32 %v3370, %v3614
      %3616 = vdwg.mxu0
      %v3617 = vadd.f32 %v3555, %v1655
      %v3618 = vadd.f32 %v3575, %v1656
      %v3619 = vadd.f32 %v3595, %v1657
      %v3620 = vadd.f32 %v3615, %v1658
      %v3621 = vmul.f32 %v3617, %v1647
      %v3622 = vmul.f32 %v3618, %v1648
      %v3623 = vmul.f32 %v3619, %v1649
      %v3624 = vmul.f32 %v3620, %v1650
      %3625 = vst [vmem:[#allocation2 + $0x8] sm:$0xff] %v3621
      %3626 = vst [vmem:[#allocation2 + $0x10] sm:$0xff] %v3622
      %3627 = vst [vmem:[#allocation2 + $0x18] sm:$0xff] %v3623
      %3628 = vst [vmem:[#allocation2 + $0x20] sm:$0xff] %v3624
      %v3629 = vld [vmem:[#allocation2] sm:$0xff]
      %v3630 = vld [vmem:[#allocation2 + $0x8] sm:$0xff]
      %v3631 = vld [vmem:[#allocation2 + $0x10] sm:$0xff]
      %v3632 = vld [vmem:[#allocation2 + $0x18] sm:$0xff]
      %v3633 = vld [vmem:[#allocation2 + $0x20] sm:$0xff]
      %v3634 = vld [vmem:[#allocation2 + $0x8] sm:$0xff]
      %v3635 = vld [vmem:[#allocation2 + $0x10] sm:$0xff]
      %v3636 = vld [vmem:[#allocation2 + $0x18] sm:$0xff]
      %v3637 = vld [vmem:[#allocation2 + $0x20] sm:$0xff]
      %v3638 = vld [vmem:[#allocation2 + $0x28] sm:$0xff]
      %3644 = vrot.lane.b32.xlu0 %v3629, 127
      %v3645 = vpop.permute.xlu0 %3644
      %3646 = vrot.lane.b32.xlu0 %v3630, 127
      %v3647 = vpop.permute.xlu0 %3646
      %3648 = vrot.lane.b32.xlu0 %v3631, 127
      %v3649 = vpop.permute.xlu0 %3648
      %3650 = vrot.lane.b32.xlu0 %v3632, 127
      %v3651 = vpop.permute.xlu0 %3650
      %3652 = vrot.lane.b32.xlu0 %v3633, 127
      %v3653 = vpop.permute.xlu0 %3652
      %v3654 = vsel %vm562, %v3645, %v3647
      %v3655 = vsel %vm562, %v3647, %v3649
      %v3656 = vsel %vm562, %v3649, %v3651
      %v3657 = vsel %vm562, %v3651, %v3653
      %3658 = vrot.lane.b32.xlu0 %v3629, 126
      %v3659 = vpop.permute.xlu0 %3658
      %3660 = vrot.lane.b32.xlu0 %v3630, 126
      %v3661 = vpop.permute.xlu0 %3660
      %3662 = vrot.lane.b32.xlu0 %v3631, 126
      %v3663 = vpop.permute.xlu0 %3662
      %3664 = vrot.lane.b32.xlu0 %v3632, 126
      %v3665 = vpop.permute.xlu0 %3664
      %3666 = vrot.lane.b32.xlu0 %v3633, 126
      %v3667 = vpop.permute.xlu0 %3666
      %v3668 = vsel %vm577, %v3659, %v3661
      %v3669 = vsel %vm577, %v3661, %v3663
      %v3670 = vsel %vm577, %v3663, %v3665
      %v3671 = vsel %vm577, %v3665, %v3667
      %3672 = vrot.lane.b32.xlu0 %v3629, 108
      %v3673 = vpop.permute.xlu0 %3672
      %3674 = vrot.lane.b32.xlu0 %v3630, 108
      %v3675 = vpop.permute.xlu0 %3674
      %3676 = vrot.lane.b32.xlu0 %v3631, 108
      %v3677 = vpop.permute.xlu0 %3676
      %3678 = vrot.lane.b32.xlu0 %v3632, 108
      %v3679 = vpop.permute.xlu0 %3678
      %3680 = vrot.lane.b32.xlu0 %v3633, 108
      %v3681 = vpop.permute.xlu0 %3680
      %v3682 = vsel %vm622, %v3673, %v3675
      %v3683 = vsel %vm622, %v3675, %v3677
      %v3684 = vsel %vm622, %v3677, %v3679
      %v3685 = vsel %vm622, %v3679, %v3681
      %3686 = vrot.lane.b32.xlu0 %v3630, 107
      %v3687 = vpop.permute.xlu0 %3686
      %3688 = vrot.lane.b32.xlu0 %v3631, 107
      %v3689 = vpop.permute.xlu0 %3688
      %3690 = vrot.lane.b32.xlu0 %v3632, 107
      %v3691 = vpop.permute.xlu0 %3690
      %3692 = vrot.lane.b32.xlu0 %v3633, 107
      %v3693 = vpop.permute.xlu0 %3692
      %v3694 = vsel %vm637, %v3687, %v3689
      %v3695 = vsel %vm637, %v3689, %v3691
      %v3696 = vsel %vm637, %v3691, %v3693
      %3702 = vrot.lane.b32.xlu0 %v3634, 106
      %v3703 = vpop.permute.xlu0 %3702
      %3704 = vrot.lane.b32.xlu0 %v3635, 106
      %v3705 = vpop.permute.xlu0 %3704
      %3706 = vrot.lane.b32.xlu0 %v3636, 106
      %v3707 = vpop.permute.xlu0 %3706
      %3708 = vrot.lane.b32.xlu0 %v3637, 106
      %v3709 = vpop.permute.xlu0 %3708
      %3710 = vrot.lane.b32.xlu0 %v3638, 106
      %v3711 = vpop.permute.xlu0 %3710
      %v3712 = vsel %vm652, %v3703, %v3705
      %v3713 = vsel %vm652, %v3705, %v3707
      %v3714 = vsel %vm652, %v3707, %v3709
      %v3715 = vsel %vm652, %v3709, %v3711
      %3716 = vrot.lane.b32.xlu0 %v3634, 88
      %v3717 = vpop.permute.xlu0 %3716
      %3718 = vrot.lane.b32.xlu0 %v3635, 88
      %v3719 = vpop.permute.xlu0 %3718
      %3720 = vrot.lane.b32.xlu0 %v3636, 88
      %v3721 = vpop.permute.xlu0 %3720
      %3722 = vrot.lane.b32.xlu0 %v3637, 88
      %v3723 = vpop.permute.xlu0 %3722
      %3724 = vrot.lane.b32.xlu0 %v3638, 88
      %v3725 = vpop.permute.xlu0 %3724
      %v3726 = vsel %vm697, %v3717, %v3719
      %v3727 = vsel %vm697, %v3719, %v3721
      %v3728 = vsel %vm697, %v3721, %v3723
      %v3729 = vsel %vm697, %v3723, %v3725
      %3730 = vrot.lane.b32.xlu0 %v3634, 87
      %v3731 = vpop.permute.xlu0 %3730
      %3732 = vrot.lane.b32.xlu0 %v3635, 87
      %v3733 = vpop.permute.xlu0 %3732
      %3734 = vrot.lane.b32.xlu0 %v3636, 87
      %v3735 = vpop.permute.xlu0 %3734
      %3736 = vrot.lane.b32.xlu0 %v3637, 87
      %v3737 = vpop.permute.xlu0 %3736
      %3738 = vrot.lane.b32.xlu0 %v3638, 87
      %v3739 = vpop.permute.xlu0 %3738
      %v3740 = vsel %vm712, %v3731, %v3733
      %v3741 = vsel %vm712, %v3733, %v3735
      %v3742 = vsel %vm712, %v3735, %v3737
      %v3743 = vsel %vm712, %v3737, %v3739
      %3744 = vrot.lane.b32.xlu0 %v3634, 86
      %v3745 = vpop.permute.xlu0 %3744
      %3746 = vrot.lane.b32.xlu0 %v3635, 86
      %v3747 = vpop.permute.xlu0 %3746
      %3748 = vrot.lane.b32.xlu0 %v3636, 86
      %v3749 = vpop.permute.xlu0 %3748
      %3750 = vrot.lane.b32.xlu0 %v3637, 86
      %v3751 = vpop.permute.xlu0 %3750
      %3752 = vrot.lane.b32.xlu0 %v3638, 86
      %v3753 = vpop.permute.xlu0 %3752
      %v3754 = vsel %vm725, %v3745, %v3747
      %v3755 = vsel %vm725, %v3747, %v3749
      %v3756 = vsel %vm725, %v3749, %v3751
      %v3757 = vsel %vm725, %v3751, %v3753
      %v3758 = vld [vmem:[%s14] sm:$0x7]
      %v3759 = vld [vmem:[%s15] sm:$0x7]
      %3761 = vset.pattern.permute.xlu0 0
      %3762 = vperm.xlu0 %3761, %v3759
      %v3763 = vpop.permute.xlu0 %3762
      %3765 = vrot.lane.b32.xlu0 %v3629, 21
      %v3766 = vpop.permute.xlu0 %3765
      %3767 = vrot.lane.b32.xlu0 %v3630, 21
      %v3768 = vpop.permute.xlu0 %3767
      %3769 = vrot.lane.b32.xlu0 %v3631, 21
      %v3770 = vpop.permute.xlu0 %3769
      %3771 = vrot.lane.b32.xlu0 %v3632, 21
      %v3772 = vpop.permute.xlu0 %3771
      %3773 = vrot.lane.b32.xlu0 %v3633, 21
      %v3774 = vpop.permute.xlu0 %3773
      %3775 = vrot.lane.b32.xlu0 %v3654, 21
      %v3776 = vpop.permute.xlu0 %3775
      %3777 = vrot.lane.b32.xlu0 %v3655, 21
      %v3778 = vpop.permute.xlu0 %3777
      %3779 = vrot.lane.b32.xlu0 %v3656, 21
      %v3780 = vpop.permute.xlu0 %3779
      %3781 = vrot.lane.b32.xlu0 %v3657, 21
      %v3782 = vpop.permute.xlu0 %3781
      %3783 = vrot.lane.b32.xlu0 %v3653, 21
      %v3784 = vpop.permute.xlu0 %3783
      %3785 = vrot.lane.b32.xlu0 %v3668, 21
      %v3786 = vpop.permute.xlu0 %3785
      %3787 = vrot.lane.b32.xlu0 %v3669, 21
      %v3788 = vpop.permute.xlu0 %3787
      %3789 = vrot.lane.b32.xlu0 %v3670, 21
      %v3790 = vpop.permute.xlu0 %3789
      %3791 = vrot.lane.b32.xlu0 %v3671, 21
      %v3792 = vpop.permute.xlu0 %3791
      %3793 = vrot.lane.b32.xlu0 %v3667, 21
      %v3794 = vpop.permute.xlu0 %3793
      %3795 = vrot.lane.b32.xlu0 %v3682, 21
      %v3796 = vpop.permute.xlu0 %3795
      %3797 = vrot.lane.b32.xlu0 %v3683, 21
      %v3798 = vpop.permute.xlu0 %3797
      %3799 = vrot.lane.b32.xlu0 %v3684, 21
      %v3800 = vpop.permute.xlu0 %3799
      %3801 = vrot.lane.b32.xlu0 %v3685, 21
      %v3802 = vpop.permute.xlu0 %3801
      %3803 = vrot.lane.b32.xlu0 %v3681, 21
      %v3804 = vpop.permute.xlu0 %3803
      %3805 = vrot.lane.b32.xlu0 %v3687, 21
      %v3806 = vpop.permute.xlu0 %3805
      %3807 = vrot.lane.b32.xlu0 %v3694, 21
      %v3808 = vpop.permute.xlu0 %3807
      %3809 = vrot.lane.b32.xlu0 %v3695, 21
      %v3810 = vpop.permute.xlu0 %3809
      %3811 = vrot.lane.b32.xlu0 %v3696, 21
      %v3812 = vpop.permute.xlu0 %3811
      %3813 = vrot.lane.b32.xlu0 %v3693, 21
      %v3814 = vpop.permute.xlu0 %3813
      %3815 = vrot.lane.b32.xlu0 %v3703, 21
      %v3816 = vpop.permute.xlu0 %3815
      %3817 = vrot.lane.b32.xlu0 %v3712, 21
      %v3818 = vpop.permute.xlu0 %3817
      %3819 = vrot.lane.b32.xlu0 %v3713, 21
      %v3820 = vpop.permute.xlu0 %3819
      %3821 = vrot.lane.b32.xlu0 %v3714, 21
      %v3822 = vpop.permute.xlu0 %3821
      %3823 = vrot.lane.b32.xlu0 %v3715, 21
      %v3824 = vpop.permute.xlu0 %3823
      %3825 = vrot.lane.b32.xlu0 %v3717, 21
      %v3826 = vpop.permute.xlu0 %3825
      %3827 = vrot.lane.b32.xlu0 %v3726, 21
      %v3828 = vpop.permute.xlu0 %3827
      %3829 = vrot.lane.b32.xlu0 %v3727, 21
      %v3830 = vpop.permute.xlu0 %3829
      %3831 = vrot.lane.b32.xlu0 %v3728, 21
      %v3832 = vpop.permute.xlu0 %3831
      %3833 = vrot.lane.b32.xlu0 %v3729, 21
      %v3834 = vpop.permute.xlu0 %3833
      %3835 = vrot.lane.b32.xlu0 %v3731, 21
      %v3836 = vpop.permute.xlu0 %3835
      %3837 = vrot.lane.b32.xlu0 %v3740, 21
      %v3838 = vpop.permute.xlu0 %3837
      %3839 = vrot.lane.b32.xlu0 %v3741, 21
      %v3840 = vpop.permute.xlu0 %3839
      %3841 = vrot.lane.b32.xlu0 %v3742, 21
      %v3842 = vpop.permute.xlu0 %3841
      %3843 = vrot.lane.b32.xlu0 %v3743, 21
      %v3844 = vpop.permute.xlu0 %3843
      %3845 = vrot.lane.b32.xlu0 %v3745, 21
      %v3846 = vpop.permute.xlu0 %3845
      %3847 = vrot.lane.b32.xlu0 %v3754, 21
      %v3848 = vpop.permute.xlu0 %3847
      %3849 = vrot.lane.b32.xlu0 %v3755, 21
      %v3850 = vpop.permute.xlu0 %3849
      %3851 = vrot.lane.b32.xlu0 %v3756, 21
      %v3852 = vpop.permute.xlu0 %3851
      %3853 = vrot.lane.b32.xlu0 %v3757, 21
      %v3854 = vpop.permute.xlu0 %3853
      %v3855 = vsel %vm1889, %v3766, %v3768
      %v3856 = vsel %vm1889, %v3768, %v3770
      %v3857 = vsel %vm1889, %v3770, %v3772
      %v3858 = vsel %vm1889, %v3772, %v3774
      %v3859 = vsel %vm1889, %v3776, %v3778
      %v3860 = vsel %vm1889, %v3778, %v3780
      %v3861 = vsel %vm1889, %v3780, %v3782
      %v3862 = vsel %vm1889, %v3782, %v3784
      %v3863 = vsel %vm1889, %v3786, %v3788
      %v3864 = vsel %vm1889, %v3788, %v3790
      %v3865 = vsel %vm1889, %v3790, %v3792
      %v3866 = vsel %vm1889, %v3792, %v3794
      %v3867 = vsel %vm1889, %v3796, %v3798
      %v3868 = vsel %vm1889, %v3798, %v3800
      %v3869 = vsel %vm1889, %v3800, %v3802
      %v3870 = vsel %vm1889, %v3802, %v3804
      %v3871 = vsel %vm1889, %v3806, %v3808
      %v3872 = vsel %vm1889, %v3808, %v3810
      %v3873 = vsel %vm1889, %v3810, %v3812
      %v3874 = vsel %vm1889, %v3812, %v3814
      %v3875 = vsel %vm1889, %v3816, %v3818
      %v3876 = vsel %vm1889, %v3818, %v3820
      %v3877 = vsel %vm1889, %v3820, %v3822
      %v3878 = vsel %vm1889, %v3822, %v3824
      %v3879 = vsel %vm1889, %v3826, %v3828
      %v3880 = vsel %vm1889, %v3828, %v3830
      %v3881 = vsel %vm1889, %v3830, %v3832
      %v3882 = vsel %vm1889, %v3832, %v3834
      %v3883 = vsel %vm1889, %v3836, %v3838
      %v3884 = vsel %vm1889, %v3838, %v3840
      %v3885 = vsel %vm1889, %v3840, %v3842
      %v3886 = vsel %vm1889, %v3842, %v3844
      %v3887 = vsel %vm1889, %v3846, %v3848
      %v3888 = vsel %vm1889, %v3848, %v3850
      %v3889 = vsel %vm1889, %v3850, %v3852
      %v3890 = vsel %vm1889, %v3852, %v3854
      %v3928 = vsel %vm1478, %v3758, 0
      %3930 = vmatpush.msra.mxu0 0.0
      %3931 = vmatpush.msra.mxu0 0.0
      %3932 = vmatpush.msra.mxu0 0.0
      %3933 = vmatpush.msra.mxu0 0.0
      %3934 = vmatpush.msra.mxu0 0.0
      %3935 = vmatpush.msra.mxu0 0.0
      %3936 = vmatpush.msra.mxu0 0.0
      %3937 = vmatpush.msra.mxu0 %v3887
      %3938 = vmatpush.msra.mxu0 %v3883
      %3939 = vmatpush.msra.mxu0 %v3879
      %3940 = vmatpush.msra.mxu0 %v3875
      %3941 = vmatpush.msra.mxu0 %v3871
      %3942 = vmatpush.msra.mxu0 %v3867
      %3943 = vmatpush.msra.mxu0 %v3863
      %3944 = vmatpush.msra.mxu0 %v3859
      %3945 = vmatpush.msra.mxu0 %v3855
      %3946 = vmatmul.f32.gmra.mxu0 %v3928
      %v3947 = vpop.f32.mrf.mxu0
      %v3948 = vadd.f32 %v3763, %v3947
      %3949 = vdwg.mxu0
      %3950 = vmatpush.msra.mxu0 0.0
      %3951 = vmatpush.msra.mxu0 0.0
      %3952 = vmatpush.msra.mxu0 0.0
      %3953 = vmatpush.msra.mxu0 0.0
      %3954 = vmatpush.msra.mxu0 0.0
      %3955 = vmatpush.msra.mxu0 0.0
      %3956 = vmatpush.msra.mxu0 0.0
      %3957 = vmatpush.msra.mxu0 %v3888
      %3958 = vmatpush.msra.mxu0 %v3884
      %3959 = vmatpush.msra.mxu0 %v3880
      %3960 = vmatpush.msra.mxu0 %v3876
      %3961 = vmatpush.msra.mxu0 %v3872
      %3962 = vmatpush.msra.mxu0 %v3868
      %3963 = vmatpush.msra.mxu0 %v3864
      %3964 = vmatpush.msra.mxu0 %v3860
      %3965 = vmatpush.msra.mxu0 %v3856
      %3966 = vmatmul.f32.gmra.mxu0 %v3928
      %v3967 = vpop.f32.mrf.mxu0
      %v3968 = vadd.f32 %v3763, %v3967
      %3969 = vdwg.mxu0
      %3970 = vmatpush.msra.mxu0 0.0
      %3971 = vmatpush.msra.mxu0 0.0
      %3972 = vmatpush.msra.mxu0 0.0
      %3973 = vmatpush.msra.mxu0 0.0
      %3974 = vmatpush.msra.mxu0 0.0
      %3975 = vmatpush.msra.mxu0 0.0
      %3976 = vmatpush.msra.mxu0 0.0
      %3977 = vmatpush.msra.mxu0 %v3889
      %3978 = vmatpush.msra.mxu0 %v3885
      %3979 = vmatpush.msra.mxu0 %v3881
      %3980 = vmatpush.msra.mxu0 %v3877
      %3981 = vmatpush.msra.mxu0 %v3873
      %3982 = vmatpush.msra.mxu0 %v3869
      %3983 = vmatpush.msra.mxu0 %v3865
      %3984 = vmatpush.msra.mxu0 %v3861
      %3985 = vmatpush.msra.mxu0 %v3857
      %3986 = vmatmul.f32.gmra.mxu0 %v3928
      %v3987 = vpop.f32.mrf.mxu0
      %v3988 = vadd.f32 %v3763, %v3987
      %3989 = vdwg.mxu0
      %3990 = vmatpush.msra.mxu0 0.0
      %3991 = vmatpush.msra.mxu0 0.0
      %3992 = vmatpush.msra.mxu0 0.0
      %3993 = vmatpush.msra.mxu0 0.0
      %3994 = vmatpush.msra.mxu0 0.0
      %3995 = vmatpush.msra.mxu0 0.0
      %3996 = vmatpush.msra.mxu0 0.0
      %3997 = vmatpush.msra.mxu0 %v3890
      %3998 = vmatpush.msra.mxu0 %v3886
      %3999 = vmatpush.msra.mxu0 %v3882
      %4000 = vmatpush.msra.mxu0 %v3878
      %4001 = vmatpush.msra.mxu0 %v3874
      %4002 = vmatpush.msra.mxu0 %v3870
      %4003 = vmatpush.msra.mxu0 %v3866
      %4004 = vmatpush.msra.mxu0 %v3862
      %4005 = vmatpush.msra.mxu0 %v3858
      %4006 = vmatmul.f32.gmra.mxu0 %v3928
      %v4007 = vpop.f32.mrf.mxu0
      %v4008 = vadd.f32 %v3763, %v4007
      %4009 = vdwg.mxu0
      %v4010 = vmul.f32 %v3948, %v1647
      %v4011 = vmul.f32 %v3968, %v1648
      %v4012 = vmul.f32 %v3988, %v1649
      %v4013 = vmul.f32 %v4008, %v1650
      %v4018 = vrot.slane %v4011, 4
      %v4019 = vrot.slane %v4013, 4
      %vm4020 = vcmask 1043456
      %v4021 = vsel %vm4020, %v4010, %v4018
      %v4022 = vsel %vm4020, %v4012, %v4019
      %4025 = vst [vmem:[%s521] sm:$0x77] %v4021
      %4026 = vst [vmem:[%s521 + $0x8] sm:$0x77] %v4022
      %p4027 = scmp.lt.s32.totalorder %s27, 1
      %s4028 = scalar_select %p4027, %s27, 1
      %s4029 = smul.addr %s4028, 4
      %s4030 = smul.addr %s4029, 4
      %s4031 = scalar_lea.vmem %s16, %s4030
      // Predicated region
      $region85: #{net_forward.1} parent=83 // pred_check
        %p4032 = pneg %p386
      $region86: #{net_forward.1} parent=83 // pred_check_branch
        %4034 = sbr.rel (%p4032) target = $region88
      $region87: #{net_forward.1} parent=83 // pred_region
        _
      $region88: #{net_forward.1} parent=83 // pred_fallthru
        _
    $region84: #{net_forward.1} parent=5 // pred_fallthru
      _
    %p4035 = scmp.le.s32.totalorder 2, %s22
    // Predicated region
    $region89: #{net_forward.1} parent=5 // pred_check
      %p4036 = pneg %p4035
    $region90: #{net_forward.1} parent=5 // pred_check_branch
      %4038 = sbr.rel (%p4036) target = $region92
    $region91: #{net_forward.1} parent=5 // pred_region
      %s4039 = ssub.s32 %s22, 2
      // Predicated region
      $region93: #{net_forward.1} parent=91 // pred_check
        %p4040 = pneg %p392
      $region94: #{net_forward.1} parent=91 // pred_check_branch
        %4042 = sbr.rel (%p4040) target = $region96
      $region95: #{net_forward.1} parent=91 // pred_region
        %p4043 = scmp.lt.s32.totalorder %s28, 1
        %s4044 = scalar_select %p4043, %s28, 1
        %s4045 = smul.addr %s4044, 4
        %s4046 = smul.addr %s4045, 4
        %s4047 = scalar_lea.vmem %s16, %s4046
      $region96: #{net_forward.1} parent=91 // pred_fallthru
        _
    $region92: #{net_forward.1} parent=5 // pred_fallthru
      _
  $region6: #{net_forward.1} parent=0 // loop_footer
    %s26 = sadd.s32 1, %s22
  $region7: #{net_forward.1} parent=0 // loop_footer_branch
    %21 = sbr.rel target = $region3
  $region8: #{net_forward.1} parent=0 // loop_exit
    _

</llo_original>
